<compile_context>
chip_gen: v5e
topology: v5e:2x2
jax: 0.10.0
libtpu: 0.0.40
codegen_flags: <defaults>
</compile_context>

<pallas_src>
import jax
import jax.numpy as jnp
from jax.experimental import pallas as pl
from jax.experimental.pallas import tpu as pltpu

EPS = 1e-5

# ---------------- scaled-down SimSiam dimensions ----------------
N = 8                 # batch (BatchNorm needs batch > 1)
CIN = 3               # RGB
H = W = 16            # spatial
FEAT = 32             # backbone.fc.in_features stand-in (2048 for ResNet50)
PROJ_HID = 64         # projection_layer hidden_d   (2048 in reference)
PROJ_OUT = 64         # projection_layer output_d   (2048 in reference)
PRED_HID = 32         # prediction_layer hidden_d   (512 in reference)
PRED_OUT = PROJ_OUT   # prediction_layer output_d   (2048 in reference)

NHW = N * H * W       # rows of the im2col slab
KCOL = 9 * CIN        # 3x3 patch * channels


# ---------------- in-kernel helpers ----------------
def _bn_rows(y, gamma=None, beta=None):
    """Train-mode BatchNorm over rows (biased var, eps=1e-5). Single walk of y:
    the centered tensor is reused for the variance and the normalization."""
    mean = jnp.mean(y, axis=0, keepdims=True)
    c = y - mean
    var = jnp.mean(c * c, axis=0, keepdims=True)
    yhat = c * jax.lax.rsqrt(var + EPS)
    if gamma is not None:
        yhat = yhat * gamma + beta
    return yhat


# ---------------- fused per-view kernel ----------------
def _simsiam_view_kernel(col_ref, conv_w_ref, bn_g_ref, bn_b_ref,
                         pw1_ref, pg1_ref, pbe1_ref, pw3_ref,
                         qw1_ref, qg1_ref, qbe1_ref, qw2_ref, qb2_ref,
                         z_ref, p_ref):
    # ----- backbone: conv1 (im2col matmul, bf16 MXU) -> BN2d -> ReLU -> GAP -----
    y = jnp.dot(col_ref[...], conv_w_ref[...],
                preferred_element_type=jnp.float32)           # (NHW, FEAT) f32
    y = jnp.maximum(_bn_rows(y, bn_g_ref[...], bn_b_ref[...]), 0.0)
    # global average pool: per-sample mean over H*W (reshape + XLU reduce, no pool matmul)
    feat = jnp.mean(y.reshape(N, H * W, FEAT), axis=1)        # (N, FEAT) f32

    # ----- projector: Linear -> BN1d -> ReLU -> Identity -> Linear -> BN1d(affine=False) -----
    h = jnp.dot(feat.astype(jnp.bfloat16), pw1_ref[...],
                preferred_element_type=jnp.float32)
    h = jnp.maximum(_bn_rows(h, pg1_ref[...], pbe1_ref[...]), 0.0)
    z = _bn_rows(jnp.dot(h.astype(jnp.bfloat16), pw3_ref[...],
                         preferred_element_type=jnp.float32))
    z_ref[...] = z                                            # (N, PROJ_OUT)

    # ----- predictor: Linear -> BN1d -> ReLU -> Linear (+bias, no BN after) -----
    g = jnp.dot(z.astype(jnp.bfloat16), qw1_ref[...],
                preferred_element_type=jnp.float32)
    g = jnp.maximum(_bn_rows(g, qg1_ref[...], qbe1_ref[...]), 0.0)
    p_ref[...] = (jnp.dot(g.astype(jnp.bfloat16), qw2_ref[...],
                          preferred_element_type=jnp.float32)
                  + qb2_ref[...])                             # (N, PRED_OUT)


# ---------------- pallas_call plumbing ----------------
def _view_block(shape):
    """Blocked over the leading view axis (squeezed in-kernel), full otherwise."""
    inner = tuple(int(d) for d in shape[1:])
    nrest = len(inner)
    return pl.BlockSpec((None,) + inner, lambda v, _n=nrest: (v,) + (0,) * _n)


def _full_block(shape):
    """Whole array, replicated across the view grid."""
    nd = len(shape)
    return pl.BlockSpec(tuple(int(d) for d in shape), lambda v, _n=nd: (0,) * _n)


def simsiam_fused(p, col):
    """col: (2, NHW, KCOL) bf16 im2col slabs, one per view. Returns (z, pred)."""
    bf = lambda a: a.astype(jnp.bfloat16)
    args = (
        col,
        bf(p["conv_w"]), p["bn_g"], p["bn_b"],
        bf(p["proj_w1"]), p["proj_g1"], p["proj_be1"], bf(p["proj_w3"]),
        bf(p["pred_w1"]), p["pred_g1"], p["pred_be1"], bf(p["pred_w2"]), p["pred_b2"],
    )
    in_specs = [_view_block(col.shape)] + [_full_block(a.shape) for a in args[1:]]
    out_shape = (jax.ShapeDtypeStruct((2, N, PROJ_OUT), jnp.float32),
                 jax.ShapeDtypeStruct((2, N, PRED_OUT), jnp.float32))
    out_specs = (_view_block((2, N, PROJ_OUT)), _view_block((2, N, PRED_OUT)))

    flops_per_view = 2 * (NHW * KCOL * FEAT
                          + N * FEAT * PROJ_HID
                          + N * PROJ_HID * PROJ_OUT
                          + N * PROJ_OUT * PRED_HID
                          + N * PRED_HID * PRED_OUT)
    bytes_in = sum(int(a.size) * a.dtype.itemsize for a in args)
    bytes_out = 4 * (2 * N * PROJ_OUT + 2 * N * PRED_OUT)
    cost = pl.CostEstimate(
        flops=2 * flops_per_view,
        transcendentals=2 * (FEAT + PROJ_HID + PROJ_OUT + PRED_HID),  # rsqrt per BN lane
        bytes_accessed=int(bytes_in + bytes_out),
    )

    return pl.pallas_call(
        _simsiam_view_kernel,
        grid=(2,),                                   # one grid step per view
        in_specs=in_specs,
        out_specs=list(out_specs),
        out_shape=out_shape,
        compiler_params=pltpu.CompilerParams(
            dimension_semantics=("parallel",)),      # v7x: 2 views -> 2 TensorCores
        cost_estimate=cost,
    )(*args)


# ---------------- glue: im2col + parameter init ----------------
def _im2col_3x3(x_nchw):
    # NCHW -> NHWC, pad by 1, gather 3x3 patches (pure data movement / glue, runs as XLA ops)
    x = jnp.transpose(x_nchw, (0, 2, 3, 1)).astype(jnp.float32)   # (N,H,W,C)
    xp = jnp.pad(x, ((0, 0), (1, 1), (1, 1), (0, 0)))
    cols = [xp[:, ky:ky + H, kx:kx + W, :] for ky in range(3) for kx in range(3)]
    col = jnp.concatenate(cols, axis=-1)            # (N,H,W,9*CIN), tap-major, cin-minor
    return col.reshape(NHW, KCOL)


def init_params(key):
    ks = jax.random.split(key, 6)
    s = 0.05

    def w(k, din, dout):
        # stored as (din, dout): torch Linear weight (dout, din) transposed
        return jax.random.normal(k, (din, dout), jnp.float32) * s

    # conv1 weight: torch shape (FEAT, CIN, 3, 3) laid out here as (3,3,CIN,FEAT),
    # flattened to the im2col matmul matrix (9*CIN, FEAT).
    conv_w = (jax.random.normal(ks[0], (3, 3, CIN, FEAT), jnp.float32) * s
              ).reshape(KCOL, FEAT)

    # NOTE: Linear biases that feed directly into a train-mode BatchNorm are exactly
    # cancelled by the mean subtraction -> omitted (dead work, identical outputs).
    return {
        "conv_w": conv_w,
        "bn_g": jnp.ones((1, FEAT), jnp.float32),
        "bn_b": jnp.zeros((1, FEAT), jnp.float32),
        # projector
        "proj_w1": w(ks[1], FEAT, PROJ_HID),
        "proj_g1": jnp.ones((1, PROJ_HID), jnp.float32),
        "proj_be1": jnp.zeros((1, PROJ_HID), jnp.float32),
        "proj_w3": w(ks[2], PROJ_HID, PROJ_OUT),
        # predictor
        "pred_w1": w(ks[3], PROJ_OUT, PRED_HID),
        "pred_g1": jnp.ones((1, PRED_HID), jnp.float32),
        "pred_be1": jnp.zeros((1, PRED_HID), jnp.float32),
        "pred_w2": w(ks[4], PRED_HID, PRED_OUT),
        "pred_b2": jax.random.normal(ks[5], (1, PRED_OUT), jnp.float32) * s,
    }


# ---------------- model forward ----------------
@jax.jit
def simsiam_forward(p, x1, x2):
    # stack both views' im2col slabs; bf16 halves the only non-trivial input DMA
    col = jnp.stack([_im2col_3x3(x1), _im2col_3x3(x2)], axis=0).astype(jnp.bfloat16)
    z, pr = simsiam_fused(p, col)
    return {"z1": z[0], "z2": z[1], "p1": pr[0], "p2": pr[1]}


if __name__ == "__main__":
    key = jax.random.PRNGKey(0)
    k1, k2, kp = jax.random.split(key, 3)
    x1 = jax.random.normal(k1, (N, CIN, H, W), jnp.float32)  # NCHW, like PyTorch
    x2 = jax.random.normal(k2, (N, CIN, H, W), jnp.float32)
    params = init_params(kp)

    out = simsiam_forward(params, x1, x2)
    out = jax.block_until_ready(out)

    assert out["z1"].shape == (N, PROJ_OUT)
    assert out["z2"].shape == (N, PROJ_OUT)
    assert out["p1"].shape == (N, PRED_OUT)
    assert out["p2"].shape == (N, PRED_OUT)
    assert all(bool(jnp.all(jnp.isfinite(v))) for v in out.values())
    print("KERNEL_OK")
</pallas_src>

<mosaic_0001>
module attributes {stable_mosaic.version = 11 : i64} {
  func.func @_simsiam_view_kernel(%arg0: i32, %arg1: memref<1x2048x27xbf16, #tpu.memory_space<vmem>>, %arg2: memref<27x32xbf16, #tpu.memory_space<vmem>>, %arg3: memref<1x32xf32, #tpu.memory_space<vmem>>, %arg4: memref<1x32xf32, #tpu.memory_space<vmem>>, %arg5: memref<32x64xbf16, #tpu.memory_space<vmem>>, %arg6: memref<1x64xf32, #tpu.memory_space<vmem>>, %arg7: memref<1x64xf32, #tpu.memory_space<vmem>>, %arg8: memref<64x64xbf16, #tpu.memory_space<vmem>>, %arg9: memref<64x32xbf16, #tpu.memory_space<vmem>>, %arg10: memref<1x32xf32, #tpu.memory_space<vmem>>, %arg11: memref<1x32xf32, #tpu.memory_space<vmem>>, %arg12: memref<32x64xbf16, #tpu.memory_space<vmem>>, %arg13: memref<1x64xf32, #tpu.memory_space<vmem>>, %arg14: memref<1x8x64xf32, #tpu.memory_space<vmem>>, %arg15: memref<1x8x64xf32, #tpu.memory_space<vmem>>) attributes {dimension_semantics = [#tpu.dimension_semantics<parallel>], iteration_bounds = array<i64: 2>, scalar_prefetch = 0 : i64, scratch_operands = 0 : i64, tpu.core_type = #tpu.core_type<tc>, window_params = [{transform_indices = @transform_0, window_bounds = array<i64: 1, 2048, 27>}, {pipeline_mode = #tpu.pipeline_mode<synchronous>, transform_indices = @transform_1, window_bounds = array<i64: 27, 32>}, {pipeline_mode = #tpu.pipeline_mode<synchronous>, transform_indices = @transform_2, window_bounds = array<i64: 1, 32>}, {pipeline_mode = #tpu.pipeline_mode<synchronous>, transform_indices = @transform_3, window_bounds = array<i64: 1, 32>}, {pipeline_mode = #tpu.pipeline_mode<synchronous>, transform_indices = @transform_4, window_bounds = array<i64: 32, 64>}, {pipeline_mode = #tpu.pipeline_mode<synchronous>, transform_indices = @transform_5, window_bounds = array<i64: 1, 64>}, {pipeline_mode = #tpu.pipeline_mode<synchronous>, transform_indices = @transform_6, window_bounds = array<i64: 1, 64>}, {pipeline_mode = #tpu.pipeline_mode<synchronous>, transform_indices = @transform_7, window_bounds = array<i64: 64, 64>}, {pipeline_mode = #tpu.pipeline_mode<synchronous>, transform_indices = @transform_8, window_bounds = array<i64: 64, 32>}, {pipeline_mode = #tpu.pipeline_mode<synchronous>, transform_indices = @transform_9, window_bounds = array<i64: 1, 32>}, {pipeline_mode = #tpu.pipeline_mode<synchronous>, transform_indices = @transform_10, window_bounds = array<i64: 1, 32>}, {pipeline_mode = #tpu.pipeline_mode<synchronous>, transform_indices = @transform_11, window_bounds = array<i64: 32, 64>}, {pipeline_mode = #tpu.pipeline_mode<synchronous>, transform_indices = @transform_12, window_bounds = array<i64: 1, 64>}, {transform_indices = @transform_13, window_bounds = array<i64: 1, 8, 64>}, {transform_indices = @transform_14, window_bounds = array<i64: 1, 8, 64>}]} {
    %c0 = arith.constant 0 : index
    %c0_0 = arith.constant 0 : index
    %c0_1 = arith.constant 0 : index
    %0 = vector.load %arg1[%c0, %c0_0, %c0_1] : memref<1x2048x27xbf16, #tpu.memory_space<vmem>>, vector<1x2048x27xbf16>
    %1 = vector.shape_cast %0 : vector<1x2048x27xbf16> to vector<2048x27xbf16>
    %c0_2 = arith.constant 0 : index
    %c0_3 = arith.constant 0 : index
    %2 = vector.load %arg2[%c0_2, %c0_3] : memref<27x32xbf16, #tpu.memory_space<vmem>>, vector<27x32xbf16>
    %cst = arith.constant dense<0.000000e+00> : vector<2048x32xf32>
    %3 = tpu.matmul %1, %2, %cst {dimension_numbers = #tpu.dot_dimension_numbers<[1], [0], [0], [1], [0, 0, 1, 1], [], []>} : vector<2048x27xbf16>, vector<27x32xbf16>, vector<2048x32xf32> -> vector<2048x32xf32>
    %c0_4 = arith.constant 0 : index
    %c0_5 = arith.constant 0 : index
    %4 = vector.load %arg3[%c0_4, %c0_5] : memref<1x32xf32, #tpu.memory_space<vmem>>, vector<1x32xf32>
    %c0_6 = arith.constant 0 : index
    %c0_7 = arith.constant 0 : index
    %5 = vector.load %arg4[%c0_6, %c0_7] : memref<1x32xf32, #tpu.memory_space<vmem>>, vector<1x32xf32>
    %cst_8 = arith.constant dense<0.000000e+00> : vector<32xf32>
    %6 = vector.multi_reduction <add>, %3, %cst_8 [0] : vector<2048x32xf32> to vector<32xf32>
    %7 = vector.shape_cast %6 : vector<32xf32> to vector<1x32xf32>
    %cst_9 = arith.constant 2.048000e+03 : f32
    %8 = vector.broadcast %cst_9 : f32 to vector<1x32xf32>
    %9 = arith.divf %7, %8 : vector<1x32xf32>
    %10 = vector.broadcast %9 : vector<1x32xf32> to vector<2048x32xf32>
    %11 = arith.subf %3, %10 : vector<2048x32xf32>
    %12 = arith.mulf %11, %11 : vector<2048x32xf32>
    %cst_10 = arith.constant dense<0.000000e+00> : vector<32xf32>
    %13 = vector.multi_reduction <add>, %12, %cst_10 [0] : vector<2048x32xf32> to vector<32xf32>
    %14 = vector.shape_cast %13 : vector<32xf32> to vector<1x32xf32>
    %cst_11 = arith.constant 2.048000e+03 : f32
    %15 = vector.broadcast %cst_11 : f32 to vector<1x32xf32>
    %16 = arith.divf %14, %15 : vector<1x32xf32>
    %cst_12 = arith.constant 9.99999974E-6 : f32
    %17 = vector.broadcast %cst_12 : f32 to vector<1x32xf32>
    %18 = arith.addf %16, %17 : vector<1x32xf32>
    %19 = math.rsqrt %18 : vector<1x32xf32>
    %20 = vector.broadcast %19 : vector<1x32xf32> to vector<2048x32xf32>
    %21 = arith.mulf %11, %20 : vector<2048x32xf32>
    %22 = vector.broadcast %4 : vector<1x32xf32> to vector<2048x32xf32>
    %23 = arith.mulf %21, %22 : vector<2048x32xf32>
    %24 = vector.broadcast %5 : vector<1x32xf32> to vector<2048x32xf32>
    %25 = arith.addf %23, %24 : vector<2048x32xf32>
    %cst_13 = arith.constant 0.000000e+00 : f32
    %26 = vector.broadcast %cst_13 : f32 to vector<2048x32xf32>
    %27 = arith.maximumf %25, %26 : vector<2048x32xf32>
    %28 = vector.shape_cast %27 : vector<2048x32xf32> to vector<8x256x32xf32>
    %cst_14 = arith.constant dense<0.000000e+00> : vector<8x32xf32>
    %29 = vector.multi_reduction <add>, %28, %cst_14 [1] : vector<8x256x32xf32> to vector<8x32xf32>
    %cst_15 = arith.constant 2.560000e+02 : f32
    %30 = vector.broadcast %cst_15 : f32 to vector<8x32xf32>
    %31 = arith.divf %29, %30 : vector<8x32xf32>
    %32 = arith.truncf %31 : vector<8x32xf32> to vector<8x32xbf16>
    %c0_16 = arith.constant 0 : index
    %c0_17 = arith.constant 0 : index
    %33 = vector.load %arg5[%c0_16, %c0_17] : memref<32x64xbf16, #tpu.memory_space<vmem>>, vector<32x64xbf16>
    %cst_18 = arith.constant dense<0.000000e+00> : vector<8x64xf32>
    %34 = tpu.matmul %32, %33, %cst_18 {dimension_numbers = #tpu.dot_dimension_numbers<[1], [0], [0], [1], [0, 0, 1, 1], [], []>} : vector<8x32xbf16>, vector<32x64xbf16>, vector<8x64xf32> -> vector<8x64xf32>
    %c0_19 = arith.constant 0 : index
    %c0_20 = arith.constant 0 : index
    %35 = vector.load %arg6[%c0_19, %c0_20] : memref<1x64xf32, #tpu.memory_space<vmem>>, vector<1x64xf32>
    %c0_21 = arith.constant 0 : index
    %c0_22 = arith.constant 0 : index
    %36 = vector.load %arg7[%c0_21, %c0_22] : memref<1x64xf32, #tpu.memory_space<vmem>>, vector<1x64xf32>
    %cst_23 = arith.constant dense<0.000000e+00> : vector<64xf32>
    %37 = vector.multi_reduction <add>, %34, %cst_23 [0] : vector<8x64xf32> to vector<64xf32>
    %38 = vector.shape_cast %37 : vector<64xf32> to vector<1x64xf32>
    %cst_24 = arith.constant 8.000000e+00 : f32
    %39 = vector.broadcast %cst_24 : f32 to vector<1x64xf32>
    %40 = arith.divf %38, %39 : vector<1x64xf32>
    %41 = vector.broadcast %40 : vector<1x64xf32> to vector<8x64xf32>
    %42 = arith.subf %34, %41 : vector<8x64xf32>
    %43 = arith.mulf %42, %42 : vector<8x64xf32>
    %cst_25 = arith.constant dense<0.000000e+00> : vector<64xf32>
    %44 = vector.multi_reduction <add>, %43, %cst_25 [0] : vector<8x64xf32> to vector<64xf32>
    %45 = vector.shape_cast %44 : vector<64xf32> to vector<1x64xf32>
    %cst_26 = arith.constant 8.000000e+00 : f32
    %46 = vector.broadcast %cst_26 : f32 to vector<1x64xf32>
    %47 = arith.divf %45, %46 : vector<1x64xf32>
    %cst_27 = arith.constant 9.99999974E-6 : f32
    %48 = vector.broadcast %cst_27 : f32 to vector<1x64xf32>
    %49 = arith.addf %47, %48 : vector<1x64xf32>
    %50 = math.rsqrt %49 : vector<1x64xf32>
    %51 = vector.broadcast %50 : vector<1x64xf32> to vector<8x64xf32>
    %52 = arith.mulf %42, %51 : vector<8x64xf32>
    %53 = vector.broadcast %35 : vector<1x64xf32> to vector<8x64xf32>
    %54 = arith.mulf %52, %53 : vector<8x64xf32>
    %55 = vector.broadcast %36 : vector<1x64xf32> to vector<8x64xf32>
    %56 = arith.addf %54, %55 : vector<8x64xf32>
    %cst_28 = arith.constant 0.000000e+00 : f32
    %57 = vector.broadcast %cst_28 : f32 to vector<8x64xf32>
    %58 = arith.maximumf %56, %57 : vector<8x64xf32>
    %59 = arith.truncf %58 : vector<8x64xf32> to vector<8x64xbf16>
    %c0_29 = arith.constant 0 : index
    %c0_30 = arith.constant 0 : index
    %60 = vector.load %arg8[%c0_29, %c0_30] : memref<64x64xbf16, #tpu.memory_space<vmem>>, vector<64x64xbf16>
    %cst_31 = arith.constant dense<0.000000e+00> : vector<8x64xf32>
    %61 = tpu.matmul %59, %60, %cst_31 {dimension_numbers = #tpu.dot_dimension_numbers<[1], [0], [0], [1], [0, 0, 1, 1], [], []>} : vector<8x64xbf16>, vector<64x64xbf16>, vector<8x64xf32> -> vector<8x64xf32>
    %cst_32 = arith.constant dense<0.000000e+00> : vector<64xf32>
    %62 = vector.multi_reduction <add>, %61, %cst_32 [0] : vector<8x64xf32> to vector<64xf32>
    %63 = vector.shape_cast %62 : vector<64xf32> to vector<1x64xf32>
    %cst_33 = arith.constant 8.000000e+00 : f32
    %64 = vector.broadcast %cst_33 : f32 to vector<1x64xf32>
    %65 = arith.divf %63, %64 : vector<1x64xf32>
    %66 = vector.broadcast %65 : vector<1x64xf32> to vector<8x64xf32>
    %67 = arith.subf %61, %66 : vector<8x64xf32>
    %68 = arith.mulf %67, %67 : vector<8x64xf32>
    %cst_34 = arith.constant dense<0.000000e+00> : vector<64xf32>
    %69 = vector.multi_reduction <add>, %68, %cst_34 [0] : vector<8x64xf32> to vector<64xf32>
    %70 = vector.shape_cast %69 : vector<64xf32> to vector<1x64xf32>
    %cst_35 = arith.constant 8.000000e+00 : f32
    %71 = vector.broadcast %cst_35 : f32 to vector<1x64xf32>
    %72 = arith.divf %70, %71 : vector<1x64xf32>
    %cst_36 = arith.constant 9.99999974E-6 : f32
    %73 = vector.broadcast %cst_36 : f32 to vector<1x64xf32>
    %74 = arith.addf %72, %73 : vector<1x64xf32>
    %75 = math.rsqrt %74 : vector<1x64xf32>
    %76 = vector.broadcast %75 : vector<1x64xf32> to vector<8x64xf32>
    %77 = arith.mulf %67, %76 : vector<8x64xf32>
    %c0_37 = arith.constant 0 : index
    %c0_38 = arith.constant 0 : index
    %c0_39 = arith.constant 0 : index
    %78 = vector.load %arg14[%c0_37, %c0_38, %c0_39] : memref<1x8x64xf32, #tpu.memory_space<vmem>>, vector<1x8x64xf32>
    %79 = vector.shape_cast %78 : vector<1x8x64xf32> to vector<8x64xf32>
    %80 = vector.shape_cast %77 : vector<8x64xf32> to vector<1x8x64xf32>
    tpu.vector_store %arg14[%c0_37, %c0_38, %c0_39], %80 {strides = array<i32>} : memref<1x8x64xf32, #tpu.memory_space<vmem>>, vector<1x8x64xf32>,
    %81 = arith.truncf %77 : vector<8x64xf32> to vector<8x64xbf16>
    %c0_40 = arith.constant 0 : index
    %c0_41 = arith.constant 0 : index
    %82 = vector.load %arg9[%c0_40, %c0_41] : memref<64x32xbf16, #tpu.memory_space<vmem>>, vector<64x32xbf16>
    %cst_42 = arith.constant dense<0.000000e+00> : vector<8x32xf32>
    %83 = tpu.matmul %81, %82, %cst_42 {dimension_numbers = #tpu.dot_dimension_numbers<[1], [0], [0], [1], [0, 0, 1, 1], [], []>} : vector<8x64xbf16>, vector<64x32xbf16>, vector<8x32xf32> -> vector<8x32xf32>
    %c0_43 = arith.constant 0 : index
    %c0_44 = arith.constant 0 : index
    %84 = vector.load %arg10[%c0_43, %c0_44] : memref<1x32xf32, #tpu.memory_space<vmem>>, vector<1x32xf32>
    %c0_45 = arith.constant 0 : index
    %c0_46 = arith.constant 0 : index
    %85 = vector.load %arg11[%c0_45, %c0_46] : memref<1x32xf32, #tpu.memory_space<vmem>>, vector<1x32xf32>
    %cst_47 = arith.constant dense<0.000000e+00> : vector<32xf32>
    %86 = vector.multi_reduction <add>, %83, %cst_47 [0] : vector<8x32xf32> to vector<32xf32>
    %87 = vector.shape_cast %86 : vector<32xf32> to vector<1x32xf32>
    %cst_48 = arith.constant 8.000000e+00 : f32
    %88 = vector.broadcast %cst_48 : f32 to vector<1x32xf32>
    %89 = arith.divf %87, %88 : vector<1x32xf32>
    %90 = vector.broadcast %89 : vector<1x32xf32> to vector<8x32xf32>
    %91 = arith.subf %83, %90 : vector<8x32xf32>
    %92 = arith.mulf %91, %91 : vector<8x32xf32>
    %cst_49 = arith.constant dense<0.000000e+00> : vector<32xf32>
    %93 = vector.multi_reduction <add>, %92, %cst_49 [0] : vector<8x32xf32> to vector<32xf32>
    %94 = vector.shape_cast %93 : vector<32xf32> to vector<1x32xf32>
    %cst_50 = arith.constant 8.000000e+00 : f32
    %95 = vector.broadcast %cst_50 : f32 to vector<1x32xf32>
    %96 = arith.divf %94, %95 : vector<1x32xf32>
    %cst_51 = arith.constant 9.99999974E-6 : f32
    %97 = vector.broadcast %cst_51 : f32 to vector<1x32xf32>
    %98 = arith.addf %96, %97 : vector<1x32xf32>
    %99 = math.rsqrt %98 : vector<1x32xf32>
    %100 = vector.broadcast %99 : vector<1x32xf32> to vector<8x32xf32>
    %101 = arith.mulf %91, %100 : vector<8x32xf32>
    %102 = vector.broadcast %84 : vector<1x32xf32> to vector<8x32xf32>
    %103 = arith.mulf %101, %102 : vector<8x32xf32>
    %104 = vector.broadcast %85 : vector<1x32xf32> to vector<8x32xf32>
    %105 = arith.addf %103, %104 : vector<8x32xf32>
    %cst_52 = arith.constant 0.000000e+00 : f32
    %106 = vector.broadcast %cst_52 : f32 to vector<8x32xf32>
    %107 = arith.maximumf %105, %106 : vector<8x32xf32>
    %108 = arith.truncf %107 : vector<8x32xf32> to vector<8x32xbf16>
    %c0_53 = arith.constant 0 : index
    %c0_54 = arith.constant 0 : index
    %109 = vector.load %arg12[%c0_53, %c0_54] : memref<32x64xbf16, #tpu.memory_space<vmem>>, vector<32x64xbf16>
    %cst_55 = arith.constant dense<0.000000e+00> : vector<8x64xf32>
    %110 = tpu.matmul %108, %109, %cst_55 {dimension_numbers = #tpu.dot_dimension_numbers<[1], [0], [0], [1], [0, 0, 1, 1], [], []>} : vector<8x32xbf16>, vector<32x64xbf16>, vector<8x64xf32> -> vector<8x64xf32>
    %c0_56 = arith.constant 0 : index
    %c0_57 = arith.constant 0 : index
    %111 = vector.load %arg13[%c0_56, %c0_57] : memref<1x64xf32, #tpu.memory_space<vmem>>, vector<1x64xf32>
    %112 = vector.broadcast %111 : vector<1x64xf32> to vector<8x64xf32>
    %113 = arith.addf %110, %112 : vector<8x64xf32>
    %c0_58 = arith.constant 0 : index
    %c0_59 = arith.constant 0 : index
    %c0_60 = arith.constant 0 : index
    %114 = vector.load %arg15[%c0_58, %c0_59, %c0_60] : memref<1x8x64xf32, #tpu.memory_space<vmem>>, vector<1x8x64xf32>
    %115 = vector.shape_cast %114 : vector<1x8x64xf32> to vector<8x64xf32>
    %116 = vector.shape_cast %113 : vector<8x64xf32> to vector<1x8x64xf32>
    tpu.vector_store %arg15[%c0_58, %c0_59, %c0_60], %116 {strides = array<i32>} : memref<1x8x64xf32, #tpu.memory_space<vmem>>, vector<1x8x64xf32>,
    return
  }
  func.func @transform_0(%arg0: i32) -> (i32, i32, i32) {
    %c0_i32 = arith.constant 0 : i32
    %c0_i32_0 = arith.constant 0 : i32
    %c0_i32_1 = arith.constant 0 : i32
    return %arg0, %c0_i32, %c0_i32_0 : i32, i32, i32
  }
  func.func @transform_1(%arg0: i32) -> (i32, i32) {
    %c0_i32 = arith.constant 0 : i32
    %c0_i32_0 = arith.constant 0 : i32
    %c0_i32_1 = arith.constant 0 : i32
    return %c0_i32, %c0_i32_0 : i32, i32
  }
  func.func @transform_2(%arg0: i32) -> (i32, i32) {
    %c0_i32 = arith.constant 0 : i32
    %c0_i32_0 = arith.constant 0 : i32
    %c0_i32_1 = arith.constant 0 : i32
    return %c0_i32, %c0_i32_0 : i32, i32
  }
  func.func @transform_3(%arg0: i32) -> (i32, i32) {
    %c0_i32 = arith.constant 0 : i32
    %c0_i32_0 = arith.constant 0 : i32
    %c0_i32_1 = arith.constant 0 : i32
    return %c0_i32, %c0_i32_0 : i32, i32
  }
  func.func @transform_4(%arg0: i32) -> (i32, i32) {
    %c0_i32 = arith.constant 0 : i32
    %c0_i32_0 = arith.constant 0 : i32
    %c0_i32_1 = arith.constant 0 : i32
    return %c0_i32, %c0_i32_0 : i32, i32
  }
  func.func @transform_5(%arg0: i32) -> (i32, i32) {
    %c0_i32 = arith.constant 0 : i32
    %c0_i32_0 = arith.constant 0 : i32
    %c0_i32_1 = arith.constant 0 : i32
    return %c0_i32, %c0_i32_0 : i32, i32
  }
  func.func @transform_6(%arg0: i32) -> (i32, i32) {
    %c0_i32 = arith.constant 0 : i32
    %c0_i32_0 = arith.constant 0 : i32
    %c0_i32_1 = arith.constant 0 : i32
    return %c0_i32, %c0_i32_0 : i32, i32
  }
  func.func @transform_7(%arg0: i32) -> (i32, i32) {
    %c0_i32 = arith.constant 0 : i32
    %c0_i32_0 = arith.constant 0 : i32
    %c0_i32_1 = arith.constant 0 : i32
    return %c0_i32, %c0_i32_0 : i32, i32
  }
  func.func @transform_8(%arg0: i32) -> (i32, i32) {
    %c0_i32 = arith.constant 0 : i32
    %c0_i32_0 = arith.constant 0 : i32
    %c0_i32_1 = arith.constant 0 : i32
    return %c0_i32, %c0_i32_0 : i32, i32
  }
  func.func @transform_9(%arg0: i32) -> (i32, i32) {
    %c0_i32 = arith.constant 0 : i32
    %c0_i32_0 = arith.constant 0 : i32
    %c0_i32_1 = arith.constant 0 : i32
    return %c0_i32, %c0_i32_0 : i32, i32
  }
  func.func @transform_10(%arg0: i32) -> (i32, i32) {
    %c0_i32 = arith.constant 0 : i32
    %c0_i32_0 = arith.constant 0 : i32
    %c0_i32_1 = arith.constant 0 : i32
    return %c0_i32, %c0_i32_0 : i32, i32
  }
  func.func @transform_11(%arg0: i32) -> (i32, i32) {
    %c0_i32 = arith.constant 0 : i32
    %c0_i32_0 = arith.constant 0 : i32
    %c0_i32_1 = arith.constant 0 : i32
    return %c0_i32, %c0_i32_0 : i32, i32
  }
  func.func @transform_12(%arg0: i32) -> (i32, i32) {
    %c0_i32 = arith.constant 0 : i32
    %c0_i32_0 = arith.constant 0 : i32
    %c0_i32_1 = arith.constant 0 : i32
    return %c0_i32, %c0_i32_0 : i32, i32
  }
  func.func @transform_13(%arg0: i32) -> (i32, i32, i32) {
    %c0_i32 = arith.constant 0 : i32
    %c0_i32_0 = arith.constant 0 : i32
    %c0_i32_1 = arith.constant 0 : i32
    return %arg0, %c0_i32, %c0_i32_0 : i32, i32, i32
  }
  func.func @transform_14(%arg0: i32) -> (i32, i32, i32) {
    %c0_i32 = arith.constant 0 : i32
    %c0_i32_0 = arith.constant 0 : i32
    %c0_i32_1 = arith.constant 0 : i32
    return %arg0, %c0_i32, %c0_i32_0 : i32, i32, i32
  }
}

</mosaic_0001>

<llo_original>
// kernel: simsiam_forward.1
$region0: #{simsiam_forward.1}
  #allocation0 [shape = 'u32[]', space=smem, size = 0x4, offset = 0x4, fixed_abs, tag = 'smem constant byte address 0x4 - core index']
  #allocation1 [shape = 'u32[72,128]{1,0:T(1,128)}', space=vmem, size = 0x9000, scoped, tag = 'internal scratch']
  %s0 = inlined_call_operand.vmem [shape: bf16[2,2048,27], index: 0, kind: input, shape index: {}]
  %s1 = inlined_call_operand.vmem [shape: bf16[27,32], index: 1, kind: input, shape index: {}]
  %s2 = inlined_call_operand.vmem [shape: f32[1,32], index: 2, kind: input, shape index: {}]
  %s3 = inlined_call_operand.vmem [shape: f32[1,32], index: 3, kind: input, shape index: {}]
  %s4 = inlined_call_operand.vmem [shape: bf16[32,64], index: 4, kind: input, shape index: {}]
  %s5 = inlined_call_operand.vmem [shape: f32[1,64], index: 5, kind: input, shape index: {}]
  %s6 = inlined_call_operand.vmem [shape: f32[1,64], index: 6, kind: input, shape index: {}]
  %s7 = inlined_call_operand.vmem [shape: bf16[64,64], index: 7, kind: input, shape index: {}]
  %s8 = inlined_call_operand.vmem [shape: bf16[64,32], index: 8, kind: input, shape index: {}]
  %s9 = inlined_call_operand.vmem [shape: f32[1,32], index: 9, kind: input, shape index: {}]
  %s10 = inlined_call_operand.vmem [shape: f32[1,32], index: 10, kind: input, shape index: {}]
  %s11 = inlined_call_operand.vmem [shape: bf16[32,64], index: 11, kind: input, shape index: {}]
  %s12 = inlined_call_operand.vmem [shape: f32[1,64], index: 12, kind: input, shape index: {}]
  %s13 = inlined_call_operand.vmem [shape: f32[2,8,64], index: 13, kind: output, shape index: {0}]
  %s14 = inlined_call_operand.vmem [shape: f32[2,8,64], index: 14, kind: output, shape index: {1}]
  %15 = xla_tuple %s13, %s14
  %s16 = sld [smem:[#allocation0]]
  $region93: #{simsiam_forward.1} parent=0
    _
  %s18 = ssub.s32 1, %s16
  %s19 = scalar_select 0, %s18, %s16
  loop: start=0, step=1, limit=4
  $region2: #{simsiam_forward.1} parent=0 // loop_pre_header
    _
  $region3: #{simsiam_forward.1} parent=0 // loop_header
    %s21 = sphi 0, %s25
    %p22 = scmp.ge.s32.totalorder %s21, 4
    %s31 = sphi 0, %s33
    %s34 = sphi 0, %s31
    %s35 = sphi 0, %s34
    %s51 = sphi 0, %s35
    %s55 = sphi 0, %s55
    %s57 = sphi 0, %s55
    %s58 = sphi 0, %s57
    %s72 = sphi 0, %s58
    %s76 = sphi 0, %s76
    %s78 = sphi 0, %s76
    %s79 = sphi 0, %s78
    %s93 = sphi 0, %s79
    %s97 = sphi 0, %s97
    %s99 = sphi 0, %s97
    %s100 = sphi 0, %s99
    %s114 = sphi 0, %s100
    %s118 = sphi 0, %s118
    %s120 = sphi 0, %s118
    %s121 = sphi 0, %s120
    %s135 = sphi 0, %s121
    %s139 = sphi 0, %s139
    %s141 = sphi 0, %s139
    %s142 = sphi 0, %s141
    %s156 = sphi 0, %s142
    %s160 = sphi 0, %s160
    %s162 = sphi 0, %s160
    %s163 = sphi 0, %s162
    %s177 = sphi 0, %s163
    %s181 = sphi 0, %s181
    %s183 = sphi 0, %s181
    %s184 = sphi 0, %s183
    %s198 = sphi 0, %s184
    %s202 = sphi 0, %s202
    %s204 = sphi 0, %s202
    %s205 = sphi 0, %s204
    %s219 = sphi 0, %s205
    %s223 = sphi 0, %s223
    %s225 = sphi 0, %s223
    %s226 = sphi 0, %s225
    %s240 = sphi 0, %s226
    %s244 = sphi 0, %s244
    %s246 = sphi 0, %s244
    %s247 = sphi 0, %s246
    %s261 = sphi 0, %s247
    %s265 = sphi 0, %s265
    %s267 = sphi 0, %s265
    %s268 = sphi 0, %s267
    %s282 = sphi 0, %s268
    %s286 = sphi 0, %s286
    %s288 = sphi 0, %s286
    %s289 = sphi 0, %s288
    %s303 = sphi 0, %s289
    %s309 = sphi 0, %s311
    %s312 = sphi 0, %s309
    %s313 = sphi 0, %s312
    %s329 = sphi 0, %s313
    %s335 = sphi 0, %s337
    %s338 = sphi 0, %s335
    %s339 = sphi 0, %s338
    %s355 = sphi 0, %s339
  $region4: #{simsiam_forward.1} parent=0 // loop_header_branch
    %24 = sbr.rel (%p22) target = $region8
  $region5: #{simsiam_forward.1} parent=0 // loop_body
    %s26 = ssub.s32 %s21, 1
    %s27 = ssub.s32 %s21, 2
    %s28 = sadd.s32 %s21, 1
    %s29 = ssub.s32 %s21, %s28
    %p30 = scmp.eq.s32.totalorder %s29, 0
    %s32 = sadd.s32 %s31, 1
    %s33 = scalar_select %p30, %s31, %s32
    %p36 = pneg %p30
    %p37 = scmp.eq.s32.totalorder %s21, 1
    %p38 = por %p36, %p37
    %p39 = scmp.ne.s32.totalorder %s31, %s34
    %p40 = scmp.eq.s32.totalorder %s21, 0
    %p41 = por %p39, %p40
    %p42 = scmp.ne.s32.totalorder %s31, %s34
    %p43 = scmp.eq.s32.totalorder %s26, 1
    %p44 = por %p42, %p43
    %p45 = scmp.ne.s32.totalorder %s34, %s35
    %p46 = scmp.eq.s32.totalorder %s26, 0
    %p47 = por %p45, %p46
    %p48 = scmp.ne.s32.totalorder %s34, %s35
    %p49 = scmp.eq.s32.totalorder %s27, 1
    %p50 = por %p48, %p49
    %p52 = scmp.ne.s32.totalorder %s35, %s51
    %p53 = scmp.eq.s32.totalorder %s27, 0
    %p54 = por %p52, %p53
    %s56 = sadd.s32 %s55, 1
    %p59 = scmp.eq.s32.totalorder %s21, 1
    %p60 = scmp.ne.s32.totalorder %s55, %s57
    %p61 = scmp.eq.s32.totalorder %s21, 0
    %p62 = por %p60, %p61
    %p63 = scmp.ne.s32.totalorder %s55, %s57
    %p64 = scmp.eq.s32.totalorder %s26, 1
    %p65 = por %p63, %p64
    %p66 = scmp.ne.s32.totalorder %s57, %s58
    %p67 = scmp.eq.s32.totalorder %s26, 0
    %p68 = por %p66, %p67
    %p69 = scmp.ne.s32.totalorder %s57, %s58
    %p70 = scmp.eq.s32.totalorder %s27, 1
    %p71 = por %p69, %p70
    %p73 = scmp.ne.s32.totalorder %s58, %s72
    %p74 = scmp.eq.s32.totalorder %s27, 0
    %p75 = por %p73, %p74
    %s77 = sadd.s32 %s76, 1
    %p80 = scmp.eq.s32.totalorder %s21, 1
    %p81 = scmp.ne.s32.totalorder %s76, %s78
    %p82 = scmp.eq.s32.totalorder %s21, 0
    %p83 = por %p81, %p82
    %p84 = scmp.ne.s32.totalorder %s76, %s78
    %p85 = scmp.eq.s32.totalorder %s26, 1
    %p86 = por %p84, %p85
    %p87 = scmp.ne.s32.totalorder %s78, %s79
    %p88 = scmp.eq.s32.totalorder %s26, 0
    %p89 = por %p87, %p88
    %p90 = scmp.ne.s32.totalorder %s78, %s79
    %p91 = scmp.eq.s32.totalorder %s27, 1
    %p92 = por %p90, %p91
    %p94 = scmp.ne.s32.totalorder %s79, %s93
    %p95 = scmp.eq.s32.totalorder %s27, 0
    %p96 = por %p94, %p95
    %s98 = sadd.s32 %s97, 1
    %p101 = scmp.eq.s32.totalorder %s21, 1
    %p102 = scmp.ne.s32.totalorder %s97, %s99
    %p103 = scmp.eq.s32.totalorder %s21, 0
    %p104 = por %p102, %p103
    %p105 = scmp.ne.s32.totalorder %s97, %s99
    %p106 = scmp.eq.s32.totalorder %s26, 1
    %p107 = por %p105, %p106
    %p108 = scmp.ne.s32.totalorder %s99, %s100
    %p109 = scmp.eq.s32.totalorder %s26, 0
    %p110 = por %p108, %p109
    %p111 = scmp.ne.s32.totalorder %s99, %s100
    %p112 = scmp.eq.s32.totalorder %s27, 1
    %p113 = por %p111, %p112
    %p115 = scmp.ne.s32.totalorder %s100, %s114
    %p116 = scmp.eq.s32.totalorder %s27, 0
    %p117 = por %p115, %p116
    %s119 = sadd.s32 %s118, 1
    %p122 = scmp.eq.s32.totalorder %s21, 1
    %p123 = scmp.ne.s32.totalorder %s118, %s120
    %p124 = scmp.eq.s32.totalorder %s21, 0
    %p125 = por %p123, %p124
    %p126 = scmp.ne.s32.totalorder %s118, %s120
    %p127 = scmp.eq.s32.totalorder %s26, 1
    %p128 = por %p126, %p127
    %p129 = scmp.ne.s32.totalorder %s120, %s121
    %p130 = scmp.eq.s32.totalorder %s26, 0
    %p131 = por %p129, %p130
    %p132 = scmp.ne.s32.totalorder %s120, %s121
    %p133 = scmp.eq.s32.totalorder %s27, 1
    %p134 = por %p132, %p133
    %p136 = scmp.ne.s32.totalorder %s121, %s135
    %p137 = scmp.eq.s32.totalorder %s27, 0
    %p138 = por %p136, %p137
    %s140 = sadd.s32 %s139, 1
    %p143 = scmp.eq.s32.totalorder %s21, 1
    %p144 = scmp.ne.s32.totalorder %s139, %s141
    %p145 = scmp.eq.s32.totalorder %s21, 0
    %p146 = por %p144, %p145
    %p147 = scmp.ne.s32.totalorder %s139, %s141
    %p148 = scmp.eq.s32.totalorder %s26, 1
    %p149 = por %p147, %p148
    %p150 = scmp.ne.s32.totalorder %s141, %s142
    %p151 = scmp.eq.s32.totalorder %s26, 0
    %p152 = por %p150, %p151
    %p153 = scmp.ne.s32.totalorder %s141, %s142
    %p154 = scmp.eq.s32.totalorder %s27, 1
    %p155 = por %p153, %p154
    %p157 = scmp.ne.s32.totalorder %s142, %s156
    %p158 = scmp.eq.s32.totalorder %s27, 0
    %p159 = por %p157, %p158
    %s161 = sadd.s32 %s160, 1
    %p164 = scmp.eq.s32.totalorder %s21, 1
    %p165 = scmp.ne.s32.totalorder %s160, %s162
    %p166 = scmp.eq.s32.totalorder %s21, 0
    %p167 = por %p165, %p166
    %p168 = scmp.ne.s32.totalorder %s160, %s162
    %p169 = scmp.eq.s32.totalorder %s26, 1
    %p170 = por %p168, %p169
    %p171 = scmp.ne.s32.totalorder %s162, %s163
    %p172 = scmp.eq.s32.totalorder %s26, 0
    %p173 = por %p171, %p172
    %p174 = scmp.ne.s32.totalorder %s162, %s163
    %p175 = scmp.eq.s32.totalorder %s27, 1
    %p176 = por %p174, %p175
    %p178 = scmp.ne.s32.totalorder %s163, %s177
    %p179 = scmp.eq.s32.totalorder %s27, 0
    %p180 = por %p178, %p179
    %s182 = sadd.s32 %s181, 1
    %p185 = scmp.eq.s32.totalorder %s21, 1
    %p186 = scmp.ne.s32.totalorder %s181, %s183
    %p187 = scmp.eq.s32.totalorder %s21, 0
    %p188 = por %p186, %p187
    %p189 = scmp.ne.s32.totalorder %s181, %s183
    %p190 = scmp.eq.s32.totalorder %s26, 1
    %p191 = por %p189, %p190
    %p192 = scmp.ne.s32.totalorder %s183, %s184
    %p193 = scmp.eq.s32.totalorder %s26, 0
    %p194 = por %p192, %p193
    %p195 = scmp.ne.s32.totalorder %s183, %s184
    %p196 = scmp.eq.s32.totalorder %s27, 1
    %p197 = por %p195, %p196
    %p199 = scmp.ne.s32.totalorder %s184, %s198
    %p200 = scmp.eq.s32.totalorder %s27, 0
    %p201 = por %p199, %p200
    %s203 = sadd.s32 %s202, 1
    %p206 = scmp.eq.s32.totalorder %s21, 1
    %p207 = scmp.ne.s32.totalorder %s202, %s204
    %p208 = scmp.eq.s32.totalorder %s21, 0
    %p209 = por %p207, %p208
    %p210 = scmp.ne.s32.totalorder %s202, %s204
    %p211 = scmp.eq.s32.totalorder %s26, 1
    %p212 = por %p210, %p211
    %p213 = scmp.ne.s32.totalorder %s204, %s205
    %p214 = scmp.eq.s32.totalorder %s26, 0
    %p215 = por %p213, %p214
    %p216 = scmp.ne.s32.totalorder %s204, %s205
    %p217 = scmp.eq.s32.totalorder %s27, 1
    %p218 = por %p216, %p217
    %p220 = scmp.ne.s32.totalorder %s205, %s219
    %p221 = scmp.eq.s32.totalorder %s27, 0
    %p222 = por %p220, %p221
    %s224 = sadd.s32 %s223, 1
    %p227 = scmp.eq.s32.totalorder %s21, 1
    %p228 = scmp.ne.s32.totalorder %s223, %s225
    %p229 = scmp.eq.s32.totalorder %s21, 0
    %p230 = por %p228, %p229
    %p231 = scmp.ne.s32.totalorder %s223, %s225
    %p232 = scmp.eq.s32.totalorder %s26, 1
    %p233 = por %p231, %p232
    %p234 = scmp.ne.s32.totalorder %s225, %s226
    %p235 = scmp.eq.s32.totalorder %s26, 0
    %p236 = por %p234, %p235
    %p237 = scmp.ne.s32.totalorder %s225, %s226
    %p238 = scmp.eq.s32.totalorder %s27, 1
    %p239 = por %p237, %p238
    %p241 = scmp.ne.s32.totalorder %s226, %s240
    %p242 = scmp.eq.s32.totalorder %s27, 0
    %p243 = por %p241, %p242
    %s245 = sadd.s32 %s244, 1
    %p248 = scmp.eq.s32.totalorder %s21, 1
    %p249 = scmp.ne.s32.totalorder %s244, %s246
    %p250 = scmp.eq.s32.totalorder %s21, 0
    %p251 = por %p249, %p250
    %p252 = scmp.ne.s32.totalorder %s244, %s246
    %p253 = scmp.eq.s32.totalorder %s26, 1
    %p254 = por %p252, %p253
    %p255 = scmp.ne.s32.totalorder %s246, %s247
    %p256 = scmp.eq.s32.totalorder %s26, 0
    %p257 = por %p255, %p256
    %p258 = scmp.ne.s32.totalorder %s246, %s247
    %p259 = scmp.eq.s32.totalorder %s27, 1
    %p260 = por %p258, %p259
    %p262 = scmp.ne.s32.totalorder %s247, %s261
    %p263 = scmp.eq.s32.totalorder %s27, 0
    %p264 = por %p262, %p263
    %s266 = sadd.s32 %s265, 1
    %p269 = scmp.eq.s32.totalorder %s21, 1
    %p270 = scmp.ne.s32.totalorder %s265, %s267
    %p271 = scmp.eq.s32.totalorder %s21, 0
    %p272 = por %p270, %p271
    %p273 = scmp.ne.s32.totalorder %s265, %s267
    %p274 = scmp.eq.s32.totalorder %s26, 1
    %p275 = por %p273, %p274
    %p276 = scmp.ne.s32.totalorder %s267, %s268
    %p277 = scmp.eq.s32.totalorder %s26, 0
    %p278 = por %p276, %p277
    %p279 = scmp.ne.s32.totalorder %s267, %s268
    %p280 = scmp.eq.s32.totalorder %s27, 1
    %p281 = por %p279, %p280
    %p283 = scmp.ne.s32.totalorder %s268, %s282
    %p284 = scmp.eq.s32.totalorder %s27, 0
    %p285 = por %p283, %p284
    %s287 = sadd.s32 %s286, 1
    %p290 = scmp.eq.s32.totalorder %s21, 1
    %p291 = scmp.ne.s32.totalorder %s286, %s288
    %p292 = scmp.eq.s32.totalorder %s21, 0
    %p293 = por %p291, %p292
    %p294 = scmp.ne.s32.totalorder %s286, %s288
    %p295 = scmp.eq.s32.totalorder %s26, 1
    %p296 = por %p294, %p295
    %p297 = scmp.ne.s32.totalorder %s288, %s289
    %p298 = scmp.eq.s32.totalorder %s26, 0
    %p299 = por %p297, %p298
    %p300 = scmp.ne.s32.totalorder %s288, %s289
    %p301 = scmp.eq.s32.totalorder %s27, 1
    %p302 = por %p300, %p301
    %p304 = scmp.ne.s32.totalorder %s289, %s303
    %p305 = scmp.eq.s32.totalorder %s27, 0
    %p306 = por %p304, %p305
    %s307 = ssub.s32 %s21, %s28
    %p308 = scmp.eq.s32.totalorder %s307, 0
    %s310 = sadd.s32 %s309, 1
    %s311 = scalar_select %p308, %s309, %s310
    %p314 = pneg %p308
    %p315 = scmp.eq.s32.totalorder %s21, 1
    %p316 = por %p314, %p315
    %p317 = scmp.ne.s32.totalorder %s309, %s312
    %p318 = scmp.eq.s32.totalorder %s21, 0
    %p319 = por %p317, %p318
    %p320 = scmp.ne.s32.totalorder %s309, %s312
    %p321 = scmp.eq.s32.totalorder %s26, 1
    %p322 = por %p320, %p321
    %p323 = scmp.ne.s32.totalorder %s312, %s313
    %p324 = scmp.eq.s32.totalorder %s26, 0
    %p325 = por %p323, %p324
    %p326 = scmp.ne.s32.totalorder %s312, %s313
    %p327 = scmp.eq.s32.totalorder %s27, 1
    %p328 = por %p326, %p327
    %p330 = scmp.ne.s32.totalorder %s313, %s329
    %p331 = scmp.eq.s32.totalorder %s27, 0
    %p332 = por %p330, %p331
    %s333 = ssub.s32 %s21, %s28
    %p334 = scmp.eq.s32.totalorder %s333, 0
    %s336 = sadd.s32 %s335, 1
    %s337 = scalar_select %p334, %s335, %s336
    %p340 = pneg %p334
    %p341 = scmp.eq.s32.totalorder %s21, 1
    %p342 = por %p340, %p341
    %p343 = scmp.ne.s32.totalorder %s335, %s338
    %p344 = scmp.eq.s32.totalorder %s21, 0
    %p345 = por %p343, %p344
    %p346 = scmp.ne.s32.totalorder %s335, %s338
    %p347 = scmp.eq.s32.totalorder %s26, 1
    %p348 = por %p346, %p347
    %p349 = scmp.ne.s32.totalorder %s338, %s339
    %p350 = scmp.eq.s32.totalorder %s26, 0
    %p351 = por %p349, %p350
    %p352 = scmp.ne.s32.totalorder %s338, %s339
    %p353 = scmp.eq.s32.totalorder %s27, 1
    %p354 = por %p352, %p353
    %p356 = scmp.ne.s32.totalorder %s339, %s355
    %p357 = scmp.eq.s32.totalorder %s27, 0
    %p358 = por %p356, %p357
    %p359 = scmp.le.s32.totalorder 1, %s21
    %p360 = scmp.lt.s32.totalorder %s21, 3
    %p361 = pnand %p359, %p360
    %p362 = pneg %p361
    // Predicated region
    $region9: #{simsiam_forward.1} parent=5 // pred_check
      _
    $region10: #{simsiam_forward.1} parent=5 // pred_check_branch
      %364 = sbr.rel (%p361) target = $region12
    $region11: #{simsiam_forward.1} parent=5 // pred_region
      %s365 = ssub.s32 %s21, 1
      // Predicated region
      $region13: #{simsiam_forward.1} parent=11 // pred_check
        %p366 = pneg %p68
      $region14: #{simsiam_forward.1} parent=11 // pred_check_branch
        %368 = sbr.rel (%p366) target = $region16
      $region15: #{simsiam_forward.1} parent=11 // pred_region
        _
      $region16: #{simsiam_forward.1} parent=11 // pred_fallthru
        _
      // Predicated region
      $region17: #{simsiam_forward.1} parent=11 // pred_check
        %p369 = pneg %p89
      $region18: #{simsiam_forward.1} parent=11 // pred_check_branch
        %371 = sbr.rel (%p369) target = $region20
      $region19: #{simsiam_forward.1} parent=11 // pred_region
        _
      $region20: #{simsiam_forward.1} parent=11 // pred_fallthru
        _
      // Predicated region
      $region21: #{simsiam_forward.1} parent=11 // pred_check
        %p372 = pneg %p110
      $region22: #{simsiam_forward.1} parent=11 // pred_check_branch
        %374 = sbr.rel (%p372) target = $region24
      $region23: #{simsiam_forward.1} parent=11 // pred_region
        _
      $region24: #{simsiam_forward.1} parent=11 // pred_fallthru
        _
      // Predicated region
      $region25: #{simsiam_forward.1} parent=11 // pred_check
        %p375 = pneg %p131
      $region26: #{simsiam_forward.1} parent=11 // pred_check_branch
        %377 = sbr.rel (%p375) target = $region28
      $region27: #{simsiam_forward.1} parent=11 // pred_region
        _
      $region28: #{simsiam_forward.1} parent=11 // pred_fallthru
        _
      // Predicated region
      $region29: #{simsiam_forward.1} parent=11 // pred_check
        %p378 = pneg %p152
      $region30: #{simsiam_forward.1} parent=11 // pred_check_branch
        %380 = sbr.rel (%p378) target = $region32
      $region31: #{simsiam_forward.1} parent=11 // pred_region
        _
      $region32: #{simsiam_forward.1} parent=11 // pred_fallthru
        _
      // Predicated region
      $region33: #{simsiam_forward.1} parent=11 // pred_check
        %p381 = pneg %p173
      $region34: #{simsiam_forward.1} parent=11 // pred_check_branch
        %383 = sbr.rel (%p381) target = $region36
      $region35: #{simsiam_forward.1} parent=11 // pred_region
        _
      $region36: #{simsiam_forward.1} parent=11 // pred_fallthru
        _
      // Predicated region
      $region37: #{simsiam_forward.1} parent=11 // pred_check
        %p384 = pneg %p194
      $region38: #{simsiam_forward.1} parent=11 // pred_check_branch
        %386 = sbr.rel (%p384) target = $region40
      $region39: #{simsiam_forward.1} parent=11 // pred_region
        _
      $region40: #{simsiam_forward.1} parent=11 // pred_fallthru
        _
      // Predicated region
      $region41: #{simsiam_forward.1} parent=11 // pred_check
        %p387 = pneg %p215
      $region42: #{simsiam_forward.1} parent=11 // pred_check_branch
        %389 = sbr.rel (%p387) target = $region44
      $region43: #{simsiam_forward.1} parent=11 // pred_region
        _
      $region44: #{simsiam_forward.1} parent=11 // pred_fallthru
        _
      // Predicated region
      $region45: #{simsiam_forward.1} parent=11 // pred_check
        %p390 = pneg %p236
      $region46: #{simsiam_forward.1} parent=11 // pred_check_branch
        %392 = sbr.rel (%p390) target = $region48
      $region47: #{simsiam_forward.1} parent=11 // pred_region
        _
      $region48: #{simsiam_forward.1} parent=11 // pred_fallthru
        _
      // Predicated region
      $region49: #{simsiam_forward.1} parent=11 // pred_check
        %p393 = pneg %p257
      $region50: #{simsiam_forward.1} parent=11 // pred_check_branch
        %395 = sbr.rel (%p393) target = $region52
      $region51: #{simsiam_forward.1} parent=11 // pred_region
        _
      $region52: #{simsiam_forward.1} parent=11 // pred_fallthru
        _
      // Predicated region
      $region53: #{simsiam_forward.1} parent=11 // pred_check
        %p396 = pneg %p278
      $region54: #{simsiam_forward.1} parent=11 // pred_check_branch
        %398 = sbr.rel (%p396) target = $region56
      $region55: #{simsiam_forward.1} parent=11 // pred_region
        _
      $region56: #{simsiam_forward.1} parent=11 // pred_fallthru
        _
      // Predicated region
      $region57: #{simsiam_forward.1} parent=11 // pred_check
        %p399 = pneg %p299
      $region58: #{simsiam_forward.1} parent=11 // pred_check_branch
        %401 = sbr.rel (%p399) target = $region60
      $region59: #{simsiam_forward.1} parent=11 // pred_region
        _
      $region60: #{simsiam_forward.1} parent=11 // pred_fallthru
        _
    $region12: #{simsiam_forward.1} parent=5 // pred_fallthru
      _
    %p402 = scmp.lt.s32.totalorder %s21, 2
    // Predicated region
    $region61: #{simsiam_forward.1} parent=5 // pred_check
      %p403 = pneg %p402
    $region62: #{simsiam_forward.1} parent=5 // pred_check_branch
      %405 = sbr.rel (%p403) target = $region64
    $region63: #{simsiam_forward.1} parent=5 // pred_region
      // Predicated region
      $region65: #{simsiam_forward.1} parent=63 // pred_check
        %p406 = pneg %p41
      $region66: #{simsiam_forward.1} parent=63 // pred_check_branch
        %408 = sbr.rel (%p406) target = $region68
      $region67: #{simsiam_forward.1} parent=63 // pred_region
        %p409 = scmp.lt.s32.totalorder %s21, 1
        %s410 = scalar_select %p409, %s21, 1
        %s411 = smul.addr %s410, 256
        %s412 = smul.addr %s411, 4
        %s413 = scalar_lea.vmem %s0, %s412
      $region68: #{simsiam_forward.1} parent=63 // pred_fallthru
        _
    $region64: #{simsiam_forward.1} parent=5 // pred_fallthru
      _
    %p414 = scmp.le.s32.totalorder 1, %s21
    %p415 = scmp.lt.s32.totalorder %s21, 3
    %p416 = pnand %p414, %p415
    %p417 = pneg %p416
    // Predicated region
    $region69: #{simsiam_forward.1} parent=5 // pred_check
      _
    $region70: #{simsiam_forward.1} parent=5 // pred_check_branch
      %419 = sbr.rel (%p416) target = $region72
    $region71: #{simsiam_forward.1} parent=5 // pred_region
      %s420 = ssub.s32 %s21, 1
      %p421 = scmp.lt.s32.totalorder %s26, 1
      %s422 = scalar_select %p421, %s26, 1
      %s423 = smul.addr %s422, 256
      %s424 = smul.addr %s423, 4
      %s425 = scalar_lea.vmem %s0, %s424
      %p426 = pneg %p47
      %p427 = pneg %p44
      %p428 = pneg %p68
      %p429 = pneg %p65
      %p430 = pneg %p89
      %p431 = pneg %p86
      %p432 = pneg %p110
      %p433 = pneg %p107
      %p434 = pneg %p131
      %p435 = pneg %p128
      %p436 = pneg %p152
      %p437 = pneg %p149
      %p438 = pneg %p173
      %p439 = pneg %p170
      %p440 = pneg %p194
      %p441 = pneg %p191
      %p442 = pneg %p215
      %p443 = pneg %p212
      %p444 = pneg %p236
      %p445 = pneg %p233
      %p446 = pneg %p257
      %p447 = pneg %p254
      %p448 = pneg %p278
      %p449 = pneg %p275
      %p450 = pneg %p299
      %p451 = pneg %p296
      %p452 = pneg %p325
      %p453 = pneg %p322
      %p454 = scmp.lt.s32.totalorder %s26, 1
      %s455 = scalar_select %p454, %s26, 1
      %s456 = smul.addr %s455, 8
      %s457 = scalar_lea.vmem %s13, %s456
      %p458 = pneg %p351
      %p459 = pneg %p348
      %p460 = scmp.lt.s32.totalorder %s26, 1
      %s461 = scalar_select %p460, %s26, 1
      %s462 = smul.addr %s461, 8
      %s463 = scalar_lea.vmem %s14, %s462
      %p464 = scmp.lt.s32.totalorder %s26, 1
      %s465 = scalar_select %p464, %s26, 1
      %s466 = smul.addr %s465, 256
      %s467 = smul.addr %s466, 4
      %s468 = scalar_lea.vmem %s0, %s467
      %p469 = scmp.lt.s32.totalorder %s26, 1
      %s470 = scalar_select %p469, %s26, 1
      %s471 = smul.addr %s470, 8
      %s472 = scalar_lea.vmem %s13, %s471
      %p473 = scmp.lt.s32.totalorder %s26, 1
      %s474 = scalar_select %p473, %s26, 1
      %s475 = smul.addr %s474, 8
      %s476 = scalar_lea.vmem %s14, %s475
      %v478 = vld [vmem:[%s468] sm:$0xf]
      %v479 = vld [vmem:[%s468 + $0x4] sm:$0xf]
      %v480 = vld [vmem:[%s468 + $0x8] sm:$0xf]
      %v481 = vld [vmem:[%s468 + $0xc] sm:$0xf]
      %v482 = vld [vmem:[%s468 + $0x10] sm:$0xf]
      %v483 = vld [vmem:[%s468 + $0x14] sm:$0xf]
      %v484 = vld [vmem:[%s468 + $0x18] sm:$0xf]
      %v485 = vld [vmem:[%s468 + $0x1c] sm:$0xf]
      %v486 = vld [vmem:[%s468 + $0x20] sm:$0xf]
      %v487 = vld [vmem:[%s468 + $0x24] sm:$0xf]
      %v488 = vld [vmem:[%s468 + $0x28] sm:$0xf]
      %v489 = vld [vmem:[%s468 + $0x2c] sm:$0xf]
      %v490 = vld [vmem:[%s468 + $0x30] sm:$0xf]
      %v491 = vld [vmem:[%s468 + $0x34] sm:$0xf]
      %v492 = vld [vmem:[%s468 + $0x38] sm:$0xf]
      %v493 = vld [vmem:[%s468 + $0x3c] sm:$0xf]
      %v494 = vld [vmem:[%s468 + $0x40] sm:$0xf]
      %v495 = vld [vmem:[%s468 + $0x44] sm:$0xf]
      %v496 = vld [vmem:[%s468 + $0x48] sm:$0xf]
      %v497 = vld [vmem:[%s468 + $0x4c] sm:$0xf]
      %v498 = vld [vmem:[%s468 + $0x50] sm:$0xf]
      %v499 = vld [vmem:[%s468 + $0x54] sm:$0xf]
      %v500 = vld [vmem:[%s468 + $0x58] sm:$0xf]
      %v501 = vld [vmem:[%s468 + $0x5c] sm:$0xf]
      %v502 = vld [vmem:[%s468 + $0x60] sm:$0xf]
      %v503 = vld [vmem:[%s468 + $0x64] sm:$0xf]
      %v504 = vld [vmem:[%s468 + $0x68] sm:$0xf]
      %v505 = vld [vmem:[%s468 + $0x6c] sm:$0xf]
      %v506 = vld [vmem:[%s468 + $0x70] sm:$0xf]
      %v507 = vld [vmem:[%s468 + $0x74] sm:$0xf]
      %v508 = vld [vmem:[%s468 + $0x78] sm:$0xf]
      %v509 = vld [vmem:[%s468 + $0x7c] sm:$0xf]
      %v510 = vld [vmem:[%s468 + $0x80] sm:$0xf]
      %v511 = vld [vmem:[%s468 + $0x84] sm:$0xf]
      %v512 = vld [vmem:[%s468 + $0x88] sm:$0xf]
      %v513 = vld [vmem:[%s468 + $0x8c] sm:$0xf]
      %v514 = vld [vmem:[%s468 + $0x90] sm:$0xf]
      %v515 = vld [vmem:[%s468 + $0x94] sm:$0xf]
      %v516 = vld [vmem:[%s468 + $0x98] sm:$0xf]
      %v517 = vld [vmem:[%s468 + $0x9c] sm:$0xf]
      %v518 = vld [vmem:[%s468 + $0xa0] sm:$0xf]
      %v519 = vld [vmem:[%s468 + $0xa4] sm:$0xf]
      %v520 = vld [vmem:[%s468 + $0xa8] sm:$0xf]
      %v521 = vld [vmem:[%s468 + $0xac] sm:$0xf]
      %v522 = vld [vmem:[%s468 + $0xb0] sm:$0xf]
      %v523 = vld [vmem:[%s468 + $0xb4] sm:$0xf]
      %v524 = vld [vmem:[%s468 + $0xb8] sm:$0xf]
      %v525 = vld [vmem:[%s468 + $0xbc] sm:$0xf]
      %v526 = vld [vmem:[%s468 + $0xc0] sm:$0xf]
      %v527 = vld [vmem:[%s468 + $0xc4] sm:$0xf]
      %v528 = vld [vmem:[%s468 + $0xc8] sm:$0xf]
      %v529 = vld [vmem:[%s468 + $0xcc] sm:$0xf]
      %v530 = vld [vmem:[%s468 + $0xd0] sm:$0xf]
      %v531 = vld [vmem:[%s468 + $0xd4] sm:$0xf]
      %v532 = vld [vmem:[%s468 + $0xd8] sm:$0xf]
      %v533 = vld [vmem:[%s468 + $0xdc] sm:$0xf]
      %v534 = vld [vmem:[%s468 + $0xe0] sm:$0xf]
      %v535 = vld [vmem:[%s468 + $0xe4] sm:$0xf]
      %v536 = vld [vmem:[%s468 + $0xe8] sm:$0xf]
      %v537 = vld [vmem:[%s468 + $0xec] sm:$0xf]
      %v538 = vld [vmem:[%s468 + $0xf0] sm:$0xf]
      %v539 = vld [vmem:[%s468 + $0xf4] sm:$0xf]
      %v540 = vld [vmem:[%s468 + $0xf8] sm:$0xf]
      %v541 = vld [vmem:[%s468 + $0xfc] sm:$0xf]
      %v542 = vld [vmem:[%s468 + $0x100] sm:$0xf]
      %v543 = vld [vmem:[%s468 + $0x104] sm:$0xf]
      %v544 = vld [vmem:[%s468 + $0x108] sm:$0xf]
      %v545 = vld [vmem:[%s468 + $0x10c] sm:$0xf]
      %v546 = vld [vmem:[%s468 + $0x110] sm:$0xf]
      %v547 = vld [vmem:[%s468 + $0x114] sm:$0xf]
      %v548 = vld [vmem:[%s468 + $0x118] sm:$0xf]
      %v549 = vld [vmem:[%s468 + $0x11c] sm:$0xf]
      %v550 = vld [vmem:[%s468 + $0x120] sm:$0xf]
      %v551 = vld [vmem:[%s468 + $0x124] sm:$0xf]
      %v552 = vld [vmem:[%s468 + $0x128] sm:$0xf]
      %v553 = vld [vmem:[%s468 + $0x12c] sm:$0xf]
      %v554 = vld [vmem:[%s468 + $0x130] sm:$0xf]
      %v555 = vld [vmem:[%s468 + $0x134] sm:$0xf]
      %v556 = vld [vmem:[%s468 + $0x138] sm:$0xf]
      %v557 = vld [vmem:[%s468 + $0x13c] sm:$0xf]
      %v558 = vld [vmem:[%s468 + $0x140] sm:$0xf]
      %v559 = vld [vmem:[%s468 + $0x144] sm:$0xf]
      %v560 = vld [vmem:[%s468 + $0x148] sm:$0xf]
      %v561 = vld [vmem:[%s468 + $0x14c] sm:$0xf]
      %v562 = vld [vmem:[%s468 + $0x150] sm:$0xf]
      %v563 = vld [vmem:[%s468 + $0x154] sm:$0xf]
      %v564 = vld [vmem:[%s468 + $0x158] sm:$0xf]
      %v565 = vld [vmem:[%s468 + $0x15c] sm:$0xf]
      %v566 = vld [vmem:[%s468 + $0x160] sm:$0xf]
      %v567 = vld [vmem:[%s468 + $0x164] sm:$0xf]
      %v568 = vld [vmem:[%s468 + $0x168] sm:$0xf]
      %v569 = vld [vmem:[%s468 + $0x16c] sm:$0xf]
      %v570 = vld [vmem:[%s468 + $0x170] sm:$0xf]
      %v571 = vld [vmem:[%s468 + $0x174] sm:$0xf]
      %v572 = vld [vmem:[%s468 + $0x178] sm:$0xf]
      %v573 = vld [vmem:[%s468 + $0x17c] sm:$0xf]
      %v574 = vld [vmem:[%s468 + $0x180] sm:$0xf]
      %v575 = vld [vmem:[%s468 + $0x184] sm:$0xf]
      %v576 = vld [vmem:[%s468 + $0x188] sm:$0xf]
      %v577 = vld [vmem:[%s468 + $0x18c] sm:$0xf]
      %v578 = vld [vmem:[%s468 + $0x190] sm:$0xf]
      %v579 = vld [vmem:[%s468 + $0x194] sm:$0xf]
      %v580 = vld [vmem:[%s468 + $0x198] sm:$0xf]
      %v581 = vld [vmem:[%s468 + $0x19c] sm:$0xf]
      %v582 = vld [vmem:[%s468 + $0x1a0] sm:$0xf]
      %v583 = vld [vmem:[%s468 + $0x1a4] sm:$0xf]
      %v584 = vld [vmem:[%s468 + $0x1a8] sm:$0xf]
      %v585 = vld [vmem:[%s468 + $0x1ac] sm:$0xf]
      %v586 = vld [vmem:[%s468 + $0x1b0] sm:$0xf]
      %v587 = vld [vmem:[%s468 + $0x1b4] sm:$0xf]
      %v588 = vld [vmem:[%s468 + $0x1b8] sm:$0xf]
      %v589 = vld [vmem:[%s468 + $0x1bc] sm:$0xf]
      %v590 = vld [vmem:[%s468 + $0x1c0] sm:$0xf]
      %v591 = vld [vmem:[%s468 + $0x1c4] sm:$0xf]
      %v592 = vld [vmem:[%s468 + $0x1c8] sm:$0xf]
      %v593 = vld [vmem:[%s468 + $0x1cc] sm:$0xf]
      %v594 = vld [vmem:[%s468 + $0x1d0] sm:$0xf]
      %v595 = vld [vmem:[%s468 + $0x1d4] sm:$0xf]
      %v596 = vld [vmem:[%s468 + $0x1d8] sm:$0xf]
      %v597 = vld [vmem:[%s468 + $0x1dc] sm:$0xf]
      %v598 = vld [vmem:[%s468 + $0x1e0] sm:$0xf]
      %v599 = vld [vmem:[%s468 + $0x1e4] sm:$0xf]
      %v600 = vld [vmem:[%s468 + $0x1e8] sm:$0xf]
      %v601 = vld [vmem:[%s468 + $0x1ec] sm:$0xf]
      %v602 = vld [vmem:[%s468 + $0x1f0] sm:$0xf]
      %v603 = vld [vmem:[%s468 + $0x1f4] sm:$0xf]
      %v604 = vld [vmem:[%s468 + $0x1f8] sm:$0xf]
      %v605 = vld [vmem:[%s468 + $0x1fc] sm:$0xf]
      %v606 = vld [vmem:[%s468 + $0x200] sm:$0xf]
      %v607 = vld [vmem:[%s468 + $0x204] sm:$0xf]
      %v608 = vld [vmem:[%s468 + $0x208] sm:$0xf]
      %v609 = vld [vmem:[%s468 + $0x20c] sm:$0xf]
      %v610 = vld [vmem:[%s468 + $0x210] sm:$0xf]
      %v611 = vld [vmem:[%s468 + $0x214] sm:$0xf]
      %v612 = vld [vmem:[%s468 + $0x218] sm:$0xf]
      %v613 = vld [vmem:[%s468 + $0x21c] sm:$0xf]
      %v614 = vld [vmem:[%s468 + $0x220] sm:$0xf]
      %v615 = vld [vmem:[%s468 + $0x224] sm:$0xf]
      %v616 = vld [vmem:[%s468 + $0x228] sm:$0xf]
      %v617 = vld [vmem:[%s468 + $0x22c] sm:$0xf]
      %v618 = vld [vmem:[%s468 + $0x230] sm:$0xf]
      %v619 = vld [vmem:[%s468 + $0x234] sm:$0xf]
      %v620 = vld [vmem:[%s468 + $0x238] sm:$0xf]
      %v621 = vld [vmem:[%s468 + $0x23c] sm:$0xf]
      %v622 = vld [vmem:[%s468 + $0x240] sm:$0xf]
      %v623 = vld [vmem:[%s468 + $0x244] sm:$0xf]
      %v624 = vld [vmem:[%s468 + $0x248] sm:$0xf]
      %v625 = vld [vmem:[%s468 + $0x24c] sm:$0xf]
      %v626 = vld [vmem:[%s468 + $0x250] sm:$0xf]
      %v627 = vld [vmem:[%s468 + $0x254] sm:$0xf]
      %v628 = vld [vmem:[%s468 + $0x258] sm:$0xf]
      %v629 = vld [vmem:[%s468 + $0x25c] sm:$0xf]
      %v630 = vld [vmem:[%s468 + $0x260] sm:$0xf]
      %v631 = vld [vmem:[%s468 + $0x264] sm:$0xf]
      %v632 = vld [vmem:[%s468 + $0x268] sm:$0xf]
      %v633 = vld [vmem:[%s468 + $0x26c] sm:$0xf]
      %v634 = vld [vmem:[%s468 + $0x270] sm:$0xf]
      %v635 = vld [vmem:[%s468 + $0x274] sm:$0xf]
      %v636 = vld [vmem:[%s468 + $0x278] sm:$0xf]
      %v637 = vld [vmem:[%s468 + $0x27c] sm:$0xf]
      %v638 = vld [vmem:[%s468 + $0x280] sm:$0xf]
      %v639 = vld [vmem:[%s468 + $0x284] sm:$0xf]
      %v640 = vld [vmem:[%s468 + $0x288] sm:$0xf]
      %v641 = vld [vmem:[%s468 + $0x28c] sm:$0xf]
      %v642 = vld [vmem:[%s468 + $0x290] sm:$0xf]
      %v643 = vld [vmem:[%s468 + $0x294] sm:$0xf]
      %v644 = vld [vmem:[%s468 + $0x298] sm:$0xf]
      %v645 = vld [vmem:[%s468 + $0x29c] sm:$0xf]
      %v646 = vld [vmem:[%s468 + $0x2a0] sm:$0xf]
      %v647 = vld [vmem:[%s468 + $0x2a4] sm:$0xf]
      %v648 = vld [vmem:[%s468 + $0x2a8] sm:$0xf]
      %v649 = vld [vmem:[%s468 + $0x2ac] sm:$0xf]
      %v650 = vld [vmem:[%s468 + $0x2b0] sm:$0xf]
      %v651 = vld [vmem:[%s468 + $0x2b4] sm:$0xf]
      %v652 = vld [vmem:[%s468 + $0x2b8] sm:$0xf]
      %v653 = vld [vmem:[%s468 + $0x2bc] sm:$0xf]
      %v654 = vld [vmem:[%s468 + $0x2c0] sm:$0xf]
      %v655 = vld [vmem:[%s468 + $0x2c4] sm:$0xf]
      %v656 = vld [vmem:[%s468 + $0x2c8] sm:$0xf]
      %v657 = vld [vmem:[%s468 + $0x2cc] sm:$0xf]
      %v658 = vld [vmem:[%s468 + $0x2d0] sm:$0xf]
      %v659 = vld [vmem:[%s468 + $0x2d4] sm:$0xf]
      %v660 = vld [vmem:[%s468 + $0x2d8] sm:$0xf]
      %v661 = vld [vmem:[%s468 + $0x2dc] sm:$0xf]
      %v662 = vld [vmem:[%s468 + $0x2e0] sm:$0xf]
      %v663 = vld [vmem:[%s468 + $0x2e4] sm:$0xf]
      %v664 = vld [vmem:[%s468 + $0x2e8] sm:$0xf]
      %v665 = vld [vmem:[%s468 + $0x2ec] sm:$0xf]
      %v666 = vld [vmem:[%s468 + $0x2f0] sm:$0xf]
      %v667 = vld [vmem:[%s468 + $0x2f4] sm:$0xf]
      %v668 = vld [vmem:[%s468 + $0x2f8] sm:$0xf]
      %v669 = vld [vmem:[%s468 + $0x2fc] sm:$0xf]
      %v670 = vld [vmem:[%s468 + $0x300] sm:$0xf]
      %v671 = vld [vmem:[%s468 + $0x304] sm:$0xf]
      %v672 = vld [vmem:[%s468 + $0x308] sm:$0xf]
      %v673 = vld [vmem:[%s468 + $0x30c] sm:$0xf]
      %v674 = vld [vmem:[%s468 + $0x310] sm:$0xf]
      %v675 = vld [vmem:[%s468 + $0x314] sm:$0xf]
      %v676 = vld [vmem:[%s468 + $0x318] sm:$0xf]
      %v677 = vld [vmem:[%s468 + $0x31c] sm:$0xf]
      %v678 = vld [vmem:[%s468 + $0x320] sm:$0xf]
      %v679 = vld [vmem:[%s468 + $0x324] sm:$0xf]
      %v680 = vld [vmem:[%s468 + $0x328] sm:$0xf]
      %v681 = vld [vmem:[%s468 + $0x32c] sm:$0xf]
      %v682 = vld [vmem:[%s468 + $0x330] sm:$0xf]
      %v683 = vld [vmem:[%s468 + $0x334] sm:$0xf]
      %v684 = vld [vmem:[%s468 + $0x338] sm:$0xf]
      %v685 = vld [vmem:[%s468 + $0x33c] sm:$0xf]
      %v686 = vld [vmem:[%s468 + $0x340] sm:$0xf]
      %v687 = vld [vmem:[%s468 + $0x344] sm:$0xf]
      %v688 = vld [vmem:[%s468 + $0x348] sm:$0xf]
      %v689 = vld [vmem:[%s468 + $0x34c] sm:$0xf]
      %v690 = vld [vmem:[%s468 + $0x350] sm:$0xf]
      %v691 = vld [vmem:[%s468 + $0x354] sm:$0xf]
      %v692 = vld [vmem:[%s468 + $0x358] sm:$0xf]
      %v693 = vld [vmem:[%s468 + $0x35c] sm:$0xf]
      %v694 = vld [vmem:[%s468 + $0x360] sm:$0xf]
      %v695 = vld [vmem:[%s468 + $0x364] sm:$0xf]
      %v696 = vld [vmem:[%s468 + $0x368] sm:$0xf]
      %v697 = vld [vmem:[%s468 + $0x36c] sm:$0xf]
      %v698 = vld [vmem:[%s468 + $0x370] sm:$0xf]
      %v699 = vld [vmem:[%s468 + $0x374] sm:$0xf]
      %v700 = vld [vmem:[%s468 + $0x378] sm:$0xf]
      %v701 = vld [vmem:[%s468 + $0x37c] sm:$0xf]
      %v702 = vld [vmem:[%s468 + $0x380] sm:$0xf]
      %v703 = vld [vmem:[%s468 + $0x384] sm:$0xf]
      %v704 = vld [vmem:[%s468 + $0x388] sm:$0xf]
      %v705 = vld [vmem:[%s468 + $0x38c] sm:$0xf]
      %v706 = vld [vmem:[%s468 + $0x390] sm:$0xf]
      %v707 = vld [vmem:[%s468 + $0x394] sm:$0xf]
      %v708 = vld [vmem:[%s468 + $0x398] sm:$0xf]
      %v709 = vld [vmem:[%s468 + $0x39c] sm:$0xf]
      %v710 = vld [vmem:[%s468 + $0x3a0] sm:$0xf]
      %v711 = vld [vmem:[%s468 + $0x3a4] sm:$0xf]
      %v712 = vld [vmem:[%s468 + $0x3a8] sm:$0xf]
      %v713 = vld [vmem:[%s468 + $0x3ac] sm:$0xf]
      %v714 = vld [vmem:[%s468 + $0x3b0] sm:$0xf]
      %v715 = vld [vmem:[%s468 + $0x3b4] sm:$0xf]
      %v716 = vld [vmem:[%s468 + $0x3b8] sm:$0xf]
      %v717 = vld [vmem:[%s468 + $0x3bc] sm:$0xf]
      %v718 = vld [vmem:[%s468 + $0x3c0] sm:$0xf]
      %v719 = vld [vmem:[%s468 + $0x3c4] sm:$0xf]
      %v720 = vld [vmem:[%s468 + $0x3c8] sm:$0xf]
      %v721 = vld [vmem:[%s468 + $0x3cc] sm:$0xf]
      %v722 = vld [vmem:[%s468 + $0x3d0] sm:$0xf]
      %v723 = vld [vmem:[%s468 + $0x3d4] sm:$0xf]
      %v724 = vld [vmem:[%s468 + $0x3d8] sm:$0xf]
      %v725 = vld [vmem:[%s468 + $0x3dc] sm:$0xf]
      %v726 = vld [vmem:[%s468 + $0x3e0] sm:$0xf]
      %v727 = vld [vmem:[%s468 + $0x3e4] sm:$0xf]
      %v728 = vld [vmem:[%s468 + $0x3e8] sm:$0xf]
      %v729 = vld [vmem:[%s468 + $0x3ec] sm:$0xf]
      %v730 = vld [vmem:[%s468 + $0x3f0] sm:$0xf]
      %v731 = vld [vmem:[%s468 + $0x3f4] sm:$0xf]
      %v732 = vld [vmem:[%s468 + $0x3f8] sm:$0xf]
      %v733 = vld [vmem:[%s468 + $0x3fc] sm:$0xf]
      %v734 = vld [vmem:[%s1] sm:$0xf]
      %v735 = vld [vmem:[%s1 + $0x4] sm:$0xf]
      %v736 = vld [vmem:[%s1 + $0x8] sm:$0xf]
      %v737 = vld [vmem:[%s1 + $0xc] sm:$0x3]
      %v994 = vunpack.c.l.b16 %v478
      %v995 = vunpack.c.l.b16 %v479
      %v996 = vunpack.c.l.b16 %v480
      %v997 = vunpack.c.l.b16 %v481
      %v998 = vunpack.c.l.b16 %v482
      %v999 = vunpack.c.l.b16 %v483
      %v1000 = vunpack.c.l.b16 %v484
      %v1001 = vunpack.c.l.b16 %v485
      %v1002 = vunpack.c.l.b16 %v486
      %v1003 = vunpack.c.l.b16 %v487
      %v1004 = vunpack.c.l.b16 %v488
      %v1005 = vunpack.c.l.b16 %v489
      %v1006 = vunpack.c.l.b16 %v490
      %v1007 = vunpack.c.l.b16 %v491
      %v1008 = vunpack.c.l.b16 %v492
      %v1009 = vunpack.c.l.b16 %v493
      %v1010 = vunpack.c.l.b16 %v494
      %v1011 = vunpack.c.l.b16 %v495
      %v1012 = vunpack.c.l.b16 %v496
      %v1013 = vunpack.c.l.b16 %v497
      %v1014 = vunpack.c.l.b16 %v498
      %v1015 = vunpack.c.l.b16 %v499
      %v1016 = vunpack.c.l.b16 %v500
      %v1017 = vunpack.c.l.b16 %v501
      %v1018 = vunpack.c.l.b16 %v502
      %v1019 = vunpack.c.l.b16 %v503
      %v1020 = vunpack.c.l.b16 %v504
      %v1021 = vunpack.c.l.b16 %v505
      %v1022 = vunpack.c.l.b16 %v506
      %v1023 = vunpack.c.l.b16 %v507
      %v1024 = vunpack.c.l.b16 %v508
      %v1025 = vunpack.c.l.b16 %v509
      %v1026 = vunpack.c.l.b16 %v510
      %v1027 = vunpack.c.l.b16 %v511
      %v1028 = vunpack.c.l.b16 %v512
      %v1029 = vunpack.c.l.b16 %v513
      %v1030 = vunpack.c.l.b16 %v514
      %v1031 = vunpack.c.l.b16 %v515
      %v1032 = vunpack.c.l.b16 %v516
      %v1033 = vunpack.c.l.b16 %v517
      %v1034 = vunpack.c.l.b16 %v518
      %v1035 = vunpack.c.l.b16 %v519
      %v1036 = vunpack.c.l.b16 %v520
      %v1037 = vunpack.c.l.b16 %v521
      %v1038 = vunpack.c.l.b16 %v522
      %v1039 = vunpack.c.l.b16 %v523
      %v1040 = vunpack.c.l.b16 %v524
      %v1041 = vunpack.c.l.b16 %v525
      %v1042 = vunpack.c.l.b16 %v526
      %v1043 = vunpack.c.l.b16 %v527
      %v1044 = vunpack.c.l.b16 %v528
      %v1045 = vunpack.c.l.b16 %v529
      %v1046 = vunpack.c.l.b16 %v530
      %v1047 = vunpack.c.l.b16 %v531
      %v1048 = vunpack.c.l.b16 %v532
      %v1049 = vunpack.c.l.b16 %v533
      %v1050 = vunpack.c.l.b16 %v534
      %v1051 = vunpack.c.l.b16 %v535
      %v1052 = vunpack.c.l.b16 %v536
      %v1053 = vunpack.c.l.b16 %v537
      %v1054 = vunpack.c.l.b16 %v538
      %v1055 = vunpack.c.l.b16 %v539
      %v1056 = vunpack.c.l.b16 %v540
      %v1057 = vunpack.c.l.b16 %v541
      %v1058 = vunpack.c.l.b16 %v542
      %v1059 = vunpack.c.l.b16 %v543
      %v1060 = vunpack.c.l.b16 %v544
      %v1061 = vunpack.c.l.b16 %v545
      %v1062 = vunpack.c.l.b16 %v546
      %v1063 = vunpack.c.l.b16 %v547
      %v1064 = vunpack.c.l.b16 %v548
      %v1065 = vunpack.c.l.b16 %v549
      %v1066 = vunpack.c.l.b16 %v550
      %v1067 = vunpack.c.l.b16 %v551
      %v1068 = vunpack.c.l.b16 %v552
      %v1069 = vunpack.c.l.b16 %v553
      %v1070 = vunpack.c.l.b16 %v554
      %v1071 = vunpack.c.l.b16 %v555
      %v1072 = vunpack.c.l.b16 %v556
      %v1073 = vunpack.c.l.b16 %v557
      %v1074 = vunpack.c.l.b16 %v558
      %v1075 = vunpack.c.l.b16 %v559
      %v1076 = vunpack.c.l.b16 %v560
      %v1077 = vunpack.c.l.b16 %v561
      %v1078 = vunpack.c.l.b16 %v562
      %v1079 = vunpack.c.l.b16 %v563
      %v1080 = vunpack.c.l.b16 %v564
      %v1081 = vunpack.c.l.b16 %v565
      %v1082 = vunpack.c.l.b16 %v566
      %v1083 = vunpack.c.l.b16 %v567
      %v1084 = vunpack.c.l.b16 %v568
      %v1085 = vunpack.c.l.b16 %v569
      %v1086 = vunpack.c.l.b16 %v570
      %v1087 = vunpack.c.l.b16 %v571
      %v1088 = vunpack.c.l.b16 %v572
      %v1089 = vunpack.c.l.b16 %v573
      %v1090 = vunpack.c.l.b16 %v574
      %v1091 = vunpack.c.l.b16 %v575
      %v1092 = vunpack.c.l.b16 %v576
      %v1093 = vunpack.c.l.b16 %v577
      %v1094 = vunpack.c.l.b16 %v578
      %v1095 = vunpack.c.l.b16 %v579
      %v1096 = vunpack.c.l.b16 %v580
      %v1097 = vunpack.c.l.b16 %v581
      %v1098 = vunpack.c.l.b16 %v582
      %v1099 = vunpack.c.l.b16 %v583
      %v1100 = vunpack.c.l.b16 %v584
      %v1101 = vunpack.c.l.b16 %v585
      %v1102 = vunpack.c.l.b16 %v586
      %v1103 = vunpack.c.l.b16 %v587
      %v1104 = vunpack.c.l.b16 %v588
      %v1105 = vunpack.c.l.b16 %v589
      %v1106 = vunpack.c.l.b16 %v590
      %v1107 = vunpack.c.l.b16 %v591
      %v1108 = vunpack.c.l.b16 %v592
      %v1109 = vunpack.c.l.b16 %v593
      %v1110 = vunpack.c.l.b16 %v594
      %v1111 = vunpack.c.l.b16 %v595
      %v1112 = vunpack.c.l.b16 %v596
      %v1113 = vunpack.c.l.b16 %v597
      %v1114 = vunpack.c.l.b16 %v598
      %v1115 = vunpack.c.l.b16 %v599
      %v1116 = vunpack.c.l.b16 %v600
      %v1117 = vunpack.c.l.b16 %v601
      %v1118 = vunpack.c.l.b16 %v602
      %v1119 = vunpack.c.l.b16 %v603
      %v1120 = vunpack.c.l.b16 %v604
      %v1121 = vunpack.c.l.b16 %v605
      %v1122 = vunpack.c.l.b16 %v606
      %v1123 = vunpack.c.l.b16 %v607
      %v1124 = vunpack.c.l.b16 %v608
      %v1125 = vunpack.c.l.b16 %v609
      %v1126 = vunpack.c.l.b16 %v610
      %v1127 = vunpack.c.l.b16 %v611
      %v1128 = vunpack.c.l.b16 %v612
      %v1129 = vunpack.c.l.b16 %v613
      %v1130 = vunpack.c.l.b16 %v614
      %v1131 = vunpack.c.l.b16 %v615
      %v1132 = vunpack.c.l.b16 %v616
      %v1133 = vunpack.c.l.b16 %v617
      %v1134 = vunpack.c.l.b16 %v618
      %v1135 = vunpack.c.l.b16 %v619
      %v1136 = vunpack.c.l.b16 %v620
      %v1137 = vunpack.c.l.b16 %v621
      %v1138 = vunpack.c.l.b16 %v622
      %v1139 = vunpack.c.l.b16 %v623
      %v1140 = vunpack.c.l.b16 %v624
      %v1141 = vunpack.c.l.b16 %v625
      %v1142 = vunpack.c.l.b16 %v626
      %v1143 = vunpack.c.l.b16 %v627
      %v1144 = vunpack.c.l.b16 %v628
      %v1145 = vunpack.c.l.b16 %v629
      %v1146 = vunpack.c.l.b16 %v630
      %v1147 = vunpack.c.l.b16 %v631
      %v1148 = vunpack.c.l.b16 %v632
      %v1149 = vunpack.c.l.b16 %v633
      %v1150 = vunpack.c.l.b16 %v634
      %v1151 = vunpack.c.l.b16 %v635
      %v1152 = vunpack.c.l.b16 %v636
      %v1153 = vunpack.c.l.b16 %v637
      %v1154 = vunpack.c.l.b16 %v638
      %v1155 = vunpack.c.l.b16 %v639
      %v1156 = vunpack.c.l.b16 %v640
      %v1157 = vunpack.c.l.b16 %v641
      %v1158 = vunpack.c.l.b16 %v642
      %v1159 = vunpack.c.l.b16 %v643
      %v1160 = vunpack.c.l.b16 %v644
      %v1161 = vunpack.c.l.b16 %v645
      %v1162 = vunpack.c.l.b16 %v646
      %v1163 = vunpack.c.l.b16 %v647
      %v1164 = vunpack.c.l.b16 %v648
      %v1165 = vunpack.c.l.b16 %v649
      %v1166 = vunpack.c.l.b16 %v650
      %v1167 = vunpack.c.l.b16 %v651
      %v1168 = vunpack.c.l.b16 %v652
      %v1169 = vunpack.c.l.b16 %v653
      %v1170 = vunpack.c.l.b16 %v654
      %v1171 = vunpack.c.l.b16 %v655
      %v1172 = vunpack.c.l.b16 %v656
      %v1173 = vunpack.c.l.b16 %v657
      %v1174 = vunpack.c.l.b16 %v658
      %v1175 = vunpack.c.l.b16 %v659
      %v1176 = vunpack.c.l.b16 %v660
      %v1177 = vunpack.c.l.b16 %v661
      %v1178 = vunpack.c.l.b16 %v662
      %v1179 = vunpack.c.l.b16 %v663
      %v1180 = vunpack.c.l.b16 %v664
      %v1181 = vunpack.c.l.b16 %v665
      %v1182 = vunpack.c.l.b16 %v666
      %v1183 = vunpack.c.l.b16 %v667
      %v1184 = vunpack.c.l.b16 %v668
      %v1185 = vunpack.c.l.b16 %v669
      %v1186 = vunpack.c.l.b16 %v670
      %v1187 = vunpack.c.l.b16 %v671
      %v1188 = vunpack.c.l.b16 %v672
      %v1189 = vunpack.c.l.b16 %v673
      %v1190 = vunpack.c.l.b16 %v674
      %v1191 = vunpack.c.l.b16 %v675
      %v1192 = vunpack.c.l.b16 %v676
      %v1193 = vunpack.c.l.b16 %v677
      %v1194 = vunpack.c.l.b16 %v678
      %v1195 = vunpack.c.l.b16 %v679
      %v1196 = vunpack.c.l.b16 %v680
      %v1197 = vunpack.c.l.b16 %v681
      %v1198 = vunpack.c.l.b16 %v682
      %v1199 = vunpack.c.l.b16 %v683
      %v1200 = vunpack.c.l.b16 %v684
      %v1201 = vunpack.c.l.b16 %v685
      %v1202 = vunpack.c.l.b16 %v686
      %v1203 = vunpack.c.l.b16 %v687
      %v1204 = vunpack.c.l.b16 %v688
      %v1205 = vunpack.c.l.b16 %v689
      %v1206 = vunpack.c.l.b16 %v690
      %v1207 = vunpack.c.l.b16 %v691
      %v1208 = vunpack.c.l.b16 %v692
      %v1209 = vunpack.c.l.b16 %v693
      %v1210 = vunpack.c.l.b16 %v694
      %v1211 = vunpack.c.l.b16 %v695
      %v1212 = vunpack.c.l.b16 %v696
      %v1213 = vunpack.c.l.b16 %v697
      %v1214 = vunpack.c.l.b16 %v698
      %v1215 = vunpack.c.l.b16 %v699
      %v1216 = vunpack.c.l.b16 %v700
      %v1217 = vunpack.c.l.b16 %v701
      %v1218 = vunpack.c.l.b16 %v702
      %v1219 = vunpack.c.l.b16 %v703
      %v1220 = vunpack.c.l.b16 %v704
      %v1221 = vunpack.c.l.b16 %v705
      %v1222 = vunpack.c.l.b16 %v706
      %v1223 = vunpack.c.l.b16 %v707
      %v1224 = vunpack.c.l.b16 %v708
      %v1225 = vunpack.c.l.b16 %v709
      %v1226 = vunpack.c.l.b16 %v710
      %v1227 = vunpack.c.l.b16 %v711
      %v1228 = vunpack.c.l.b16 %v712
      %v1229 = vunpack.c.l.b16 %v713
      %v1230 = vunpack.c.l.b16 %v714
      %v1231 = vunpack.c.l.b16 %v715
      %v1232 = vunpack.c.l.b16 %v716
      %v1233 = vunpack.c.l.b16 %v717
      %v1234 = vunpack.c.l.b16 %v718
      %v1235 = vunpack.c.l.b16 %v719
      %v1236 = vunpack.c.l.b16 %v720
      %v1237 = vunpack.c.l.b16 %v721
      %v1238 = vunpack.c.l.b16 %v722
      %v1239 = vunpack.c.l.b16 %v723
      %v1240 = vunpack.c.l.b16 %v724
      %v1241 = vunpack.c.l.b16 %v725
      %v1242 = vunpack.c.l.b16 %v726
      %v1243 = vunpack.c.l.b16 %v727
      %v1244 = vunpack.c.l.b16 %v728
      %v1245 = vunpack.c.l.b16 %v729
      %v1246 = vunpack.c.l.b16 %v730
      %v1247 = vunpack.c.l.b16 %v731
      %v1248 = vunpack.c.l.b16 %v732
      %v1249 = vunpack.c.l.b16 %v733
      %v1250 = vpack.c.b16 %v995, %v994
      %v1251 = vpack.c.b16 %v997, %v996
      %v1252 = vpack.c.b16 %v999, %v998
      %v1253 = vpack.c.b16 %v1001, %v1000
      %v1254 = vpack.c.b16 %v1003, %v1002
      %v1255 = vpack.c.b16 %v1005, %v1004
      %v1256 = vpack.c.b16 %v1007, %v1006
      %v1257 = vpack.c.b16 %v1009, %v1008
      %v1258 = vpack.c.b16 %v1011, %v1010
      %v1259 = vpack.c.b16 %v1013, %v1012
      %v1260 = vpack.c.b16 %v1015, %v1014
      %v1261 = vpack.c.b16 %v1017, %v1016
      %v1262 = vpack.c.b16 %v1019, %v1018
      %v1263 = vpack.c.b16 %v1021, %v1020
      %v1264 = vpack.c.b16 %v1023, %v1022
      %v1265 = vpack.c.b16 %v1025, %v1024
      %v1266 = vpack.c.b16 %v1027, %v1026
      %v1267 = vpack.c.b16 %v1029, %v1028
      %v1268 = vpack.c.b16 %v1031, %v1030
      %v1269 = vpack.c.b16 %v1033, %v1032
      %v1270 = vpack.c.b16 %v1035, %v1034
      %v1271 = vpack.c.b16 %v1037, %v1036
      %v1272 = vpack.c.b16 %v1039, %v1038
      %v1273 = vpack.c.b16 %v1041, %v1040
      %v1274 = vpack.c.b16 %v1043, %v1042
      %v1275 = vpack.c.b16 %v1045, %v1044
      %v1276 = vpack.c.b16 %v1047, %v1046
      %v1277 = vpack.c.b16 %v1049, %v1048
      %v1278 = vpack.c.b16 %v1051, %v1050
      %v1279 = vpack.c.b16 %v1053, %v1052
      %v1280 = vpack.c.b16 %v1055, %v1054
      %v1281 = vpack.c.b16 %v1057, %v1056
      %v1282 = vpack.c.b16 %v1059, %v1058
      %v1283 = vpack.c.b16 %v1061, %v1060
      %v1284 = vpack.c.b16 %v1063, %v1062
      %v1285 = vpack.c.b16 %v1065, %v1064
      %v1286 = vpack.c.b16 %v1067, %v1066
      %v1287 = vpack.c.b16 %v1069, %v1068
      %v1288 = vpack.c.b16 %v1071, %v1070
      %v1289 = vpack.c.b16 %v1073, %v1072
      %v1290 = vpack.c.b16 %v1075, %v1074
      %v1291 = vpack.c.b16 %v1077, %v1076
      %v1292 = vpack.c.b16 %v1079, %v1078
      %v1293 = vpack.c.b16 %v1081, %v1080
      %v1294 = vpack.c.b16 %v1083, %v1082
      %v1295 = vpack.c.b16 %v1085, %v1084
      %v1296 = vpack.c.b16 %v1087, %v1086
      %v1297 = vpack.c.b16 %v1089, %v1088
      %v1298 = vpack.c.b16 %v1091, %v1090
      %v1299 = vpack.c.b16 %v1093, %v1092
      %v1300 = vpack.c.b16 %v1095, %v1094
      %v1301 = vpack.c.b16 %v1097, %v1096
      %v1302 = vpack.c.b16 %v1099, %v1098
      %v1303 = vpack.c.b16 %v1101, %v1100
      %v1304 = vpack.c.b16 %v1103, %v1102
      %v1305 = vpack.c.b16 %v1105, %v1104
      %v1306 = vpack.c.b16 %v1107, %v1106
      %v1307 = vpack.c.b16 %v1109, %v1108
      %v1308 = vpack.c.b16 %v1111, %v1110
      %v1309 = vpack.c.b16 %v1113, %v1112
      %v1310 = vpack.c.b16 %v1115, %v1114
      %v1311 = vpack.c.b16 %v1117, %v1116
      %v1312 = vpack.c.b16 %v1119, %v1118
      %v1313 = vpack.c.b16 %v1121, %v1120
      %v1314 = vpack.c.b16 %v1123, %v1122
      %v1315 = vpack.c.b16 %v1125, %v1124
      %v1316 = vpack.c.b16 %v1127, %v1126
      %v1317 = vpack.c.b16 %v1129, %v1128
      %v1318 = vpack.c.b16 %v1131, %v1130
      %v1319 = vpack.c.b16 %v1133, %v1132
      %v1320 = vpack.c.b16 %v1135, %v1134
      %v1321 = vpack.c.b16 %v1137, %v1136
      %v1322 = vpack.c.b16 %v1139, %v1138
      %v1323 = vpack.c.b16 %v1141, %v1140
      %v1324 = vpack.c.b16 %v1143, %v1142
      %v1325 = vpack.c.b16 %v1145, %v1144
      %v1326 = vpack.c.b16 %v1147, %v1146
      %v1327 = vpack.c.b16 %v1149, %v1148
      %v1328 = vpack.c.b16 %v1151, %v1150
      %v1329 = vpack.c.b16 %v1153, %v1152
      %v1330 = vpack.c.b16 %v1155, %v1154
      %v1331 = vpack.c.b16 %v1157, %v1156
      %v1332 = vpack.c.b16 %v1159, %v1158
      %v1333 = vpack.c.b16 %v1161, %v1160
      %v1334 = vpack.c.b16 %v1163, %v1162
      %v1335 = vpack.c.b16 %v1165, %v1164
      %v1336 = vpack.c.b16 %v1167, %v1166
      %v1337 = vpack.c.b16 %v1169, %v1168
      %v1338 = vpack.c.b16 %v1171, %v1170
      %v1339 = vpack.c.b16 %v1173, %v1172
      %v1340 = vpack.c.b16 %v1175, %v1174
      %v1341 = vpack.c.b16 %v1177, %v1176
      %v1342 = vpack.c.b16 %v1179, %v1178
      %v1343 = vpack.c.b16 %v1181, %v1180
      %v1344 = vpack.c.b16 %v1183, %v1182
      %v1345 = vpack.c.b16 %v1185, %v1184
      %v1346 = vpack.c.b16 %v1187, %v1186
      %v1347 = vpack.c.b16 %v1189, %v1188
      %v1348 = vpack.c.b16 %v1191, %v1190
      %v1349 = vpack.c.b16 %v1193, %v1192
      %v1350 = vpack.c.b16 %v1195, %v1194
      %v1351 = vpack.c.b16 %v1197, %v1196
      %v1352 = vpack.c.b16 %v1199, %v1198
      %v1353 = vpack.c.b16 %v1201, %v1200
      %v1354 = vpack.c.b16 %v1203, %v1202
      %v1355 = vpack.c.b16 %v1205, %v1204
      %v1356 = vpack.c.b16 %v1207, %v1206
      %v1357 = vpack.c.b16 %v1209, %v1208
      %v1358 = vpack.c.b16 %v1211, %v1210
      %v1359 = vpack.c.b16 %v1213, %v1212
      %v1360 = vpack.c.b16 %v1215, %v1214
      %v1361 = vpack.c.b16 %v1217, %v1216
      %v1362 = vpack.c.b16 %v1219, %v1218
      %v1363 = vpack.c.b16 %v1221, %v1220
      %v1364 = vpack.c.b16 %v1223, %v1222
      %v1365 = vpack.c.b16 %v1225, %v1224
      %v1366 = vpack.c.b16 %v1227, %v1226
      %v1367 = vpack.c.b16 %v1229, %v1228
      %v1368 = vpack.c.b16 %v1231, %v1230
      %v1369 = vpack.c.b16 %v1233, %v1232
      %v1370 = vpack.c.b16 %v1235, %v1234
      %v1371 = vpack.c.b16 %v1237, %v1236
      %v1372 = vpack.c.b16 %v1239, %v1238
      %v1373 = vpack.c.b16 %v1241, %v1240
      %v1374 = vpack.c.b16 %v1243, %v1242
      %v1375 = vpack.c.b16 %v1245, %v1244
      %v1376 = vpack.c.b16 %v1247, %v1246
      %v1377 = vpack.c.b16 %v1249, %v1248
      %v1382 = vunpack.c.l.b16 %v734
      %v1383 = vunpack.c.l.b16 %v735
      %v1384 = vunpack.c.l.b16 %v736
      %v1385 = vunpack.c.l.b16 %v737
      %v1386 = vpack.c.b16 %v1383, %v1382
      %v1387 = vpack.c.b16 %v1385, %v1384
      %vm1389 = vcmask 220160
      %v1391 = vsel %vm1389, %v1250, 0
      %v1394 = vsel %vm1389, %v1251, 0
      %v1397 = vsel %vm1389, %v1252, 0
      %v1400 = vsel %vm1389, %v1253, 0
      %v1403 = vsel %vm1389, %v1254, 0
      %v1406 = vsel %vm1389, %v1255, 0
      %v1409 = vsel %vm1389, %v1256, 0
      %v1412 = vsel %vm1389, %v1257, 0
      %v1415 = vsel %vm1389, %v1258, 0
      %v1418 = vsel %vm1389, %v1259, 0
      %v1421 = vsel %vm1389, %v1260, 0
      %v1424 = vsel %vm1389, %v1261, 0
      %v1427 = vsel %vm1389, %v1262, 0
      %v1430 = vsel %vm1389, %v1263, 0
      %v1433 = vsel %vm1389, %v1264, 0
      %v1436 = vsel %vm1389, %v1265, 0
      %v1439 = vsel %vm1389, %v1266, 0
      %v1442 = vsel %vm1389, %v1267, 0
      %v1445 = vsel %vm1389, %v1268, 0
      %v1448 = vsel %vm1389, %v1269, 0
      %v1451 = vsel %vm1389, %v1270, 0
      %v1454 = vsel %vm1389, %v1271, 0
      %v1457 = vsel %vm1389, %v1272, 0
      %v1460 = vsel %vm1389, %v1273, 0
      %v1463 = vsel %vm1389, %v1274, 0
      %v1466 = vsel %vm1389, %v1275, 0
      %v1469 = vsel %vm1389, %v1276, 0
      %v1472 = vsel %vm1389, %v1277, 0
      %v1475 = vsel %vm1389, %v1278, 0
      %v1478 = vsel %vm1389, %v1279, 0
      %v1481 = vsel %vm1389, %v1280, 0
      %v1484 = vsel %vm1389, %v1281, 0
      %v1487 = vsel %vm1389, %v1282, 0
      %v1490 = vsel %vm1389, %v1283, 0
      %v1493 = vsel %vm1389, %v1284, 0
      %v1496 = vsel %vm1389, %v1285, 0
      %v1499 = vsel %vm1389, %v1286, 0
      %v1502 = vsel %vm1389, %v1287, 0
      %v1505 = vsel %vm1389, %v1288, 0
      %v1508 = vsel %vm1389, %v1289, 0
      %v1511 = vsel %vm1389, %v1290, 0
      %v1514 = vsel %vm1389, %v1291, 0
      %v1517 = vsel %vm1389, %v1292, 0
      %v1520 = vsel %vm1389, %v1293, 0
      %v1523 = vsel %vm1389, %v1294, 0
      %v1526 = vsel %vm1389, %v1295, 0
      %v1529 = vsel %vm1389, %v1296, 0
      %v1532 = vsel %vm1389, %v1297, 0
      %v1535 = vsel %vm1389, %v1298, 0
      %v1538 = vsel %vm1389, %v1299, 0
      %v1541 = vsel %vm1389, %v1300, 0
      %v1544 = vsel %vm1389, %v1301, 0
      %v1547 = vsel %vm1389, %v1302, 0
      %v1550 = vsel %vm1389, %v1303, 0
      %v1553 = vsel %vm1389, %v1304, 0
      %v1556 = vsel %vm1389, %v1305, 0
      %v1559 = vsel %vm1389, %v1306, 0
      %v1562 = vsel %vm1389, %v1307, 0
      %v1565 = vsel %vm1389, %v1308, 0
      %v1568 = vsel %vm1389, %v1309, 0
      %v1571 = vsel %vm1389, %v1310, 0
      %v1574 = vsel %vm1389, %v1311, 0
      %v1577 = vsel %vm1389, %v1312, 0
      %v1580 = vsel %vm1389, %v1313, 0
      %v1583 = vsel %vm1389, %v1314, 0
      %v1586 = vsel %vm1389, %v1315, 0
      %v1589 = vsel %vm1389, %v1316, 0
      %v1592 = vsel %vm1389, %v1317, 0
      %v1595 = vsel %vm1389, %v1318, 0
      %v1598 = vsel %vm1389, %v1319, 0
      %v1601 = vsel %vm1389, %v1320, 0
      %v1604 = vsel %vm1389, %v1321, 0
      %v1607 = vsel %vm1389, %v1322, 0
      %v1610 = vsel %vm1389, %v1323, 0
      %v1613 = vsel %vm1389, %v1324, 0
      %v1616 = vsel %vm1389, %v1325, 0
      %v1619 = vsel %vm1389, %v1326, 0
      %v1622 = vsel %vm1389, %v1327, 0
      %v1625 = vsel %vm1389, %v1328, 0
      %v1628 = vsel %vm1389, %v1329, 0
      %v1631 = vsel %vm1389, %v1330, 0
      %v1634 = vsel %vm1389, %v1331, 0
      %v1637 = vsel %vm1389, %v1332, 0
      %v1640 = vsel %vm1389, %v1333, 0
      %v1643 = vsel %vm1389, %v1334, 0
      %v1646 = vsel %vm1389, %v1335, 0
      %v1649 = vsel %vm1389, %v1336, 0
      %v1652 = vsel %vm1389, %v1337, 0
      %v1655 = vsel %vm1389, %v1338, 0
      %v1658 = vsel %vm1389, %v1339, 0
      %v1661 = vsel %vm1389, %v1340, 0
      %v1664 = vsel %vm1389, %v1341, 0
      %v1667 = vsel %vm1389, %v1342, 0
      %v1670 = vsel %vm1389, %v1343, 0
      %v1673 = vsel %vm1389, %v1344, 0
      %v1676 = vsel %vm1389, %v1345, 0
      %v1679 = vsel %vm1389, %v1346, 0
      %v1682 = vsel %vm1389, %v1347, 0
      %v1685 = vsel %vm1389, %v1348, 0
      %v1688 = vsel %vm1389, %v1349, 0
      %v1691 = vsel %vm1389, %v1350, 0
      %v1694 = vsel %vm1389, %v1351, 0
      %v1697 = vsel %vm1389, %v1352, 0
      %v1700 = vsel %vm1389, %v1353, 0
      %v1703 = vsel %vm1389, %v1354, 0
      %v1706 = vsel %vm1389, %v1355, 0
      %v1709 = vsel %vm1389, %v1356, 0
      %v1712 = vsel %vm1389, %v1357, 0
      %v1715 = vsel %vm1389, %v1358, 0
      %v1718 = vsel %vm1389, %v1359, 0
      %v1721 = vsel %vm1389, %v1360, 0
      %v1724 = vsel %vm1389, %v1361, 0
      %v1727 = vsel %vm1389, %v1362, 0
      %v1730 = vsel %vm1389, %v1363, 0
      %v1733 = vsel %vm1389, %v1364, 0
      %v1736 = vsel %vm1389, %v1365, 0
      %v1739 = vsel %vm1389, %v1366, 0
      %v1742 = vsel %vm1389, %v1367, 0
      %v1745 = vsel %vm1389, %v1368, 0
      %v1748 = vsel %vm1389, %v1369, 0
      %v1751 = vsel %vm1389, %v1370, 0
      %v1754 = vsel %vm1389, %v1371, 0
      %v1757 = vsel %vm1389, %v1372, 0
      %v1760 = vsel %vm1389, %v1373, 0
      %v1763 = vsel %vm1389, %v1374, 0
      %v1766 = vsel %vm1389, %v1375, 0
      %v1769 = vsel %vm1389, %v1376, 0
      %v1772 = vsel %vm1389, %v1377, 0
      %vm1774 = vcmask 1044480
      %vm1775 = vcmask 1045504
      %v1776 = vsel %vm1774, 4294967295, 65535
      %v1777 = vsel %vm1775, %v1776, 0
      %v1779 = vand.u32 %v1387, %v1777
      %1781 = vmatpush.bf16.msra.mxu0 0
      %1782 = vmatpush.bf16.msra.mxu0 0
      %1783 = vmatpush.bf16.msra.mxu0 0
      %1784 = vmatpush.bf16.msra.mxu0 0
      %1785 = vmatpush.bf16.msra.mxu0 0
      %1786 = vmatpush.bf16.msra.mxu0 0
      %1787 = vmatpush.bf16.msra.mxu0 %v1779
      %1788 = vmatpush.bf16.msra.mxu0 %v1386
      %1789 = vmatmul.bf16.gmra.mxu0 %v1391
      %v1790 = vpop.f32.mrf.mxu0
      %v1791 = vadd.f32 0.0, %v1790
      %v1792 = vpop.f32.mrf.mxu0
      %v1793 = vadd.f32 0.0, %v1792
      %1794 = vmatmul.bf16.gmra.mxu0 %v1394
      %v1795 = vpop.f32.mrf.mxu0
      %v1796 = vadd.f32 0.0, %v1795
      %v1797 = vpop.f32.mrf.mxu0
      %v1798 = vadd.f32 0.0, %v1797
      %1799 = vmatmul.bf16.gmra.mxu0 %v1397
      %v1800 = vpop.f32.mrf.mxu0
      %v1801 = vadd.f32 0.0, %v1800
      %v1802 = vpop.f32.mrf.mxu0
      %v1803 = vadd.f32 0.0, %v1802
      %1804 = vmatmul.bf16.gmra.mxu0 %v1400
      %v1805 = vpop.f32.mrf.mxu0
      %v1806 = vadd.f32 0.0, %v1805
      %v1807 = vpop.f32.mrf.mxu0
      %v1808 = vadd.f32 0.0, %v1807
      %1809 = vmatmul.bf16.gmra.mxu0 %v1403
      %v1810 = vpop.f32.mrf.mxu0
      %v1811 = vadd.f32 0.0, %v1810
      %v1812 = vpop.f32.mrf.mxu0
      %v1813 = vadd.f32 0.0, %v1812
      %1814 = vmatmul.bf16.gmra.mxu0 %v1406
      %v1815 = vpop.f32.mrf.mxu0
      %v1816 = vadd.f32 0.0, %v1815
      %v1817 = vpop.f32.mrf.mxu0
      %v1818 = vadd.f32 0.0, %v1817
      %1819 = vmatmul.bf16.gmra.mxu0 %v1409
      %v1820 = vpop.f32.mrf.mxu0
      %v1821 = vadd.f32 0.0, %v1820
      %v1822 = vpop.f32.mrf.mxu0
      %v1823 = vadd.f32 0.0, %v1822
      %1824 = vmatmul.bf16.gmra.mxu0 %v1412
      %v1825 = vpop.f32.mrf.mxu0
      %v1826 = vadd.f32 0.0, %v1825
      %v1827 = vpop.f32.mrf.mxu0
      %v1828 = vadd.f32 0.0, %v1827
      %1829 = vmatmul.bf16.gmra.mxu0 %v1415
      %v1830 = vpop.f32.mrf.mxu0
      %v1831 = vadd.f32 0.0, %v1830
      %v1832 = vpop.f32.mrf.mxu0
      %v1833 = vadd.f32 0.0, %v1832
      %1834 = vmatmul.bf16.gmra.mxu0 %v1418
      %v1835 = vpop.f32.mrf.mxu0
      %v1836 = vadd.f32 0.0, %v1835
      %v1837 = vpop.f32.mrf.mxu0
      %v1838 = vadd.f32 0.0, %v1837
      %1839 = vmatmul.bf16.gmra.mxu0 %v1421
      %v1840 = vpop.f32.mrf.mxu0
      %v1841 = vadd.f32 0.0, %v1840
      %v1842 = vpop.f32.mrf.mxu0
      %v1843 = vadd.f32 0.0, %v1842
      %1844 = vmatmul.bf16.gmra.mxu0 %v1424
      %v1845 = vpop.f32.mrf.mxu0
      %v1846 = vadd.f32 0.0, %v1845
      %v1847 = vpop.f32.mrf.mxu0
      %v1848 = vadd.f32 0.0, %v1847
      %1849 = vmatmul.bf16.gmra.mxu0 %v1427
      %v1850 = vpop.f32.mrf.mxu0
      %v1851 = vadd.f32 0.0, %v1850
      %v1852 = vpop.f32.mrf.mxu0
      %v1853 = vadd.f32 0.0, %v1852
      %1854 = vmatmul.bf16.gmra.mxu0 %v1430
      %v1855 = vpop.f32.mrf.mxu0
      %v1856 = vadd.f32 0.0, %v1855
      %v1857 = vpop.f32.mrf.mxu0
      %v1858 = vadd.f32 0.0, %v1857
      %1859 = vmatmul.bf16.gmra.mxu0 %v1433
      %v1860 = vpop.f32.mrf.mxu0
      %v1861 = vadd.f32 0.0, %v1860
      %v1862 = vpop.f32.mrf.mxu0
      %v1863 = vadd.f32 0.0, %v1862
      %1864 = vmatmul.bf16.gmra.mxu0 %v1436
      %v1865 = vpop.f32.mrf.mxu0
      %v1866 = vadd.f32 0.0, %v1865
      %v1867 = vpop.f32.mrf.mxu0
      %v1868 = vadd.f32 0.0, %v1867
      %1869 = vmatmul.bf16.gmra.mxu0 %v1439
      %v1870 = vpop.f32.mrf.mxu0
      %v1871 = vadd.f32 0.0, %v1870
      %v1872 = vpop.f32.mrf.mxu0
      %v1873 = vadd.f32 0.0, %v1872
      %1874 = vmatmul.bf16.gmra.mxu0 %v1442
      %v1875 = vpop.f32.mrf.mxu0
      %v1876 = vadd.f32 0.0, %v1875
      %v1877 = vpop.f32.mrf.mxu0
      %v1878 = vadd.f32 0.0, %v1877
      %1879 = vmatmul.bf16.gmra.mxu0 %v1445
      %v1880 = vpop.f32.mrf.mxu0
      %v1881 = vadd.f32 0.0, %v1880
      %v1882 = vpop.f32.mrf.mxu0
      %v1883 = vadd.f32 0.0, %v1882
      %1884 = vmatmul.bf16.gmra.mxu0 %v1448
      %v1885 = vpop.f32.mrf.mxu0
      %v1886 = vadd.f32 0.0, %v1885
      %v1887 = vpop.f32.mrf.mxu0
      %v1888 = vadd.f32 0.0, %v1887
      %1889 = vmatmul.bf16.gmra.mxu0 %v1451
      %v1890 = vpop.f32.mrf.mxu0
      %v1891 = vadd.f32 0.0, %v1890
      %v1892 = vpop.f32.mrf.mxu0
      %v1893 = vadd.f32 0.0, %v1892
      %1894 = vmatmul.bf16.gmra.mxu0 %v1454
      %v1895 = vpop.f32.mrf.mxu0
      %v1896 = vadd.f32 0.0, %v1895
      %v1897 = vpop.f32.mrf.mxu0
      %v1898 = vadd.f32 0.0, %v1897
      %1899 = vmatmul.bf16.gmra.mxu0 %v1457
      %v1900 = vpop.f32.mrf.mxu0
      %v1901 = vadd.f32 0.0, %v1900
      %v1902 = vpop.f32.mrf.mxu0
      %v1903 = vadd.f32 0.0, %v1902
      %1904 = vmatmul.bf16.gmra.mxu0 %v1460
      %v1905 = vpop.f32.mrf.mxu0
      %v1906 = vadd.f32 0.0, %v1905
      %v1907 = vpop.f32.mrf.mxu0
      %v1908 = vadd.f32 0.0, %v1907
      %1909 = vmatmul.bf16.gmra.mxu0 %v1463
      %v1910 = vpop.f32.mrf.mxu0
      %v1911 = vadd.f32 0.0, %v1910
      %v1912 = vpop.f32.mrf.mxu0
      %v1913 = vadd.f32 0.0, %v1912
      %1914 = vmatmul.bf16.gmra.mxu0 %v1466
      %v1915 = vpop.f32.mrf.mxu0
      %v1916 = vadd.f32 0.0, %v1915
      %v1917 = vpop.f32.mrf.mxu0
      %v1918 = vadd.f32 0.0, %v1917
      %1919 = vmatmul.bf16.gmra.mxu0 %v1469
      %v1920 = vpop.f32.mrf.mxu0
      %v1921 = vadd.f32 0.0, %v1920
      %v1922 = vpop.f32.mrf.mxu0
      %v1923 = vadd.f32 0.0, %v1922
      %1924 = vmatmul.bf16.gmra.mxu0 %v1472
      %v1925 = vpop.f32.mrf.mxu0
      %v1926 = vadd.f32 0.0, %v1925
      %v1927 = vpop.f32.mrf.mxu0
      %v1928 = vadd.f32 0.0, %v1927
      %1929 = vmatmul.bf16.gmra.mxu0 %v1475
      %v1930 = vpop.f32.mrf.mxu0
      %v1931 = vadd.f32 0.0, %v1930
      %v1932 = vpop.f32.mrf.mxu0
      %v1933 = vadd.f32 0.0, %v1932
      %1934 = vmatmul.bf16.gmra.mxu0 %v1478
      %v1935 = vpop.f32.mrf.mxu0
      %v1936 = vadd.f32 0.0, %v1935
      %v1937 = vpop.f32.mrf.mxu0
      %v1938 = vadd.f32 0.0, %v1937
      %1939 = vmatmul.bf16.gmra.mxu0 %v1481
      %v1940 = vpop.f32.mrf.mxu0
      %v1941 = vadd.f32 0.0, %v1940
      %v1942 = vpop.f32.mrf.mxu0
      %v1943 = vadd.f32 0.0, %v1942
      %1944 = vmatmul.bf16.gmra.mxu0 %v1484
      %v1945 = vpop.f32.mrf.mxu0
      %v1946 = vadd.f32 0.0, %v1945
      %v1947 = vpop.f32.mrf.mxu0
      %v1948 = vadd.f32 0.0, %v1947
      %1949 = vmatmul.bf16.gmra.mxu0 %v1487
      %v1950 = vpop.f32.mrf.mxu0
      %v1951 = vadd.f32 0.0, %v1950
      %v1952 = vpop.f32.mrf.mxu0
      %v1953 = vadd.f32 0.0, %v1952
      %1954 = vmatmul.bf16.gmra.mxu0 %v1490
      %v1955 = vpop.f32.mrf.mxu0
      %v1956 = vadd.f32 0.0, %v1955
      %v1957 = vpop.f32.mrf.mxu0
      %v1958 = vadd.f32 0.0, %v1957
      %1959 = vmatmul.bf16.gmra.mxu0 %v1493
      %v1960 = vpop.f32.mrf.mxu0
      %v1961 = vadd.f32 0.0, %v1960
      %v1962 = vpop.f32.mrf.mxu0
      %v1963 = vadd.f32 0.0, %v1962
      %1964 = vmatmul.bf16.gmra.mxu0 %v1496
      %v1965 = vpop.f32.mrf.mxu0
      %v1966 = vadd.f32 0.0, %v1965
      %v1967 = vpop.f32.mrf.mxu0
      %v1968 = vadd.f32 0.0, %v1967
      %1969 = vmatmul.bf16.gmra.mxu0 %v1499
      %v1970 = vpop.f32.mrf.mxu0
      %v1971 = vadd.f32 0.0, %v1970
      %v1972 = vpop.f32.mrf.mxu0
      %v1973 = vadd.f32 0.0, %v1972
      %1974 = vmatmul.bf16.gmra.mxu0 %v1502
      %v1975 = vpop.f32.mrf.mxu0
      %v1976 = vadd.f32 0.0, %v1975
      %v1977 = vpop.f32.mrf.mxu0
      %v1978 = vadd.f32 0.0, %v1977
      %1979 = vmatmul.bf16.gmra.mxu0 %v1505
      %v1980 = vpop.f32.mrf.mxu0
      %v1981 = vadd.f32 0.0, %v1980
      %v1982 = vpop.f32.mrf.mxu0
      %v1983 = vadd.f32 0.0, %v1982
      %1984 = vmatmul.bf16.gmra.mxu0 %v1508
      %v1985 = vpop.f32.mrf.mxu0
      %v1986 = vadd.f32 0.0, %v1985
      %v1987 = vpop.f32.mrf.mxu0
      %v1988 = vadd.f32 0.0, %v1987
      %1989 = vmatmul.bf16.gmra.mxu0 %v1511
      %v1990 = vpop.f32.mrf.mxu0
      %v1991 = vadd.f32 0.0, %v1990
      %v1992 = vpop.f32.mrf.mxu0
      %v1993 = vadd.f32 0.0, %v1992
      %1994 = vmatmul.bf16.gmra.mxu0 %v1514
      %v1995 = vpop.f32.mrf.mxu0
      %v1996 = vadd.f32 0.0, %v1995
      %v1997 = vpop.f32.mrf.mxu0
      %v1998 = vadd.f32 0.0, %v1997
      %1999 = vmatmul.bf16.gmra.mxu0 %v1517
      %v2000 = vpop.f32.mrf.mxu0
      %v2001 = vadd.f32 0.0, %v2000
      %v2002 = vpop.f32.mrf.mxu0
      %v2003 = vadd.f32 0.0, %v2002
      %2004 = vmatmul.bf16.gmra.mxu0 %v1520
      %v2005 = vpop.f32.mrf.mxu0
      %v2006 = vadd.f32 0.0, %v2005
      %v2007 = vpop.f32.mrf.mxu0
      %v2008 = vadd.f32 0.0, %v2007
      %2009 = vmatmul.bf16.gmra.mxu0 %v1523
      %v2010 = vpop.f32.mrf.mxu0
      %v2011 = vadd.f32 0.0, %v2010
      %v2012 = vpop.f32.mrf.mxu0
      %v2013 = vadd.f32 0.0, %v2012
      %2014 = vmatmul.bf16.gmra.mxu0 %v1526
      %v2015 = vpop.f32.mrf.mxu0
      %v2016 = vadd.f32 0.0, %v2015
      %v2017 = vpop.f32.mrf.mxu0
      %v2018 = vadd.f32 0.0, %v2017
      %2019 = vmatmul.bf16.gmra.mxu0 %v1529
      %v2020 = vpop.f32.mrf.mxu0
      %v2021 = vadd.f32 0.0, %v2020
      %v2022 = vpop.f32.mrf.mxu0
      %v2023 = vadd.f32 0.0, %v2022
      %2024 = vmatmul.bf16.gmra.mxu0 %v1532
      %v2025 = vpop.f32.mrf.mxu0
      %v2026 = vadd.f32 0.0, %v2025
      %v2027 = vpop.f32.mrf.mxu0
      %v2028 = vadd.f32 0.0, %v2027
      %2029 = vmatmul.bf16.gmra.mxu0 %v1535
      %v2030 = vpop.f32.mrf.mxu0
      %v2031 = vadd.f32 0.0, %v2030
      %v2032 = vpop.f32.mrf.mxu0
      %v2033 = vadd.f32 0.0, %v2032
      %2034 = vmatmul.bf16.gmra.mxu0 %v1538
      %v2035 = vpop.f32.mrf.mxu0
      %v2036 = vadd.f32 0.0, %v2035
      %v2037 = vpop.f32.mrf.mxu0
      %v2038 = vadd.f32 0.0, %v2037
      %2039 = vmatmul.bf16.gmra.mxu0 %v1541
      %v2040 = vpop.f32.mrf.mxu0
      %v2041 = vadd.f32 0.0, %v2040
      %v2042 = vpop.f32.mrf.mxu0
      %v2043 = vadd.f32 0.0, %v2042
      %2044 = vmatmul.bf16.gmra.mxu0 %v1544
      %v2045 = vpop.f32.mrf.mxu0
      %v2046 = vadd.f32 0.0, %v2045
      %v2047 = vpop.f32.mrf.mxu0
      %v2048 = vadd.f32 0.0, %v2047
      %2049 = vmatmul.bf16.gmra.mxu0 %v1547
      %v2050 = vpop.f32.mrf.mxu0
      %v2051 = vadd.f32 0.0, %v2050
      %v2052 = vpop.f32.mrf.mxu0
      %v2053 = vadd.f32 0.0, %v2052
      %2054 = vmatmul.bf16.gmra.mxu0 %v1550
      %v2055 = vpop.f32.mrf.mxu0
      %v2056 = vadd.f32 0.0, %v2055
      %v2057 = vpop.f32.mrf.mxu0
      %v2058 = vadd.f32 0.0, %v2057
      %2059 = vmatmul.bf16.gmra.mxu0 %v1553
      %v2060 = vpop.f32.mrf.mxu0
      %v2061 = vadd.f32 0.0, %v2060
      %v2062 = vpop.f32.mrf.mxu0
      %v2063 = vadd.f32 0.0, %v2062
      %2064 = vmatmul.bf16.gmra.mxu0 %v1556
      %v2065 = vpop.f32.mrf.mxu0
      %v2066 = vadd.f32 0.0, %v2065
      %v2067 = vpop.f32.mrf.mxu0
      %v2068 = vadd.f32 0.0, %v2067
      %2069 = vmatmul.bf16.gmra.mxu0 %v1559
      %v2070 = vpop.f32.mrf.mxu0
      %v2071 = vadd.f32 0.0, %v2070
      %v2072 = vpop.f32.mrf.mxu0
      %v2073 = vadd.f32 0.0, %v2072
      %2074 = vmatmul.bf16.gmra.mxu0 %v1562
      %v2075 = vpop.f32.mrf.mxu0
      %v2076 = vadd.f32 0.0, %v2075
      %v2077 = vpop.f32.mrf.mxu0
      %v2078 = vadd.f32 0.0, %v2077
      %2079 = vmatmul.bf16.gmra.mxu0 %v1565
      %v2080 = vpop.f32.mrf.mxu0
      %v2081 = vadd.f32 0.0, %v2080
      %v2082 = vpop.f32.mrf.mxu0
      %v2083 = vadd.f32 0.0, %v2082
      %2084 = vmatmul.bf16.gmra.mxu0 %v1568
      %v2085 = vpop.f32.mrf.mxu0
      %v2086 = vadd.f32 0.0, %v2085
      %v2087 = vpop.f32.mrf.mxu0
      %v2088 = vadd.f32 0.0, %v2087
      %2089 = vmatmul.bf16.gmra.mxu0 %v1571
      %v2090 = vpop.f32.mrf.mxu0
      %v2091 = vadd.f32 0.0, %v2090
      %v2092 = vpop.f32.mrf.mxu0
      %v2093 = vadd.f32 0.0, %v2092
      %2094 = vmatmul.bf16.gmra.mxu0 %v1574
      %v2095 = vpop.f32.mrf.mxu0
      %v2096 = vadd.f32 0.0, %v2095
      %v2097 = vpop.f32.mrf.mxu0
      %v2098 = vadd.f32 0.0, %v2097
      %2099 = vmatmul.bf16.gmra.mxu0 %v1577
      %v2100 = vpop.f32.mrf.mxu0
      %v2101 = vadd.f32 0.0, %v2100
      %v2102 = vpop.f32.mrf.mxu0
      %v2103 = vadd.f32 0.0, %v2102
      %2104 = vmatmul.bf16.gmra.mxu0 %v1580
      %v2105 = vpop.f32.mrf.mxu0
      %v2106 = vadd.f32 0.0, %v2105
      %v2107 = vpop.f32.mrf.mxu0
      %v2108 = vadd.f32 0.0, %v2107
      %2109 = vmatmul.bf16.gmra.mxu0 %v1583
      %v2110 = vpop.f32.mrf.mxu0
      %v2111 = vadd.f32 0.0, %v2110
      %v2112 = vpop.f32.mrf.mxu0
      %v2113 = vadd.f32 0.0, %v2112
      %2114 = vmatmul.bf16.gmra.mxu0 %v1586
      %v2115 = vpop.f32.mrf.mxu0
      %v2116 = vadd.f32 0.0, %v2115
      %v2117 = vpop.f32.mrf.mxu0
      %v2118 = vadd.f32 0.0, %v2117
      %2119 = vmatmul.bf16.gmra.mxu0 %v1589
      %v2120 = vpop.f32.mrf.mxu0
      %v2121 = vadd.f32 0.0, %v2120
      %v2122 = vpop.f32.mrf.mxu0
      %v2123 = vadd.f32 0.0, %v2122
      %2124 = vmatmul.bf16.gmra.mxu0 %v1592
      %v2125 = vpop.f32.mrf.mxu0
      %v2126 = vadd.f32 0.0, %v2125
      %v2127 = vpop.f32.mrf.mxu0
      %v2128 = vadd.f32 0.0, %v2127
      %2129 = vmatmul.bf16.gmra.mxu0 %v1595
      %v2130 = vpop.f32.mrf.mxu0
      %v2131 = vadd.f32 0.0, %v2130
      %v2132 = vpop.f32.mrf.mxu0
      %v2133 = vadd.f32 0.0, %v2132
      %2134 = vmatmul.bf16.gmra.mxu0 %v1598
      %v2135 = vpop.f32.mrf.mxu0
      %v2136 = vadd.f32 0.0, %v2135
      %v2137 = vpop.f32.mrf.mxu0
      %v2138 = vadd.f32 0.0, %v2137
      %2139 = vmatmul.bf16.gmra.mxu0 %v1601
      %v2140 = vpop.f32.mrf.mxu0
      %v2141 = vadd.f32 0.0, %v2140
      %v2142 = vpop.f32.mrf.mxu0
      %v2143 = vadd.f32 0.0, %v2142
      %2144 = vmatmul.bf16.gmra.mxu0 %v1604
      %v2145 = vpop.f32.mrf.mxu0
      %v2146 = vadd.f32 0.0, %v2145
      %v2147 = vpop.f32.mrf.mxu0
      %v2148 = vadd.f32 0.0, %v2147
      %2149 = vmatmul.bf16.gmra.mxu0 %v1607
      %v2150 = vpop.f32.mrf.mxu0
      %v2151 = vadd.f32 0.0, %v2150
      %v2152 = vpop.f32.mrf.mxu0
      %v2153 = vadd.f32 0.0, %v2152
      %2154 = vmatmul.bf16.gmra.mxu0 %v1610
      %v2155 = vpop.f32.mrf.mxu0
      %v2156 = vadd.f32 0.0, %v2155
      %v2157 = vpop.f32.mrf.mxu0
      %v2158 = vadd.f32 0.0, %v2157
      %2159 = vmatmul.bf16.gmra.mxu0 %v1613
      %v2160 = vpop.f32.mrf.mxu0
      %v2161 = vadd.f32 0.0, %v2160
      %v2162 = vpop.f32.mrf.mxu0
      %v2163 = vadd.f32 0.0, %v2162
      %2164 = vmatmul.bf16.gmra.mxu0 %v1616
      %v2165 = vpop.f32.mrf.mxu0
      %v2166 = vadd.f32 0.0, %v2165
      %v2167 = vpop.f32.mrf.mxu0
      %v2168 = vadd.f32 0.0, %v2167
      %2169 = vmatmul.bf16.gmra.mxu0 %v1619
      %v2170 = vpop.f32.mrf.mxu0
      %v2171 = vadd.f32 0.0, %v2170
      %v2172 = vpop.f32.mrf.mxu0
      %v2173 = vadd.f32 0.0, %v2172
      %2174 = vmatmul.bf16.gmra.mxu0 %v1622
      %v2175 = vpop.f32.mrf.mxu0
      %v2176 = vadd.f32 0.0, %v2175
      %v2177 = vpop.f32.mrf.mxu0
      %v2178 = vadd.f32 0.0, %v2177
      %2179 = vmatmul.bf16.gmra.mxu0 %v1625
      %v2180 = vpop.f32.mrf.mxu0
      %v2181 = vadd.f32 0.0, %v2180
      %v2182 = vpop.f32.mrf.mxu0
      %v2183 = vadd.f32 0.0, %v2182
      %2184 = vmatmul.bf16.gmra.mxu0 %v1628
      %v2185 = vpop.f32.mrf.mxu0
      %v2186 = vadd.f32 0.0, %v2185
      %v2187 = vpop.f32.mrf.mxu0
      %v2188 = vadd.f32 0.0, %v2187
      %2189 = vmatmul.bf16.gmra.mxu0 %v1631
      %v2190 = vpop.f32.mrf.mxu0
      %v2191 = vadd.f32 0.0, %v2190
      %v2192 = vpop.f32.mrf.mxu0
      %v2193 = vadd.f32 0.0, %v2192
      %2194 = vmatmul.bf16.gmra.mxu0 %v1634
      %v2195 = vpop.f32.mrf.mxu0
      %v2196 = vadd.f32 0.0, %v2195
      %v2197 = vpop.f32.mrf.mxu0
      %v2198 = vadd.f32 0.0, %v2197
      %2199 = vmatmul.bf16.gmra.mxu0 %v1637
      %v2200 = vpop.f32.mrf.mxu0
      %v2201 = vadd.f32 0.0, %v2200
      %v2202 = vpop.f32.mrf.mxu0
      %v2203 = vadd.f32 0.0, %v2202
      %2204 = vmatmul.bf16.gmra.mxu0 %v1640
      %v2205 = vpop.f32.mrf.mxu0
      %v2206 = vadd.f32 0.0, %v2205
      %v2207 = vpop.f32.mrf.mxu0
      %v2208 = vadd.f32 0.0, %v2207
      %2209 = vmatmul.bf16.gmra.mxu0 %v1643
      %v2210 = vpop.f32.mrf.mxu0
      %v2211 = vadd.f32 0.0, %v2210
      %v2212 = vpop.f32.mrf.mxu0
      %v2213 = vadd.f32 0.0, %v2212
      %2214 = vmatmul.bf16.gmra.mxu0 %v1646
      %v2215 = vpop.f32.mrf.mxu0
      %v2216 = vadd.f32 0.0, %v2215
      %v2217 = vpop.f32.mrf.mxu0
      %v2218 = vadd.f32 0.0, %v2217
      %2219 = vmatmul.bf16.gmra.mxu0 %v1649
      %v2220 = vpop.f32.mrf.mxu0
      %v2221 = vadd.f32 0.0, %v2220
      %v2222 = vpop.f32.mrf.mxu0
      %v2223 = vadd.f32 0.0, %v2222
      %2224 = vmatmul.bf16.gmra.mxu0 %v1652
      %v2225 = vpop.f32.mrf.mxu0
      %v2226 = vadd.f32 0.0, %v2225
      %v2227 = vpop.f32.mrf.mxu0
      %v2228 = vadd.f32 0.0, %v2227
      %2229 = vmatmul.bf16.gmra.mxu0 %v1655
      %v2230 = vpop.f32.mrf.mxu0
      %v2231 = vadd.f32 0.0, %v2230
      %v2232 = vpop.f32.mrf.mxu0
      %v2233 = vadd.f32 0.0, %v2232
      %2234 = vmatmul.bf16.gmra.mxu0 %v1658
      %v2235 = vpop.f32.mrf.mxu0
      %v2236 = vadd.f32 0.0, %v2235
      %v2237 = vpop.f32.mrf.mxu0
      %v2238 = vadd.f32 0.0, %v2237
      %2239 = vmatmul.bf16.gmra.mxu0 %v1661
      %v2240 = vpop.f32.mrf.mxu0
      %v2241 = vadd.f32 0.0, %v2240
      %v2242 = vpop.f32.mrf.mxu0
      %v2243 = vadd.f32 0.0, %v2242
      %2244 = vmatmul.bf16.gmra.mxu0 %v1664
      %v2245 = vpop.f32.mrf.mxu0
      %v2246 = vadd.f32 0.0, %v2245
      %v2247 = vpop.f32.mrf.mxu0
      %v2248 = vadd.f32 0.0, %v2247
      %2249 = vmatmul.bf16.gmra.mxu0 %v1667
      %v2250 = vpop.f32.mrf.mxu0
      %v2251 = vadd.f32 0.0, %v2250
      %v2252 = vpop.f32.mrf.mxu0
      %v2253 = vadd.f32 0.0, %v2252
      %2254 = vmatmul.bf16.gmra.mxu0 %v1670
      %v2255 = vpop.f32.mrf.mxu0
      %v2256 = vadd.f32 0.0, %v2255
      %v2257 = vpop.f32.mrf.mxu0
      %v2258 = vadd.f32 0.0, %v2257
      %2259 = vmatmul.bf16.gmra.mxu0 %v1673
      %v2260 = vpop.f32.mrf.mxu0
      %v2261 = vadd.f32 0.0, %v2260
      %v2262 = vpop.f32.mrf.mxu0
      %v2263 = vadd.f32 0.0, %v2262
      %2264 = vmatmul.bf16.gmra.mxu0 %v1676
      %v2265 = vpop.f32.mrf.mxu0
      %v2266 = vadd.f32 0.0, %v2265
      %v2267 = vpop.f32.mrf.mxu0
      %v2268 = vadd.f32 0.0, %v2267
      %2269 = vmatmul.bf16.gmra.mxu0 %v1679
      %v2270 = vpop.f32.mrf.mxu0
      %v2271 = vadd.f32 0.0, %v2270
      %v2272 = vpop.f32.mrf.mxu0
      %v2273 = vadd.f32 0.0, %v2272
      %2274 = vmatmul.bf16.gmra.mxu0 %v1682
      %v2275 = vpop.f32.mrf.mxu0
      %v2276 = vadd.f32 0.0, %v2275
      %v2277 = vpop.f32.mrf.mxu0
      %v2278 = vadd.f32 0.0, %v2277
      %2279 = vmatmul.bf16.gmra.mxu0 %v1685
      %v2280 = vpop.f32.mrf.mxu0
      %v2281 = vadd.f32 0.0, %v2280
      %v2282 = vpop.f32.mrf.mxu0
      %v2283 = vadd.f32 0.0, %v2282
      %2284 = vmatmul.bf16.gmra.mxu0 %v1688
      %v2285 = vpop.f32.mrf.mxu0
      %v2286 = vadd.f32 0.0, %v2285
      %v2287 = vpop.f32.mrf.mxu0
      %v2288 = vadd.f32 0.0, %v2287
      %2289 = vmatmul.bf16.gmra.mxu0 %v1691
      %v2290 = vpop.f32.mrf.mxu0
      %v2291 = vadd.f32 0.0, %v2290
      %v2292 = vpop.f32.mrf.mxu0
      %v2293 = vadd.f32 0.0, %v2292
      %2294 = vmatmul.bf16.gmra.mxu0 %v1694
      %v2295 = vpop.f32.mrf.mxu0
      %v2296 = vadd.f32 0.0, %v2295
      %v2297 = vpop.f32.mrf.mxu0
      %v2298 = vadd.f32 0.0, %v2297
      %2299 = vmatmul.bf16.gmra.mxu0 %v1697
      %v2300 = vpop.f32.mrf.mxu0
      %v2301 = vadd.f32 0.0, %v2300
      %v2302 = vpop.f32.mrf.mxu0
      %v2303 = vadd.f32 0.0, %v2302
      %2304 = vmatmul.bf16.gmra.mxu0 %v1700
      %v2305 = vpop.f32.mrf.mxu0
      %v2306 = vadd.f32 0.0, %v2305
      %v2307 = vpop.f32.mrf.mxu0
      %v2308 = vadd.f32 0.0, %v2307
      %2309 = vmatmul.bf16.gmra.mxu0 %v1703
      %v2310 = vpop.f32.mrf.mxu0
      %v2311 = vadd.f32 0.0, %v2310
      %v2312 = vpop.f32.mrf.mxu0
      %v2313 = vadd.f32 0.0, %v2312
      %2314 = vmatmul.bf16.gmra.mxu0 %v1706
      %v2315 = vpop.f32.mrf.mxu0
      %v2316 = vadd.f32 0.0, %v2315
      %v2317 = vpop.f32.mrf.mxu0
      %v2318 = vadd.f32 0.0, %v2317
      %2319 = vmatmul.bf16.gmra.mxu0 %v1709
      %v2320 = vpop.f32.mrf.mxu0
      %v2321 = vadd.f32 0.0, %v2320
      %v2322 = vpop.f32.mrf.mxu0
      %v2323 = vadd.f32 0.0, %v2322
      %2324 = vmatmul.bf16.gmra.mxu0 %v1712
      %v2325 = vpop.f32.mrf.mxu0
      %v2326 = vadd.f32 0.0, %v2325
      %v2327 = vpop.f32.mrf.mxu0
      %v2328 = vadd.f32 0.0, %v2327
      %2329 = vmatmul.bf16.gmra.mxu0 %v1715
      %v2330 = vpop.f32.mrf.mxu0
      %v2331 = vadd.f32 0.0, %v2330
      %v2332 = vpop.f32.mrf.mxu0
      %v2333 = vadd.f32 0.0, %v2332
      %2334 = vmatmul.bf16.gmra.mxu0 %v1718
      %v2335 = vpop.f32.mrf.mxu0
      %v2336 = vadd.f32 0.0, %v2335
      %v2337 = vpop.f32.mrf.mxu0
      %v2338 = vadd.f32 0.0, %v2337
      %2339 = vmatmul.bf16.gmra.mxu0 %v1721
      %v2340 = vpop.f32.mrf.mxu0
      %v2341 = vadd.f32 0.0, %v2340
      %v2342 = vpop.f32.mrf.mxu0
      %v2343 = vadd.f32 0.0, %v2342
      %2344 = vmatmul.bf16.gmra.mxu0 %v1724
      %v2345 = vpop.f32.mrf.mxu0
      %v2346 = vadd.f32 0.0, %v2345
      %v2347 = vpop.f32.mrf.mxu0
      %v2348 = vadd.f32 0.0, %v2347
      %2349 = vmatmul.bf16.gmra.mxu0 %v1727
      %v2350 = vpop.f32.mrf.mxu0
      %v2351 = vadd.f32 0.0, %v2350
      %v2352 = vpop.f32.mrf.mxu0
      %v2353 = vadd.f32 0.0, %v2352
      %2354 = vmatmul.bf16.gmra.mxu0 %v1730
      %v2355 = vpop.f32.mrf.mxu0
      %v2356 = vadd.f32 0.0, %v2355
      %v2357 = vpop.f32.mrf.mxu0
      %v2358 = vadd.f32 0.0, %v2357
      %2359 = vmatmul.bf16.gmra.mxu0 %v1733
      %v2360 = vpop.f32.mrf.mxu0
      %v2361 = vadd.f32 0.0, %v2360
      %v2362 = vpop.f32.mrf.mxu0
      %v2363 = vadd.f32 0.0, %v2362
      %2364 = vmatmul.bf16.gmra.mxu0 %v1736
      %v2365 = vpop.f32.mrf.mxu0
      %v2366 = vadd.f32 0.0, %v2365
      %v2367 = vpop.f32.mrf.mxu0
      %v2368 = vadd.f32 0.0, %v2367
      %2369 = vmatmul.bf16.gmra.mxu0 %v1739
      %v2370 = vpop.f32.mrf.mxu0
      %v2371 = vadd.f32 0.0, %v2370
      %v2372 = vpop.f32.mrf.mxu0
      %v2373 = vadd.f32 0.0, %v2372
      %2374 = vmatmul.bf16.gmra.mxu0 %v1742
      %v2375 = vpop.f32.mrf.mxu0
      %v2376 = vadd.f32 0.0, %v2375
      %v2377 = vpop.f32.mrf.mxu0
      %v2378 = vadd.f32 0.0, %v2377
      %2379 = vmatmul.bf16.gmra.mxu0 %v1745
      %v2380 = vpop.f32.mrf.mxu0
      %v2381 = vadd.f32 0.0, %v2380
      %v2382 = vpop.f32.mrf.mxu0
      %v2383 = vadd.f32 0.0, %v2382
      %2384 = vmatmul.bf16.gmra.mxu0 %v1748
      %v2385 = vpop.f32.mrf.mxu0
      %v2386 = vadd.f32 0.0, %v2385
      %v2387 = vpop.f32.mrf.mxu0
      %v2388 = vadd.f32 0.0, %v2387
      %2389 = vmatmul.bf16.gmra.mxu0 %v1751
      %v2390 = vpop.f32.mrf.mxu0
      %v2391 = vadd.f32 0.0, %v2390
      %v2392 = vpop.f32.mrf.mxu0
      %v2393 = vadd.f32 0.0, %v2392
      %2394 = vmatmul.bf16.gmra.mxu0 %v1754
      %v2395 = vpop.f32.mrf.mxu0
      %v2396 = vadd.f32 0.0, %v2395
      %v2397 = vpop.f32.mrf.mxu0
      %v2398 = vadd.f32 0.0, %v2397
      %2399 = vmatmul.bf16.gmra.mxu0 %v1757
      %v2400 = vpop.f32.mrf.mxu0
      %v2401 = vadd.f32 0.0, %v2400
      %v2402 = vpop.f32.mrf.mxu0
      %v2403 = vadd.f32 0.0, %v2402
      %2404 = vmatmul.bf16.gmra.mxu0 %v1760
      %v2405 = vpop.f32.mrf.mxu0
      %v2406 = vadd.f32 0.0, %v2405
      %v2407 = vpop.f32.mrf.mxu0
      %v2408 = vadd.f32 0.0, %v2407
      %2409 = vmatmul.bf16.gmra.mxu0 %v1763
      %v2410 = vpop.f32.mrf.mxu0
      %v2411 = vadd.f32 0.0, %v2410
      %v2412 = vpop.f32.mrf.mxu0
      %v2413 = vadd.f32 0.0, %v2412
      %2414 = vmatmul.bf16.gmra.mxu0 %v1766
      %v2415 = vpop.f32.mrf.mxu0
      %v2416 = vadd.f32 0.0, %v2415
      %v2417 = vpop.f32.mrf.mxu0
      %v2418 = vadd.f32 0.0, %v2417
      %2419 = vmatmul.bf16.gmra.mxu0 %v1769
      %v2420 = vpop.f32.mrf.mxu0
      %v2421 = vadd.f32 0.0, %v2420
      %v2422 = vpop.f32.mrf.mxu0
      %v2423 = vadd.f32 0.0, %v2422
      %2424 = vmatmul.bf16.gmra.mxu0 %v1772
      %v2425 = vpop.f32.mrf.mxu0
      %v2426 = vadd.f32 0.0, %v2425
      %v2427 = vpop.f32.mrf.mxu0
      %v2428 = vadd.f32 0.0, %v2427
      %2429 = vdwg.mxu0
      %v2430 = vld [vmem:[%s2] sm:$0x1]
      %v2431 = vld [vmem:[%s3] sm:$0x1]
      %vm2432 = vcmask 261120
      %v2433 = vsel %vm2432, %v1791, 0.0
      %v2434 = vsel %vm2432, %v1793, 0.0
      %v2435 = vadd.f32 %v2433, %v2434
      %v2436 = vsel %vm2432, %v1796, 0.0
      %v2437 = vadd.f32 %v2435, %v2436
      %v2438 = vsel %vm2432, %v1798, 0.0
      %v2439 = vadd.f32 %v2437, %v2438
      %v2440 = vsel %vm2432, %v1801, 0.0
      %v2441 = vadd.f32 %v2439, %v2440
      %v2442 = vsel %vm2432, %v1803, 0.0
      %v2443 = vadd.f32 %v2441, %v2442
      %v2444 = vsel %vm2432, %v1806, 0.0
      %v2445 = vadd.f32 %v2443, %v2444
      %v2446 = vsel %vm2432, %v1808, 0.0
      %v2447 = vadd.f32 %v2445, %v2446
      %v2448 = vsel %vm2432, %v1811, 0.0
      %v2449 = vadd.f32 %v2447, %v2448
      %v2450 = vsel %vm2432, %v1813, 0.0
      %v2451 = vadd.f32 %v2449, %v2450
      %v2452 = vsel %vm2432, %v1816, 0.0
      %v2453 = vadd.f32 %v2451, %v2452
      %v2454 = vsel %vm2432, %v1818, 0.0
      %v2455 = vadd.f32 %v2453, %v2454
      %v2456 = vsel %vm2432, %v1821, 0.0
      %v2457 = vadd.f32 %v2455, %v2456
      %v2458 = vsel %vm2432, %v1823, 0.0
      %v2459 = vadd.f32 %v2457, %v2458
      %v2460 = vsel %vm2432, %v1826, 0.0
      %v2461 = vadd.f32 %v2459, %v2460
      %v2462 = vsel %vm2432, %v1828, 0.0
      %v2463 = vadd.f32 %v2461, %v2462
      %v2464 = vsel %vm2432, %v1831, 0.0
      %v2465 = vadd.f32 %v2463, %v2464
      %v2466 = vsel %vm2432, %v1833, 0.0
      %v2467 = vadd.f32 %v2465, %v2466
      %v2468 = vsel %vm2432, %v1836, 0.0
      %v2469 = vadd.f32 %v2467, %v2468
      %v2470 = vsel %vm2432, %v1838, 0.0
      %v2471 = vadd.f32 %v2469, %v2470
      %v2472 = vsel %vm2432, %v1841, 0.0
      %v2473 = vadd.f32 %v2471, %v2472
      %v2474 = vsel %vm2432, %v1843, 0.0
      %v2475 = vadd.f32 %v2473, %v2474
      %v2476 = vsel %vm2432, %v1846, 0.0
      %v2477 = vadd.f32 %v2475, %v2476
      %v2478 = vsel %vm2432, %v1848, 0.0
      %v2479 = vadd.f32 %v2477, %v2478
      %v2480 = vsel %vm2432, %v1851, 0.0
      %v2481 = vadd.f32 %v2479, %v2480
      %v2482 = vsel %vm2432, %v1853, 0.0
      %v2483 = vadd.f32 %v2481, %v2482
      %v2484 = vsel %vm2432, %v1856, 0.0
      %v2485 = vadd.f32 %v2483, %v2484
      %v2486 = vsel %vm2432, %v1858, 0.0
      %v2487 = vadd.f32 %v2485, %v2486
      %v2488 = vsel %vm2432, %v1861, 0.0
      %v2489 = vadd.f32 %v2487, %v2488
      %v2490 = vsel %vm2432, %v1863, 0.0
      %v2491 = vadd.f32 %v2489, %v2490
      %v2492 = vsel %vm2432, %v1866, 0.0
      %v2493 = vadd.f32 %v2491, %v2492
      %v2494 = vsel %vm2432, %v1868, 0.0
      %v2495 = vadd.f32 %v2493, %v2494
      %v2496 = vsel %vm2432, %v1871, 0.0
      %v2497 = vadd.f32 %v2495, %v2496
      %v2498 = vsel %vm2432, %v1873, 0.0
      %v2499 = vadd.f32 %v2497, %v2498
      %v2500 = vsel %vm2432, %v1876, 0.0
      %v2501 = vadd.f32 %v2499, %v2500
      %v2502 = vsel %vm2432, %v1878, 0.0
      %v2503 = vadd.f32 %v2501, %v2502
      %v2504 = vsel %vm2432, %v1881, 0.0
      %v2505 = vadd.f32 %v2503, %v2504
      %v2506 = vsel %vm2432, %v1883, 0.0
      %v2507 = vadd.f32 %v2505, %v2506
      %v2508 = vsel %vm2432, %v1886, 0.0
      %v2509 = vadd.f32 %v2507, %v2508
      %v2510 = vsel %vm2432, %v1888, 0.0
      %v2511 = vadd.f32 %v2509, %v2510
      %v2512 = vsel %vm2432, %v1891, 0.0
      %v2513 = vadd.f32 %v2511, %v2512
      %v2514 = vsel %vm2432, %v1893, 0.0
      %v2515 = vadd.f32 %v2513, %v2514
      %v2516 = vsel %vm2432, %v1896, 0.0
      %v2517 = vadd.f32 %v2515, %v2516
      %v2518 = vsel %vm2432, %v1898, 0.0
      %v2519 = vadd.f32 %v2517, %v2518
      %v2520 = vsel %vm2432, %v1901, 0.0
      %v2521 = vadd.f32 %v2519, %v2520
      %v2522 = vsel %vm2432, %v1903, 0.0
      %v2523 = vadd.f32 %v2521, %v2522
      %v2524 = vsel %vm2432, %v1906, 0.0
      %v2525 = vadd.f32 %v2523, %v2524
      %v2526 = vsel %vm2432, %v1908, 0.0
      %v2527 = vadd.f32 %v2525, %v2526
      %v2528 = vsel %vm2432, %v1911, 0.0
      %v2529 = vadd.f32 %v2527, %v2528
      %v2530 = vsel %vm2432, %v1913, 0.0
      %v2531 = vadd.f32 %v2529, %v2530
      %v2532 = vsel %vm2432, %v1916, 0.0
      %v2533 = vadd.f32 %v2531, %v2532
      %v2534 = vsel %vm2432, %v1918, 0.0
      %v2535 = vadd.f32 %v2533, %v2534
      %v2536 = vsel %vm2432, %v1921, 0.0
      %v2537 = vadd.f32 %v2535, %v2536
      %v2538 = vsel %vm2432, %v1923, 0.0
      %v2539 = vadd.f32 %v2537, %v2538
      %v2540 = vsel %vm2432, %v1926, 0.0
      %v2541 = vadd.f32 %v2539, %v2540
      %v2542 = vsel %vm2432, %v1928, 0.0
      %v2543 = vadd.f32 %v2541, %v2542
      %v2544 = vsel %vm2432, %v1931, 0.0
      %v2545 = vadd.f32 %v2543, %v2544
      %v2546 = vsel %vm2432, %v1933, 0.0
      %v2547 = vadd.f32 %v2545, %v2546
      %v2548 = vsel %vm2432, %v1936, 0.0
      %v2549 = vadd.f32 %v2547, %v2548
      %v2550 = vsel %vm2432, %v1938, 0.0
      %v2551 = vadd.f32 %v2549, %v2550
      %v2552 = vsel %vm2432, %v1941, 0.0
      %v2553 = vadd.f32 %v2551, %v2552
      %v2554 = vsel %vm2432, %v1943, 0.0
      %v2555 = vadd.f32 %v2553, %v2554
      %v2556 = vsel %vm2432, %v1946, 0.0
      %v2557 = vadd.f32 %v2555, %v2556
      %v2558 = vsel %vm2432, %v1948, 0.0
      %v2559 = vadd.f32 %v2557, %v2558
      %v2560 = vsel %vm2432, %v1951, 0.0
      %v2561 = vadd.f32 %v2559, %v2560
      %v2562 = vsel %vm2432, %v1953, 0.0
      %v2563 = vadd.f32 %v2561, %v2562
      %v2564 = vsel %vm2432, %v1956, 0.0
      %v2565 = vadd.f32 %v2563, %v2564
      %v2566 = vsel %vm2432, %v1958, 0.0
      %v2567 = vadd.f32 %v2565, %v2566
      %v2568 = vsel %vm2432, %v1961, 0.0
      %v2569 = vadd.f32 %v2567, %v2568
      %v2570 = vsel %vm2432, %v1963, 0.0
      %v2571 = vadd.f32 %v2569, %v2570
      %v2572 = vsel %vm2432, %v1966, 0.0
      %v2573 = vadd.f32 %v2571, %v2572
      %v2574 = vsel %vm2432, %v1968, 0.0
      %v2575 = vadd.f32 %v2573, %v2574
      %v2576 = vsel %vm2432, %v1971, 0.0
      %v2577 = vadd.f32 %v2575, %v2576
      %v2578 = vsel %vm2432, %v1973, 0.0
      %v2579 = vadd.f32 %v2577, %v2578
      %v2580 = vsel %vm2432, %v1976, 0.0
      %v2581 = vadd.f32 %v2579, %v2580
      %v2582 = vsel %vm2432, %v1978, 0.0
      %v2583 = vadd.f32 %v2581, %v2582
      %v2584 = vsel %vm2432, %v1981, 0.0
      %v2585 = vadd.f32 %v2583, %v2584
      %v2586 = vsel %vm2432, %v1983, 0.0
      %v2587 = vadd.f32 %v2585, %v2586
      %v2588 = vsel %vm2432, %v1986, 0.0
      %v2589 = vadd.f32 %v2587, %v2588
      %v2590 = vsel %vm2432, %v1988, 0.0
      %v2591 = vadd.f32 %v2589, %v2590
      %v2592 = vsel %vm2432, %v1991, 0.0
      %v2593 = vadd.f32 %v2591, %v2592
      %v2594 = vsel %vm2432, %v1993, 0.0
      %v2595 = vadd.f32 %v2593, %v2594
      %v2596 = vsel %vm2432, %v1996, 0.0
      %v2597 = vadd.f32 %v2595, %v2596
      %v2598 = vsel %vm2432, %v1998, 0.0
      %v2599 = vadd.f32 %v2597, %v2598
      %v2600 = vsel %vm2432, %v2001, 0.0
      %v2601 = vadd.f32 %v2599, %v2600
      %v2602 = vsel %vm2432, %v2003, 0.0
      %v2603 = vadd.f32 %v2601, %v2602
      %v2604 = vsel %vm2432, %v2006, 0.0
      %v2605 = vadd.f32 %v2603, %v2604
      %v2606 = vsel %vm2432, %v2008, 0.0
      %v2607 = vadd.f32 %v2605, %v2606
      %v2608 = vsel %vm2432, %v2011, 0.0
      %v2609 = vadd.f32 %v2607, %v2608
      %v2610 = vsel %vm2432, %v2013, 0.0
      %v2611 = vadd.f32 %v2609, %v2610
      %v2612 = vsel %vm2432, %v2016, 0.0
      %v2613 = vadd.f32 %v2611, %v2612
      %v2614 = vsel %vm2432, %v2018, 0.0
      %v2615 = vadd.f32 %v2613, %v2614
      %v2616 = vsel %vm2432, %v2021, 0.0
      %v2617 = vadd.f32 %v2615, %v2616
      %v2618 = vsel %vm2432, %v2023, 0.0
      %v2619 = vadd.f32 %v2617, %v2618
      %v2620 = vsel %vm2432, %v2026, 0.0
      %v2621 = vadd.f32 %v2619, %v2620
      %v2622 = vsel %vm2432, %v2028, 0.0
      %v2623 = vadd.f32 %v2621, %v2622
      %v2624 = vsel %vm2432, %v2031, 0.0
      %v2625 = vadd.f32 %v2623, %v2624
      %v2626 = vsel %vm2432, %v2033, 0.0
      %v2627 = vadd.f32 %v2625, %v2626
      %v2628 = vsel %vm2432, %v2036, 0.0
      %v2629 = vadd.f32 %v2627, %v2628
      %v2630 = vsel %vm2432, %v2038, 0.0
      %v2631 = vadd.f32 %v2629, %v2630
      %v2632 = vsel %vm2432, %v2041, 0.0
      %v2633 = vadd.f32 %v2631, %v2632
      %v2634 = vsel %vm2432, %v2043, 0.0
      %v2635 = vadd.f32 %v2633, %v2634
      %v2636 = vsel %vm2432, %v2046, 0.0
      %v2637 = vadd.f32 %v2635, %v2636
      %v2638 = vsel %vm2432, %v2048, 0.0
      %v2639 = vadd.f32 %v2637, %v2638
      %v2640 = vsel %vm2432, %v2051, 0.0
      %v2641 = vadd.f32 %v2639, %v2640
      %v2642 = vsel %vm2432, %v2053, 0.0
      %v2643 = vadd.f32 %v2641, %v2642
      %v2644 = vsel %vm2432, %v2056, 0.0
      %v2645 = vadd.f32 %v2643, %v2644
      %v2646 = vsel %vm2432, %v2058, 0.0
      %v2647 = vadd.f32 %v2645, %v2646
      %v2648 = vsel %vm2432, %v2061, 0.0
      %v2649 = vadd.f32 %v2647, %v2648
      %v2650 = vsel %vm2432, %v2063, 0.0
      %v2651 = vadd.f32 %v2649, %v2650
      %v2652 = vsel %vm2432, %v2066, 0.0
      %v2653 = vadd.f32 %v2651, %v2652
      %v2654 = vsel %vm2432, %v2068, 0.0
      %v2655 = vadd.f32 %v2653, %v2654
      %v2656 = vsel %vm2432, %v2071, 0.0
      %v2657 = vadd.f32 %v2655, %v2656
      %v2658 = vsel %vm2432, %v2073, 0.0
      %v2659 = vadd.f32 %v2657, %v2658
      %v2660 = vsel %vm2432, %v2076, 0.0
      %v2661 = vadd.f32 %v2659, %v2660
      %v2662 = vsel %vm2432, %v2078, 0.0
      %v2663 = vadd.f32 %v2661, %v2662
      %v2664 = vsel %vm2432, %v2081, 0.0
      %v2665 = vadd.f32 %v2663, %v2664
      %v2666 = vsel %vm2432, %v2083, 0.0
      %v2667 = vadd.f32 %v2665, %v2666
      %v2668 = vsel %vm2432, %v2086, 0.0
      %v2669 = vadd.f32 %v2667, %v2668
      %v2670 = vsel %vm2432, %v2088, 0.0
      %v2671 = vadd.f32 %v2669, %v2670
      %v2672 = vsel %vm2432, %v2091, 0.0
      %v2673 = vadd.f32 %v2671, %v2672
      %v2674 = vsel %vm2432, %v2093, 0.0
      %v2675 = vadd.f32 %v2673, %v2674
      %v2676 = vsel %vm2432, %v2096, 0.0
      %v2677 = vadd.f32 %v2675, %v2676
      %v2678 = vsel %vm2432, %v2098, 0.0
      %v2679 = vadd.f32 %v2677, %v2678
      %v2680 = vsel %vm2432, %v2101, 0.0
      %v2681 = vadd.f32 %v2679, %v2680
      %v2682 = vsel %vm2432, %v2103, 0.0
      %v2683 = vadd.f32 %v2681, %v2682
      %v2684 = vsel %vm2432, %v2106, 0.0
      %v2685 = vadd.f32 %v2683, %v2684
      %v2686 = vsel %vm2432, %v2108, 0.0
      %v2687 = vadd.f32 %v2685, %v2686
      %v2688 = vsel %vm2432, %v2111, 0.0
      %v2689 = vadd.f32 %v2687, %v2688
      %v2690 = vsel %vm2432, %v2113, 0.0
      %v2691 = vadd.f32 %v2689, %v2690
      %v2692 = vsel %vm2432, %v2116, 0.0
      %v2693 = vadd.f32 %v2691, %v2692
      %v2694 = vsel %vm2432, %v2118, 0.0
      %v2695 = vadd.f32 %v2693, %v2694
      %v2696 = vsel %vm2432, %v2121, 0.0
      %v2697 = vadd.f32 %v2695, %v2696
      %v2698 = vsel %vm2432, %v2123, 0.0
      %v2699 = vadd.f32 %v2697, %v2698
      %v2700 = vsel %vm2432, %v2126, 0.0
      %v2701 = vadd.f32 %v2699, %v2700
      %v2702 = vsel %vm2432, %v2128, 0.0
      %v2703 = vadd.f32 %v2701, %v2702
      %v2704 = vsel %vm2432, %v2131, 0.0
      %v2705 = vadd.f32 %v2703, %v2704
      %v2706 = vsel %vm2432, %v2133, 0.0
      %v2707 = vadd.f32 %v2705, %v2706
      %v2708 = vsel %vm2432, %v2136, 0.0
      %v2709 = vadd.f32 %v2707, %v2708
      %v2710 = vsel %vm2432, %v2138, 0.0
      %v2711 = vadd.f32 %v2709, %v2710
      %v2712 = vsel %vm2432, %v2141, 0.0
      %v2713 = vadd.f32 %v2711, %v2712
      %v2714 = vsel %vm2432, %v2143, 0.0
      %v2715 = vadd.f32 %v2713, %v2714
      %v2716 = vsel %vm2432, %v2146, 0.0
      %v2717 = vadd.f32 %v2715, %v2716
      %v2718 = vsel %vm2432, %v2148, 0.0
      %v2719 = vadd.f32 %v2717, %v2718
      %v2720 = vsel %vm2432, %v2151, 0.0
      %v2721 = vadd.f32 %v2719, %v2720
      %v2722 = vsel %vm2432, %v2153, 0.0
      %v2723 = vadd.f32 %v2721, %v2722
      %v2724 = vsel %vm2432, %v2156, 0.0
      %v2725 = vadd.f32 %v2723, %v2724
      %v2726 = vsel %vm2432, %v2158, 0.0
      %v2727 = vadd.f32 %v2725, %v2726
      %v2728 = vsel %vm2432, %v2161, 0.0
      %v2729 = vadd.f32 %v2727, %v2728
      %v2730 = vsel %vm2432, %v2163, 0.0
      %v2731 = vadd.f32 %v2729, %v2730
      %v2732 = vsel %vm2432, %v2166, 0.0
      %v2733 = vadd.f32 %v2731, %v2732
      %v2734 = vsel %vm2432, %v2168, 0.0
      %v2735 = vadd.f32 %v2733, %v2734
      %v2736 = vsel %vm2432, %v2171, 0.0
      %v2737 = vadd.f32 %v2735, %v2736
      %v2738 = vsel %vm2432, %v2173, 0.0
      %v2739 = vadd.f32 %v2737, %v2738
      %v2740 = vsel %vm2432, %v2176, 0.0
      %v2741 = vadd.f32 %v2739, %v2740
      %v2742 = vsel %vm2432, %v2178, 0.0
      %v2743 = vadd.f32 %v2741, %v2742
      %v2744 = vsel %vm2432, %v2181, 0.0
      %v2745 = vadd.f32 %v2743, %v2744
      %v2746 = vsel %vm2432, %v2183, 0.0
      %v2747 = vadd.f32 %v2745, %v2746
      %v2748 = vsel %vm2432, %v2186, 0.0
      %v2749 = vadd.f32 %v2747, %v2748
      %v2750 = vsel %vm2432, %v2188, 0.0
      %v2751 = vadd.f32 %v2749, %v2750
      %v2752 = vsel %vm2432, %v2191, 0.0
      %v2753 = vadd.f32 %v2751, %v2752
      %v2754 = vsel %vm2432, %v2193, 0.0
      %v2755 = vadd.f32 %v2753, %v2754
      %v2756 = vsel %vm2432, %v2196, 0.0
      %v2757 = vadd.f32 %v2755, %v2756
      %v2758 = vsel %vm2432, %v2198, 0.0
      %v2759 = vadd.f32 %v2757, %v2758
      %v2760 = vsel %vm2432, %v2201, 0.0
      %v2761 = vadd.f32 %v2759, %v2760
      %v2762 = vsel %vm2432, %v2203, 0.0
      %v2763 = vadd.f32 %v2761, %v2762
      %v2764 = vsel %vm2432, %v2206, 0.0
      %v2765 = vadd.f32 %v2763, %v2764
      %v2766 = vsel %vm2432, %v2208, 0.0
      %v2767 = vadd.f32 %v2765, %v2766
      %v2768 = vsel %vm2432, %v2211, 0.0
      %v2769 = vadd.f32 %v2767, %v2768
      %v2770 = vsel %vm2432, %v2213, 0.0
      %v2771 = vadd.f32 %v2769, %v2770
      %v2772 = vsel %vm2432, %v2216, 0.0
      %v2773 = vadd.f32 %v2771, %v2772
      %v2774 = vsel %vm2432, %v2218, 0.0
      %v2775 = vadd.f32 %v2773, %v2774
      %v2776 = vsel %vm2432, %v2221, 0.0
      %v2777 = vadd.f32 %v2775, %v2776
      %v2778 = vsel %vm2432, %v2223, 0.0
      %v2779 = vadd.f32 %v2777, %v2778
      %v2780 = vsel %vm2432, %v2226, 0.0
      %v2781 = vadd.f32 %v2779, %v2780
      %v2782 = vsel %vm2432, %v2228, 0.0
      %v2783 = vadd.f32 %v2781, %v2782
      %v2784 = vsel %vm2432, %v2231, 0.0
      %v2785 = vadd.f32 %v2783, %v2784
      %v2786 = vsel %vm2432, %v2233, 0.0
      %v2787 = vadd.f32 %v2785, %v2786
      %v2788 = vsel %vm2432, %v2236, 0.0
      %v2789 = vadd.f32 %v2787, %v2788
      %v2790 = vsel %vm2432, %v2238, 0.0
      %v2791 = vadd.f32 %v2789, %v2790
      %v2792 = vsel %vm2432, %v2241, 0.0
      %v2793 = vadd.f32 %v2791, %v2792
      %v2794 = vsel %vm2432, %v2243, 0.0
      %v2795 = vadd.f32 %v2793, %v2794
      %v2796 = vsel %vm2432, %v2246, 0.0
      %v2797 = vadd.f32 %v2795, %v2796
      %v2798 = vsel %vm2432, %v2248, 0.0
      %v2799 = vadd.f32 %v2797, %v2798
      %v2800 = vsel %vm2432, %v2251, 0.0
      %v2801 = vadd.f32 %v2799, %v2800
      %v2802 = vsel %vm2432, %v2253, 0.0
      %v2803 = vadd.f32 %v2801, %v2802
      %v2804 = vsel %vm2432, %v2256, 0.0
      %v2805 = vadd.f32 %v2803, %v2804
      %v2806 = vsel %vm2432, %v2258, 0.0
      %v2807 = vadd.f32 %v2805, %v2806
      %v2808 = vsel %vm2432, %v2261, 0.0
      %v2809 = vadd.f32 %v2807, %v2808
      %v2810 = vsel %vm2432, %v2263, 0.0
      %v2811 = vadd.f32 %v2809, %v2810
      %v2812 = vsel %vm2432, %v2266, 0.0
      %v2813 = vadd.f32 %v2811, %v2812
      %v2814 = vsel %vm2432, %v2268, 0.0
      %v2815 = vadd.f32 %v2813, %v2814
      %v2816 = vsel %vm2432, %v2271, 0.0
      %v2817 = vadd.f32 %v2815, %v2816
      %v2818 = vsel %vm2432, %v2273, 0.0
      %v2819 = vadd.f32 %v2817, %v2818
      %v2820 = vsel %vm2432, %v2276, 0.0
      %v2821 = vadd.f32 %v2819, %v2820
      %v2822 = vsel %vm2432, %v2278, 0.0
      %v2823 = vadd.f32 %v2821, %v2822
      %v2824 = vsel %vm2432, %v2281, 0.0
      %v2825 = vadd.f32 %v2823, %v2824
      %v2826 = vsel %vm2432, %v2283, 0.0
      %v2827 = vadd.f32 %v2825, %v2826
      %v2828 = vsel %vm2432, %v2286, 0.0
      %v2829 = vadd.f32 %v2827, %v2828
      %v2830 = vsel %vm2432, %v2288, 0.0
      %v2831 = vadd.f32 %v2829, %v2830
      %v2832 = vsel %vm2432, %v2291, 0.0
      %v2833 = vadd.f32 %v2831, %v2832
      %v2834 = vsel %vm2432, %v2293, 0.0
      %v2835 = vadd.f32 %v2833, %v2834
      %v2836 = vsel %vm2432, %v2296, 0.0
      %v2837 = vadd.f32 %v2835, %v2836
      %v2838 = vsel %vm2432, %v2298, 0.0
      %v2839 = vadd.f32 %v2837, %v2838
      %v2840 = vsel %vm2432, %v2301, 0.0
      %v2841 = vadd.f32 %v2839, %v2840
      %v2842 = vsel %vm2432, %v2303, 0.0
      %v2843 = vadd.f32 %v2841, %v2842
      %v2844 = vsel %vm2432, %v2306, 0.0
      %v2845 = vadd.f32 %v2843, %v2844
      %v2846 = vsel %vm2432, %v2308, 0.0
      %v2847 = vadd.f32 %v2845, %v2846
      %v2848 = vsel %vm2432, %v2311, 0.0
      %v2849 = vadd.f32 %v2847, %v2848
      %v2850 = vsel %vm2432, %v2313, 0.0
      %v2851 = vadd.f32 %v2849, %v2850
      %v2852 = vsel %vm2432, %v2316, 0.0
      %v2853 = vadd.f32 %v2851, %v2852
      %v2854 = vsel %vm2432, %v2318, 0.0
      %v2855 = vadd.f32 %v2853, %v2854
      %v2856 = vsel %vm2432, %v2321, 0.0
      %v2857 = vadd.f32 %v2855, %v2856
      %v2858 = vsel %vm2432, %v2323, 0.0
      %v2859 = vadd.f32 %v2857, %v2858
      %v2860 = vsel %vm2432, %v2326, 0.0
      %v2861 = vadd.f32 %v2859, %v2860
      %v2862 = vsel %vm2432, %v2328, 0.0
      %v2863 = vadd.f32 %v2861, %v2862
      %v2864 = vsel %vm2432, %v2331, 0.0
      %v2865 = vadd.f32 %v2863, %v2864
      %v2866 = vsel %vm2432, %v2333, 0.0
      %v2867 = vadd.f32 %v2865, %v2866
      %v2868 = vsel %vm2432, %v2336, 0.0
      %v2869 = vadd.f32 %v2867, %v2868
      %v2870 = vsel %vm2432, %v2338, 0.0
      %v2871 = vadd.f32 %v2869, %v2870
      %v2872 = vsel %vm2432, %v2341, 0.0
      %v2873 = vadd.f32 %v2871, %v2872
      %v2874 = vsel %vm2432, %v2343, 0.0
      %v2875 = vadd.f32 %v2873, %v2874
      %v2876 = vsel %vm2432, %v2346, 0.0
      %v2877 = vadd.f32 %v2875, %v2876
      %v2878 = vsel %vm2432, %v2348, 0.0
      %v2879 = vadd.f32 %v2877, %v2878
      %v2880 = vsel %vm2432, %v2351, 0.0
      %v2881 = vadd.f32 %v2879, %v2880
      %v2882 = vsel %vm2432, %v2353, 0.0
      %v2883 = vadd.f32 %v2881, %v2882
      %v2884 = vsel %vm2432, %v2356, 0.0
      %v2885 = vadd.f32 %v2883, %v2884
      %v2886 = vsel %vm2432, %v2358, 0.0
      %v2887 = vadd.f32 %v2885, %v2886
      %v2888 = vsel %vm2432, %v2361, 0.0
      %v2889 = vadd.f32 %v2887, %v2888
      %v2890 = vsel %vm2432, %v2363, 0.0
      %v2891 = vadd.f32 %v2889, %v2890
      %v2892 = vsel %vm2432, %v2366, 0.0
      %v2893 = vadd.f32 %v2891, %v2892
      %v2894 = vsel %vm2432, %v2368, 0.0
      %v2895 = vadd.f32 %v2893, %v2894
      %v2896 = vsel %vm2432, %v2371, 0.0
      %v2897 = vadd.f32 %v2895, %v2896
      %v2898 = vsel %vm2432, %v2373, 0.0
      %v2899 = vadd.f32 %v2897, %v2898
      %v2900 = vsel %vm2432, %v2376, 0.0
      %v2901 = vadd.f32 %v2899, %v2900
      %v2902 = vsel %vm2432, %v2378, 0.0
      %v2903 = vadd.f32 %v2901, %v2902
      %v2904 = vsel %vm2432, %v2381, 0.0
      %v2905 = vadd.f32 %v2903, %v2904
      %v2906 = vsel %vm2432, %v2383, 0.0
      %v2907 = vadd.f32 %v2905, %v2906
      %v2908 = vsel %vm2432, %v2386, 0.0
      %v2909 = vadd.f32 %v2907, %v2908
      %v2910 = vsel %vm2432, %v2388, 0.0
      %v2911 = vadd.f32 %v2909, %v2910
      %v2912 = vsel %vm2432, %v2391, 0.0
      %v2913 = vadd.f32 %v2911, %v2912
      %v2914 = vsel %vm2432, %v2393, 0.0
      %v2915 = vadd.f32 %v2913, %v2914
      %v2916 = vsel %vm2432, %v2396, 0.0
      %v2917 = vadd.f32 %v2915, %v2916
      %v2918 = vsel %vm2432, %v2398, 0.0
      %v2919 = vadd.f32 %v2917, %v2918
      %v2920 = vsel %vm2432, %v2401, 0.0
      %v2921 = vadd.f32 %v2919, %v2920
      %v2922 = vsel %vm2432, %v2403, 0.0
      %v2923 = vadd.f32 %v2921, %v2922
      %v2924 = vsel %vm2432, %v2406, 0.0
      %v2925 = vadd.f32 %v2923, %v2924
      %v2926 = vsel %vm2432, %v2408, 0.0
      %v2927 = vadd.f32 %v2925, %v2926
      %v2928 = vsel %vm2432, %v2411, 0.0
      %v2929 = vadd.f32 %v2927, %v2928
      %v2930 = vsel %vm2432, %v2413, 0.0
      %v2931 = vadd.f32 %v2929, %v2930
      %v2932 = vsel %vm2432, %v2416, 0.0
      %v2933 = vadd.f32 %v2931, %v2932
      %v2934 = vsel %vm2432, %v2418, 0.0
      %v2935 = vadd.f32 %v2933, %v2934
      %v2936 = vsel %vm2432, %v2421, 0.0
      %v2937 = vadd.f32 %v2935, %v2936
      %v2938 = vsel %vm2432, %v2423, 0.0
      %v2939 = vadd.f32 %v2937, %v2938
      %v2940 = vsel %vm2432, %v2426, 0.0
      %v2941 = vadd.f32 %v2939, %v2940
      %v2942 = vsel %vm2432, %v2428, 0.0
      %v2943 = vadd.f32 %v2941, %v2942
      %v2944 = vrot.slane %v2943, 4
      %v2945 = vadd.f32 %v2943, %v2944
      %v2946 = vrot.slane %v2945, 2
      %v2947 = vadd.f32 %v2945, %v2946
      %v2948 = vrot.slane %v2947, 1
      %v2949 = vadd.f32 %v2947, %v2948
      %v2950 = vrcp.pop 2048.0
      %v2951 = vmul.f32 2048.0, %v2950
      %v2952 = vsub.f32 1.0, %v2951
      %v2953 = vmul.f32 %v2950, %v2952
      %v2954 = vadd.f32 %v2950, %v2953
      %vm2955 = vweird.f32 %v2950
      %v2956 = vsel %vm2955, %v2950, %v2954
      %v2957 = vmul.f32 %v2949, %v2956
      %v2958 = vsub.f32 %v1791, %v2957
      %v2959 = vsub.f32 %v1793, %v2957
      %v2960 = vsub.f32 %v1796, %v2957
      %v2961 = vsub.f32 %v1798, %v2957
      %v2962 = vsub.f32 %v1801, %v2957
      %v2963 = vsub.f32 %v1803, %v2957
      %v2964 = vsub.f32 %v1806, %v2957
      %v2965 = vsub.f32 %v1808, %v2957
      %v2966 = vsub.f32 %v1811, %v2957
      %v2967 = vsub.f32 %v1813, %v2957
      %v2968 = vsub.f32 %v1816, %v2957
      %v2969 = vsub.f32 %v1818, %v2957
      %v2970 = vsub.f32 %v1821, %v2957
      %v2971 = vsub.f32 %v1823, %v2957
      %v2972 = vsub.f32 %v1826, %v2957
      %v2973 = vsub.f32 %v1828, %v2957
      %v2974 = vsub.f32 %v1831, %v2957
      %v2975 = vsub.f32 %v1833, %v2957
      %v2976 = vsub.f32 %v1836, %v2957
      %v2977 = vsub.f32 %v1838, %v2957
      %v2978 = vsub.f32 %v1841, %v2957
      %v2979 = vsub.f32 %v1843, %v2957
      %v2980 = vsub.f32 %v1846, %v2957
      %v2981 = vsub.f32 %v1848, %v2957
      %v2982 = vsub.f32 %v1851, %v2957
      %v2983 = vsub.f32 %v1853, %v2957
      %v2984 = vsub.f32 %v1856, %v2957
      %v2985 = vsub.f32 %v1858, %v2957
      %v2986 = vsub.f32 %v1861, %v2957
      %v2987 = vsub.f32 %v1863, %v2957
      %v2988 = vsub.f32 %v1866, %v2957
      %v2989 = vsub.f32 %v1868, %v2957
      %v2990 = vsub.f32 %v1871, %v2957
      %v2991 = vsub.f32 %v1873, %v2957
      %v2992 = vsub.f32 %v1876, %v2957
      %v2993 = vsub.f32 %v1878, %v2957
      %v2994 = vsub.f32 %v1881, %v2957
      %v2995 = vsub.f32 %v1883, %v2957
      %v2996 = vsub.f32 %v1886, %v2957
      %v2997 = vsub.f32 %v1888, %v2957
      %v2998 = vsub.f32 %v1891, %v2957
      %v2999 = vsub.f32 %v1893, %v2957
      %v3000 = vsub.f32 %v1896, %v2957
      %v3001 = vsub.f32 %v1898, %v2957
      %v3002 = vsub.f32 %v1901, %v2957
      %v3003 = vsub.f32 %v1903, %v2957
      %v3004 = vsub.f32 %v1906, %v2957
      %v3005 = vsub.f32 %v1908, %v2957
      %v3006 = vsub.f32 %v1911, %v2957
      %v3007 = vsub.f32 %v1913, %v2957
      %v3008 = vsub.f32 %v1916, %v2957
      %v3009 = vsub.f32 %v1918, %v2957
      %v3010 = vsub.f32 %v1921, %v2957
      %v3011 = vsub.f32 %v1923, %v2957
      %v3012 = vsub.f32 %v1926, %v2957
      %v3013 = vsub.f32 %v1928, %v2957
      %v3014 = vsub.f32 %v1931, %v2957
      %v3015 = vsub.f32 %v1933, %v2957
      %v3016 = vsub.f32 %v1936, %v2957
      %v3017 = vsub.f32 %v1938, %v2957
      %v3018 = vsub.f32 %v1941, %v2957
      %v3019 = vsub.f32 %v1943, %v2957
      %v3020 = vsub.f32 %v1946, %v2957
      %v3021 = vsub.f32 %v1948, %v2957
      %v3022 = vsub.f32 %v1951, %v2957
      %v3023 = vsub.f32 %v1953, %v2957
      %v3024 = vsub.f32 %v1956, %v2957
      %v3025 = vsub.f32 %v1958, %v2957
      %v3026 = vsub.f32 %v1961, %v2957
      %v3027 = vsub.f32 %v1963, %v2957
      %v3028 = vsub.f32 %v1966, %v2957
      %v3029 = vsub.f32 %v1968, %v2957
      %v3030 = vsub.f32 %v1971, %v2957
      %v3031 = vsub.f32 %v1973, %v2957
      %v3032 = vsub.f32 %v1976, %v2957
      %v3033 = vsub.f32 %v1978, %v2957
      %v3034 = vsub.f32 %v1981, %v2957
      %v3035 = vsub.f32 %v1983, %v2957
      %v3036 = vsub.f32 %v1986, %v2957
      %v3037 = vsub.f32 %v1988, %v2957
      %v3038 = vsub.f32 %v1991, %v2957
      %v3039 = vsub.f32 %v1993, %v2957
      %v3040 = vsub.f32 %v1996, %v2957
      %v3041 = vsub.f32 %v1998, %v2957
      %v3042 = vsub.f32 %v2001, %v2957
      %v3043 = vsub.f32 %v2003, %v2957
      %v3044 = vsub.f32 %v2006, %v2957
      %v3045 = vsub.f32 %v2008, %v2957
      %v3046 = vsub.f32 %v2011, %v2957
      %v3047 = vsub.f32 %v2013, %v2957
      %v3048 = vsub.f32 %v2016, %v2957
      %v3049 = vsub.f32 %v2018, %v2957
      %v3050 = vsub.f32 %v2021, %v2957
      %v3051 = vsub.f32 %v2023, %v2957
      %v3052 = vsub.f32 %v2026, %v2957
      %v3053 = vsub.f32 %v2028, %v2957
      %v3054 = vsub.f32 %v2031, %v2957
      %v3055 = vsub.f32 %v2033, %v2957
      %v3056 = vsub.f32 %v2036, %v2957
      %v3057 = vsub.f32 %v2038, %v2957
      %v3058 = vsub.f32 %v2041, %v2957
      %v3059 = vsub.f32 %v2043, %v2957
      %v3060 = vsub.f32 %v2046, %v2957
      %v3061 = vsub.f32 %v2048, %v2957
      %v3062 = vsub.f32 %v2051, %v2957
      %v3063 = vsub.f32 %v2053, %v2957
      %v3064 = vsub.f32 %v2056, %v2957
      %v3065 = vsub.f32 %v2058, %v2957
      %v3066 = vsub.f32 %v2061, %v2957
      %v3067 = vsub.f32 %v2063, %v2957
      %v3068 = vsub.f32 %v2066, %v2957
      %v3069 = vsub.f32 %v2068, %v2957
      %v3070 = vsub.f32 %v2071, %v2957
      %v3071 = vsub.f32 %v2073, %v2957
      %v3072 = vsub.f32 %v2076, %v2957
      %v3073 = vsub.f32 %v2078, %v2957
      %v3074 = vsub.f32 %v2081, %v2957
      %v3075 = vsub.f32 %v2083, %v2957
      %v3076 = vsub.f32 %v2086, %v2957
      %v3077 = vsub.f32 %v2088, %v2957
      %v3078 = vsub.f32 %v2091, %v2957
      %v3079 = vsub.f32 %v2093, %v2957
      %v3080 = vsub.f32 %v2096, %v2957
      %v3081 = vsub.f32 %v2098, %v2957
      %v3082 = vsub.f32 %v2101, %v2957
      %v3083 = vsub.f32 %v2103, %v2957
      %v3084 = vsub.f32 %v2106, %v2957
      %v3085 = vsub.f32 %v2108, %v2957
      %v3086 = vsub.f32 %v2111, %v2957
      %v3087 = vsub.f32 %v2113, %v2957
      %v3088 = vsub.f32 %v2116, %v2957
      %v3089 = vsub.f32 %v2118, %v2957
      %v3090 = vsub.f32 %v2121, %v2957
      %v3091 = vsub.f32 %v2123, %v2957
      %v3092 = vsub.f32 %v2126, %v2957
      %v3093 = vsub.f32 %v2128, %v2957
      %v3094 = vsub.f32 %v2131, %v2957
      %v3095 = vsub.f32 %v2133, %v2957
      %v3096 = vsub.f32 %v2136, %v2957
      %v3097 = vsub.f32 %v2138, %v2957
      %v3098 = vsub.f32 %v2141, %v2957
      %v3099 = vsub.f32 %v2143, %v2957
      %v3100 = vsub.f32 %v2146, %v2957
      %v3101 = vsub.f32 %v2148, %v2957
      %v3102 = vsub.f32 %v2151, %v2957
      %v3103 = vsub.f32 %v2153, %v2957
      %v3104 = vsub.f32 %v2156, %v2957
      %v3105 = vsub.f32 %v2158, %v2957
      %v3106 = vsub.f32 %v2161, %v2957
      %v3107 = vsub.f32 %v2163, %v2957
      %v3108 = vsub.f32 %v2166, %v2957
      %v3109 = vsub.f32 %v2168, %v2957
      %v3110 = vsub.f32 %v2171, %v2957
      %v3111 = vsub.f32 %v2173, %v2957
      %v3112 = vsub.f32 %v2176, %v2957
      %v3113 = vsub.f32 %v2178, %v2957
      %v3114 = vsub.f32 %v2181, %v2957
      %v3115 = vsub.f32 %v2183, %v2957
      %v3116 = vsub.f32 %v2186, %v2957
      %v3117 = vsub.f32 %v2188, %v2957
      %v3118 = vsub.f32 %v2191, %v2957
      %v3119 = vsub.f32 %v2193, %v2957
      %v3120 = vsub.f32 %v2196, %v2957
      %v3121 = vsub.f32 %v2198, %v2957
      %v3122 = vsub.f32 %v2201, %v2957
      %v3123 = vsub.f32 %v2203, %v2957
      %v3124 = vsub.f32 %v2206, %v2957
      %v3125 = vsub.f32 %v2208, %v2957
      %v3126 = vsub.f32 %v2211, %v2957
      %v3127 = vsub.f32 %v2213, %v2957
      %v3128 = vsub.f32 %v2216, %v2957
      %v3129 = vsub.f32 %v2218, %v2957
      %v3130 = vsub.f32 %v2221, %v2957
      %v3131 = vsub.f32 %v2223, %v2957
      %v3132 = vsub.f32 %v2226, %v2957
      %v3133 = vsub.f32 %v2228, %v2957
      %v3134 = vsub.f32 %v2231, %v2957
      %v3135 = vsub.f32 %v2233, %v2957
      %v3136 = vsub.f32 %v2236, %v2957
      %v3137 = vsub.f32 %v2238, %v2957
      %v3138 = vsub.f32 %v2241, %v2957
      %v3139 = vsub.f32 %v2243, %v2957
      %v3140 = vsub.f32 %v2246, %v2957
      %v3141 = vsub.f32 %v2248, %v2957
      %v3142 = vsub.f32 %v2251, %v2957
      %v3143 = vsub.f32 %v2253, %v2957
      %v3144 = vsub.f32 %v2256, %v2957
      %v3145 = vsub.f32 %v2258, %v2957
      %v3146 = vsub.f32 %v2261, %v2957
      %v3147 = vsub.f32 %v2263, %v2957
      %v3148 = vsub.f32 %v2266, %v2957
      %v3149 = vsub.f32 %v2268, %v2957
      %v3150 = vsub.f32 %v2271, %v2957
      %v3151 = vsub.f32 %v2273, %v2957
      %v3152 = vsub.f32 %v2276, %v2957
      %v3153 = vsub.f32 %v2278, %v2957
      %v3154 = vsub.f32 %v2281, %v2957
      %v3155 = vsub.f32 %v2283, %v2957
      %v3156 = vsub.f32 %v2286, %v2957
      %v3157 = vsub.f32 %v2288, %v2957
      %v3158 = vsub.f32 %v2291, %v2957
      %v3159 = vsub.f32 %v2293, %v2957
      %v3160 = vsub.f32 %v2296, %v2957
      %v3161 = vsub.f32 %v2298, %v2957
      %v3162 = vsub.f32 %v2301, %v2957
      %v3163 = vsub.f32 %v2303, %v2957
      %v3164 = vsub.f32 %v2306, %v2957
      %v3165 = vsub.f32 %v2308, %v2957
      %v3166 = vsub.f32 %v2311, %v2957
      %v3167 = vsub.f32 %v2313, %v2957
      %v3168 = vsub.f32 %v2316, %v2957
      %v3169 = vsub.f32 %v2318, %v2957
      %v3170 = vsub.f32 %v2321, %v2957
      %v3171 = vsub.f32 %v2323, %v2957
      %v3172 = vsub.f32 %v2326, %v2957
      %v3173 = vsub.f32 %v2328, %v2957
      %v3174 = vsub.f32 %v2331, %v2957
      %v3175 = vsub.f32 %v2333, %v2957
      %v3176 = vsub.f32 %v2336, %v2957
      %v3177 = vsub.f32 %v2338, %v2957
      %v3178 = vsub.f32 %v2341, %v2957
      %v3179 = vsub.f32 %v2343, %v2957
      %v3180 = vsub.f32 %v2346, %v2957
      %v3181 = vsub.f32 %v2348, %v2957
      %v3182 = vsub.f32 %v2351, %v2957
      %v3183 = vsub.f32 %v2353, %v2957
      %v3184 = vsub.f32 %v2356, %v2957
      %v3185 = vsub.f32 %v2358, %v2957
      %v3186 = vsub.f32 %v2361, %v2957
      %v3187 = vsub.f32 %v2363, %v2957
      %v3188 = vsub.f32 %v2366, %v2957
      %v3189 = vsub.f32 %v2368, %v2957
      %v3190 = vsub.f32 %v2371, %v2957
      %v3191 = vsub.f32 %v2373, %v2957
      %v3192 = vsub.f32 %v2376, %v2957
      %v3193 = vsub.f32 %v2378, %v2957
      %v3194 = vsub.f32 %v2381, %v2957
      %v3195 = vsub.f32 %v2383, %v2957
      %v3196 = vsub.f32 %v2386, %v2957
      %v3197 = vsub.f32 %v2388, %v2957
      %v3198 = vsub.f32 %v2391, %v2957
      %v3199 = vsub.f32 %v2393, %v2957
      %v3200 = vsub.f32 %v2396, %v2957
      %v3201 = vsub.f32 %v2398, %v2957
      %v3202 = vsub.f32 %v2401, %v2957
      %v3203 = vsub.f32 %v2403, %v2957
      %v3204 = vsub.f32 %v2406, %v2957
      %v3205 = vsub.f32 %v2408, %v2957
      %v3206 = vsub.f32 %v2411, %v2957
      %v3207 = vsub.f32 %v2413, %v2957
      %v3208 = vsub.f32 %v2416, %v2957
      %v3209 = vsub.f32 %v2418, %v2957
      %v3210 = vsub.f32 %v2421, %v2957
      %v3211 = vsub.f32 %v2423, %v2957
      %v3212 = vsub.f32 %v2426, %v2957
      %v3213 = vsub.f32 %v2428, %v2957
      %v3214 = vmul.f32 %v2958, %v2958
      %v3215 = vmul.f32 %v2959, %v2959
      %v3216 = vmul.f32 %v2960, %v2960
      %v3217 = vmul.f32 %v2961, %v2961
      %v3218 = vmul.f32 %v2962, %v2962
      %v3219 = vmul.f32 %v2963, %v2963
      %v3220 = vmul.f32 %v2964, %v2964
      %v3221 = vmul.f32 %v2965, %v2965
      %v3222 = vmul.f32 %v2966, %v2966
      %v3223 = vmul.f32 %v2967, %v2967
      %v3224 = vmul.f32 %v2968, %v2968
      %v3225 = vmul.f32 %v2969, %v2969
      %v3226 = vmul.f32 %v2970, %v2970
      %v3227 = vmul.f32 %v2971, %v2971
      %v3228 = vmul.f32 %v2972, %v2972
      %v3229 = vmul.f32 %v2973, %v2973
      %v3230 = vmul.f32 %v2974, %v2974
      %v3231 = vmul.f32 %v2975, %v2975
      %v3232 = vmul.f32 %v2976, %v2976
      %v3233 = vmul.f32 %v2977, %v2977
      %v3234 = vmul.f32 %v2978, %v2978
      %v3235 = vmul.f32 %v2979, %v2979
      %v3236 = vmul.f32 %v2980, %v2980
      %v3237 = vmul.f32 %v2981, %v2981
      %v3238 = vmul.f32 %v2982, %v2982
      %v3239 = vmul.f32 %v2983, %v2983
      %v3240 = vmul.f32 %v2984, %v2984
      %v3241 = vmul.f32 %v2985, %v2985
      %v3242 = vmul.f32 %v2986, %v2986
      %v3243 = vmul.f32 %v2987, %v2987
      %v3244 = vmul.f32 %v2988, %v2988
      %v3245 = vmul.f32 %v2989, %v2989
      %v3246 = vmul.f32 %v2990, %v2990
      %v3247 = vmul.f32 %v2991, %v2991
      %v3248 = vmul.f32 %v2992, %v2992
      %v3249 = vmul.f32 %v2993, %v2993
      %v3250 = vmul.f32 %v2994, %v2994
      %v3251 = vmul.f32 %v2995, %v2995
      %v3252 = vmul.f32 %v2996, %v2996
      %v3253 = vmul.f32 %v2997, %v2997
      %v3254 = vmul.f32 %v2998, %v2998
      %v3255 = vmul.f32 %v2999, %v2999
      %v3256 = vmul.f32 %v3000, %v3000
      %v3257 = vmul.f32 %v3001, %v3001
      %v3258 = vmul.f32 %v3002, %v3002
      %v3259 = vmul.f32 %v3003, %v3003
      %v3260 = vmul.f32 %v3004, %v3004
      %v3261 = vmul.f32 %v3005, %v3005
      %v3262 = vmul.f32 %v3006, %v3006
      %v3263 = vmul.f32 %v3007, %v3007
      %v3264 = vmul.f32 %v3008, %v3008
      %v3265 = vmul.f32 %v3009, %v3009
      %v3266 = vmul.f32 %v3010, %v3010
      %v3267 = vmul.f32 %v3011, %v3011
      %v3268 = vmul.f32 %v3012, %v3012
      %v3269 = vmul.f32 %v3013, %v3013
      %v3270 = vmul.f32 %v3014, %v3014
      %v3271 = vmul.f32 %v3015, %v3015
      %v3272 = vmul.f32 %v3016, %v3016
      %v3273 = vmul.f32 %v3017, %v3017
      %v3274 = vmul.f32 %v3018, %v3018
      %v3275 = vmul.f32 %v3019, %v3019
      %v3276 = vmul.f32 %v3020, %v3020
      %v3277 = vmul.f32 %v3021, %v3021
      %v3278 = vmul.f32 %v3022, %v3022
      %v3279 = vmul.f32 %v3023, %v3023
      %v3280 = vmul.f32 %v3024, %v3024
      %v3281 = vmul.f32 %v3025, %v3025
      %v3282 = vmul.f32 %v3026, %v3026
      %v3283 = vmul.f32 %v3027, %v3027
      %v3284 = vmul.f32 %v3028, %v3028
      %v3285 = vmul.f32 %v3029, %v3029
      %v3286 = vmul.f32 %v3030, %v3030
      %v3287 = vmul.f32 %v3031, %v3031
      %v3288 = vmul.f32 %v3032, %v3032
      %v3289 = vmul.f32 %v3033, %v3033
      %v3290 = vmul.f32 %v3034, %v3034
      %v3291 = vmul.f32 %v3035, %v3035
      %v3292 = vmul.f32 %v3036, %v3036
      %v3293 = vmul.f32 %v3037, %v3037
      %v3294 = vmul.f32 %v3038, %v3038
      %v3295 = vmul.f32 %v3039, %v3039
      %v3296 = vmul.f32 %v3040, %v3040
      %v3297 = vmul.f32 %v3041, %v3041
      %v3298 = vmul.f32 %v3042, %v3042
      %v3299 = vmul.f32 %v3043, %v3043
      %v3300 = vmul.f32 %v3044, %v3044
      %v3301 = vmul.f32 %v3045, %v3045
      %v3302 = vmul.f32 %v3046, %v3046
      %v3303 = vmul.f32 %v3047, %v3047
      %v3304 = vmul.f32 %v3048, %v3048
      %v3305 = vmul.f32 %v3049, %v3049
      %v3306 = vmul.f32 %v3050, %v3050
      %v3307 = vmul.f32 %v3051, %v3051
      %v3308 = vmul.f32 %v3052, %v3052
      %v3309 = vmul.f32 %v3053, %v3053
      %v3310 = vmul.f32 %v3054, %v3054
      %v3311 = vmul.f32 %v3055, %v3055
      %v3312 = vmul.f32 %v3056, %v3056
      %v3313 = vmul.f32 %v3057, %v3057
      %v3314 = vmul.f32 %v3058, %v3058
      %v3315 = vmul.f32 %v3059, %v3059
      %v3316 = vmul.f32 %v3060, %v3060
      %v3317 = vmul.f32 %v3061, %v3061
      %v3318 = vmul.f32 %v3062, %v3062
      %v3319 = vmul.f32 %v3063, %v3063
      %v3320 = vmul.f32 %v3064, %v3064
      %v3321 = vmul.f32 %v3065, %v3065
      %v3322 = vmul.f32 %v3066, %v3066
      %v3323 = vmul.f32 %v3067, %v3067
      %v3324 = vmul.f32 %v3068, %v3068
      %v3325 = vmul.f32 %v3069, %v3069
      %v3326 = vmul.f32 %v3070, %v3070
      %v3327 = vmul.f32 %v3071, %v3071
      %v3328 = vmul.f32 %v3072, %v3072
      %v3329 = vmul.f32 %v3073, %v3073
      %v3330 = vmul.f32 %v3074, %v3074
      %v3331 = vmul.f32 %v3075, %v3075
      %v3332 = vmul.f32 %v3076, %v3076
      %v3333 = vmul.f32 %v3077, %v3077
      %v3334 = vmul.f32 %v3078, %v3078
      %v3335 = vmul.f32 %v3079, %v3079
      %v3336 = vmul.f32 %v3080, %v3080
      %v3337 = vmul.f32 %v3081, %v3081
      %v3338 = vmul.f32 %v3082, %v3082
      %v3339 = vmul.f32 %v3083, %v3083
      %v3340 = vmul.f32 %v3084, %v3084
      %v3341 = vmul.f32 %v3085, %v3085
      %v3342 = vmul.f32 %v3086, %v3086
      %v3343 = vmul.f32 %v3087, %v3087
      %v3344 = vmul.f32 %v3088, %v3088
      %v3345 = vmul.f32 %v3089, %v3089
      %v3346 = vmul.f32 %v3090, %v3090
      %v3347 = vmul.f32 %v3091, %v3091
      %v3348 = vmul.f32 %v3092, %v3092
      %v3349 = vmul.f32 %v3093, %v3093
      %v3350 = vmul.f32 %v3094, %v3094
      %v3351 = vmul.f32 %v3095, %v3095
      %v3352 = vmul.f32 %v3096, %v3096
      %v3353 = vmul.f32 %v3097, %v3097
      %v3354 = vmul.f32 %v3098, %v3098
      %v3355 = vmul.f32 %v3099, %v3099
      %v3356 = vmul.f32 %v3100, %v3100
      %v3357 = vmul.f32 %v3101, %v3101
      %v3358 = vmul.f32 %v3102, %v3102
      %v3359 = vmul.f32 %v3103, %v3103
      %v3360 = vmul.f32 %v3104, %v3104
      %v3361 = vmul.f32 %v3105, %v3105
      %v3362 = vmul.f32 %v3106, %v3106
      %v3363 = vmul.f32 %v3107, %v3107
      %v3364 = vmul.f32 %v3108, %v3108
      %v3365 = vmul.f32 %v3109, %v3109
      %v3366 = vmul.f32 %v3110, %v3110
      %v3367 = vmul.f32 %v3111, %v3111
      %v3368 = vmul.f32 %v3112, %v3112
      %v3369 = vmul.f32 %v3113, %v3113
      %v3370 = vmul.f32 %v3114, %v3114
      %v3371 = vmul.f32 %v3115, %v3115
      %v3372 = vmul.f32 %v3116, %v3116
      %v3373 = vmul.f32 %v3117, %v3117
      %v3374 = vmul.f32 %v3118, %v3118
      %v3375 = vmul.f32 %v3119, %v3119
      %v3376 = vmul.f32 %v3120, %v3120
      %v3377 = vmul.f32 %v3121, %v3121
      %v3378 = vmul.f32 %v3122, %v3122
      %v3379 = vmul.f32 %v3123, %v3123
      %v3380 = vmul.f32 %v3124, %v3124
      %v3381 = vmul.f32 %v3125, %v3125
      %v3382 = vmul.f32 %v3126, %v3126
      %v3383 = vmul.f32 %v3127, %v3127
      %v3384 = vmul.f32 %v3128, %v3128
      %v3385 = vmul.f32 %v3129, %v3129
      %v3386 = vmul.f32 %v3130, %v3130
      %v3387 = vmul.f32 %v3131, %v3131
      %v3388 = vmul.f32 %v3132, %v3132
      %v3389 = vmul.f32 %v3133, %v3133
      %v3390 = vmul.f32 %v3134, %v3134
      %v3391 = vmul.f32 %v3135, %v3135
      %v3392 = vmul.f32 %v3136, %v3136
      %v3393 = vmul.f32 %v3137, %v3137
      %v3394 = vmul.f32 %v3138, %v3138
      %v3395 = vmul.f32 %v3139, %v3139
      %v3396 = vmul.f32 %v3140, %v3140
      %v3397 = vmul.f32 %v3141, %v3141
      %v3398 = vmul.f32 %v3142, %v3142
      %v3399 = vmul.f32 %v3143, %v3143
      %v3400 = vmul.f32 %v3144, %v3144
      %v3401 = vmul.f32 %v3145, %v3145
      %v3402 = vmul.f32 %v3146, %v3146
      %v3403 = vmul.f32 %v3147, %v3147
      %v3404 = vmul.f32 %v3148, %v3148
      %v3405 = vmul.f32 %v3149, %v3149
      %v3406 = vmul.f32 %v3150, %v3150
      %v3407 = vmul.f32 %v3151, %v3151
      %v3408 = vmul.f32 %v3152, %v3152
      %v3409 = vmul.f32 %v3153, %v3153
      %v3410 = vmul.f32 %v3154, %v3154
      %v3411 = vmul.f32 %v3155, %v3155
      %v3412 = vmul.f32 %v3156, %v3156
      %v3413 = vmul.f32 %v3157, %v3157
      %v3414 = vmul.f32 %v3158, %v3158
      %v3415 = vmul.f32 %v3159, %v3159
      %v3416 = vmul.f32 %v3160, %v3160
      %v3417 = vmul.f32 %v3161, %v3161
      %v3418 = vmul.f32 %v3162, %v3162
      %v3419 = vmul.f32 %v3163, %v3163
      %v3420 = vmul.f32 %v3164, %v3164
      %v3421 = vmul.f32 %v3165, %v3165
      %v3422 = vmul.f32 %v3166, %v3166
      %v3423 = vmul.f32 %v3167, %v3167
      %v3424 = vmul.f32 %v3168, %v3168
      %v3425 = vmul.f32 %v3169, %v3169
      %v3426 = vmul.f32 %v3170, %v3170
      %v3427 = vmul.f32 %v3171, %v3171
      %v3428 = vmul.f32 %v3172, %v3172
      %v3429 = vmul.f32 %v3173, %v3173
      %v3430 = vmul.f32 %v3174, %v3174
      %v3431 = vmul.f32 %v3175, %v3175
      %v3432 = vmul.f32 %v3176, %v3176
      %v3433 = vmul.f32 %v3177, %v3177
      %v3434 = vmul.f32 %v3178, %v3178
      %v3435 = vmul.f32 %v3179, %v3179
      %v3436 = vmul.f32 %v3180, %v3180
      %v3437 = vmul.f32 %v3181, %v3181
      %v3438 = vmul.f32 %v3182, %v3182
      %v3439 = vmul.f32 %v3183, %v3183
      %v3440 = vmul.f32 %v3184, %v3184
      %v3441 = vmul.f32 %v3185, %v3185
      %v3442 = vmul.f32 %v3186, %v3186
      %v3443 = vmul.f32 %v3187, %v3187
      %v3444 = vmul.f32 %v3188, %v3188
      %v3445 = vmul.f32 %v3189, %v3189
      %v3446 = vmul.f32 %v3190, %v3190
      %v3447 = vmul.f32 %v3191, %v3191
      %v3448 = vmul.f32 %v3192, %v3192
      %v3449 = vmul.f32 %v3193, %v3193
      %v3450 = vmul.f32 %v3194, %v3194
      %v3451 = vmul.f32 %v3195, %v3195
      %v3452 = vmul.f32 %v3196, %v3196
      %v3453 = vmul.f32 %v3197, %v3197
      %v3454 = vmul.f32 %v3198, %v3198
      %v3455 = vmul.f32 %v3199, %v3199
      %v3456 = vmul.f32 %v3200, %v3200
      %v3457 = vmul.f32 %v3201, %v3201
      %v3458 = vmul.f32 %v3202, %v3202
      %v3459 = vmul.f32 %v3203, %v3203
      %v3460 = vmul.f32 %v3204, %v3204
      %v3461 = vmul.f32 %v3205, %v3205
      %v3462 = vmul.f32 %v3206, %v3206
      %v3463 = vmul.f32 %v3207, %v3207
      %v3464 = vmul.f32 %v3208, %v3208
      %v3465 = vmul.f32 %v3209, %v3209
      %v3466 = vmul.f32 %v3210, %v3210
      %v3467 = vmul.f32 %v3211, %v3211
      %v3468 = vmul.f32 %v3212, %v3212
      %v3469 = vmul.f32 %v3213, %v3213
      %v3470 = vsel %vm2432, %v3214, 0.0
      %v3471 = vsel %vm2432, %v3215, 0.0
      %v3472 = vadd.f32 %v3470, %v3471
      %v3473 = vsel %vm2432, %v3216, 0.0
      %v3474 = vadd.f32 %v3472, %v3473
      %v3475 = vsel %vm2432, %v3217, 0.0
      %v3476 = vadd.f32 %v3474, %v3475
      %v3477 = vsel %vm2432, %v3218, 0.0
      %v3478 = vadd.f32 %v3476, %v3477
      %v3479 = vsel %vm2432, %v3219, 0.0
      %v3480 = vadd.f32 %v3478, %v3479
      %v3481 = vsel %vm2432, %v3220, 0.0
      %v3482 = vadd.f32 %v3480, %v3481
      %v3483 = vsel %vm2432, %v3221, 0.0
      %v3484 = vadd.f32 %v3482, %v3483
      %v3485 = vsel %vm2432, %v3222, 0.0
      %v3486 = vadd.f32 %v3484, %v3485
      %v3487 = vsel %vm2432, %v3223, 0.0
      %v3488 = vadd.f32 %v3486, %v3487
      %v3489 = vsel %vm2432, %v3224, 0.0
      %v3490 = vadd.f32 %v3488, %v3489
      %v3491 = vsel %vm2432, %v3225, 0.0
      %v3492 = vadd.f32 %v3490, %v3491
      %v3493 = vsel %vm2432, %v3226, 0.0
      %v3494 = vadd.f32 %v3492, %v3493
      %v3495 = vsel %vm2432, %v3227, 0.0
      %v3496 = vadd.f32 %v3494, %v3495
      %v3497 = vsel %vm2432, %v3228, 0.0
      %v3498 = vadd.f32 %v3496, %v3497
      %v3499 = vsel %vm2432, %v3229, 0.0
      %v3500 = vadd.f32 %v3498, %v3499
      %v3501 = vsel %vm2432, %v3230, 0.0
      %v3502 = vadd.f32 %v3500, %v3501
      %v3503 = vsel %vm2432, %v3231, 0.0
      %v3504 = vadd.f32 %v3502, %v3503
      %v3505 = vsel %vm2432, %v3232, 0.0
      %v3506 = vadd.f32 %v3504, %v3505
      %v3507 = vsel %vm2432, %v3233, 0.0
      %v3508 = vadd.f32 %v3506, %v3507
      %v3509 = vsel %vm2432, %v3234, 0.0
      %v3510 = vadd.f32 %v3508, %v3509
      %v3511 = vsel %vm2432, %v3235, 0.0
      %v3512 = vadd.f32 %v3510, %v3511
      %v3513 = vsel %vm2432, %v3236, 0.0
      %v3514 = vadd.f32 %v3512, %v3513
      %v3515 = vsel %vm2432, %v3237, 0.0
      %v3516 = vadd.f32 %v3514, %v3515
      %v3517 = vsel %vm2432, %v3238, 0.0
      %v3518 = vadd.f32 %v3516, %v3517
      %v3519 = vsel %vm2432, %v3239, 0.0
      %v3520 = vadd.f32 %v3518, %v3519
      %v3521 = vsel %vm2432, %v3240, 0.0
      %v3522 = vadd.f32 %v3520, %v3521
      %v3523 = vsel %vm2432, %v3241, 0.0
      %v3524 = vadd.f32 %v3522, %v3523
      %v3525 = vsel %vm2432, %v3242, 0.0
      %v3526 = vadd.f32 %v3524, %v3525
      %v3527 = vsel %vm2432, %v3243, 0.0
      %v3528 = vadd.f32 %v3526, %v3527
      %v3529 = vsel %vm2432, %v3244, 0.0
      %v3530 = vadd.f32 %v3528, %v3529
      %v3531 = vsel %vm2432, %v3245, 0.0
      %v3532 = vadd.f32 %v3530, %v3531
      %v3533 = vsel %vm2432, %v3246, 0.0
      %v3534 = vadd.f32 %v3532, %v3533
      %v3535 = vsel %vm2432, %v3247, 0.0
      %v3536 = vadd.f32 %v3534, %v3535
      %v3537 = vsel %vm2432, %v3248, 0.0
      %v3538 = vadd.f32 %v3536, %v3537
      %v3539 = vsel %vm2432, %v3249, 0.0
      %v3540 = vadd.f32 %v3538, %v3539
      %v3541 = vsel %vm2432, %v3250, 0.0
      %v3542 = vadd.f32 %v3540, %v3541
      %v3543 = vsel %vm2432, %v3251, 0.0
      %v3544 = vadd.f32 %v3542, %v3543
      %v3545 = vsel %vm2432, %v3252, 0.0
      %v3546 = vadd.f32 %v3544, %v3545
      %v3547 = vsel %vm2432, %v3253, 0.0
      %v3548 = vadd.f32 %v3546, %v3547
      %v3549 = vsel %vm2432, %v3254, 0.0
      %v3550 = vadd.f32 %v3548, %v3549
      %v3551 = vsel %vm2432, %v3255, 0.0
      %v3552 = vadd.f32 %v3550, %v3551
      %v3553 = vsel %vm2432, %v3256, 0.0
      %v3554 = vadd.f32 %v3552, %v3553
      %v3555 = vsel %vm2432, %v3257, 0.0
      %v3556 = vadd.f32 %v3554, %v3555
      %v3557 = vsel %vm2432, %v3258, 0.0
      %v3558 = vadd.f32 %v3556, %v3557
      %v3559 = vsel %vm2432, %v3259, 0.0
      %v3560 = vadd.f32 %v3558, %v3559
      %v3561 = vsel %vm2432, %v3260, 0.0
      %v3562 = vadd.f32 %v3560, %v3561
      %v3563 = vsel %vm2432, %v3261, 0.0
      %v3564 = vadd.f32 %v3562, %v3563
      %v3565 = vsel %vm2432, %v3262, 0.0
      %v3566 = vadd.f32 %v3564, %v3565
      %v3567 = vsel %vm2432, %v3263, 0.0
      %v3568 = vadd.f32 %v3566, %v3567
      %v3569 = vsel %vm2432, %v3264, 0.0
      %v3570 = vadd.f32 %v3568, %v3569
      %v3571 = vsel %vm2432, %v3265, 0.0
      %v3572 = vadd.f32 %v3570, %v3571
      %v3573 = vsel %vm2432, %v3266, 0.0
      %v3574 = vadd.f32 %v3572, %v3573
      %v3575 = vsel %vm2432, %v3267, 0.0
      %v3576 = vadd.f32 %v3574, %v3575
      %v3577 = vsel %vm2432, %v3268, 0.0
      %v3578 = vadd.f32 %v3576, %v3577
      %v3579 = vsel %vm2432, %v3269, 0.0
      %v3580 = vadd.f32 %v3578, %v3579
      %v3581 = vsel %vm2432, %v3270, 0.0
      %v3582 = vadd.f32 %v3580, %v3581
      %v3583 = vsel %vm2432, %v3271, 0.0
      %v3584 = vadd.f32 %v3582, %v3583
      %v3585 = vsel %vm2432, %v3272, 0.0
      %v3586 = vadd.f32 %v3584, %v3585
      %v3587 = vsel %vm2432, %v3273, 0.0
      %v3588 = vadd.f32 %v3586, %v3587
      %v3589 = vsel %vm2432, %v3274, 0.0
      %v3590 = vadd.f32 %v3588, %v3589
      %v3591 = vsel %vm2432, %v3275, 0.0
      %v3592 = vadd.f32 %v3590, %v3591
      %v3593 = vsel %vm2432, %v3276, 0.0
      %v3594 = vadd.f32 %v3592, %v3593
      %v3595 = vsel %vm2432, %v3277, 0.0
      %v3596 = vadd.f32 %v3594, %v3595
      %v3597 = vsel %vm2432, %v3278, 0.0
      %v3598 = vadd.f32 %v3596, %v3597
      %v3599 = vsel %vm2432, %v3279, 0.0
      %v3600 = vadd.f32 %v3598, %v3599
      %v3601 = vsel %vm2432, %v3280, 0.0
      %v3602 = vadd.f32 %v3600, %v3601
      %v3603 = vsel %vm2432, %v3281, 0.0
      %v3604 = vadd.f32 %v3602, %v3603
      %v3605 = vsel %vm2432, %v3282, 0.0
      %v3606 = vadd.f32 %v3604, %v3605
      %v3607 = vsel %vm2432, %v3283, 0.0
      %v3608 = vadd.f32 %v3606, %v3607
      %v3609 = vsel %vm2432, %v3284, 0.0
      %v3610 = vadd.f32 %v3608, %v3609
      %v3611 = vsel %vm2432, %v3285, 0.0
      %v3612 = vadd.f32 %v3610, %v3611
      %v3613 = vsel %vm2432, %v3286, 0.0
      %v3614 = vadd.f32 %v3612, %v3613
      %v3615 = vsel %vm2432, %v3287, 0.0
      %v3616 = vadd.f32 %v3614, %v3615
      %v3617 = vsel %vm2432, %v3288, 0.0
      %v3618 = vadd.f32 %v3616, %v3617
      %v3619 = vsel %vm2432, %v3289, 0.0
      %v3620 = vadd.f32 %v3618, %v3619
      %v3621 = vsel %vm2432, %v3290, 0.0
      %v3622 = vadd.f32 %v3620, %v3621
      %v3623 = vsel %vm2432, %v3291, 0.0
      %v3624 = vadd.f32 %v3622, %v3623
      %v3625 = vsel %vm2432, %v3292, 0.0
      %v3626 = vadd.f32 %v3624, %v3625
      %v3627 = vsel %vm2432, %v3293, 0.0
      %v3628 = vadd.f32 %v3626, %v3627
      %v3629 = vsel %vm2432, %v3294, 0.0
      %v3630 = vadd.f32 %v3628, %v3629
      %v3631 = vsel %vm2432, %v3295, 0.0
      %v3632 = vadd.f32 %v3630, %v3631
      %v3633 = vsel %vm2432, %v3296, 0.0
      %v3634 = vadd.f32 %v3632, %v3633
      %v3635 = vsel %vm2432, %v3297, 0.0
      %v3636 = vadd.f32 %v3634, %v3635
      %v3637 = vsel %vm2432, %v3298, 0.0
      %v3638 = vadd.f32 %v3636, %v3637
      %v3639 = vsel %vm2432, %v3299, 0.0
      %v3640 = vadd.f32 %v3638, %v3639
      %v3641 = vsel %vm2432, %v3300, 0.0
      %v3642 = vadd.f32 %v3640, %v3641
      %v3643 = vsel %vm2432, %v3301, 0.0
      %v3644 = vadd.f32 %v3642, %v3643
      %v3645 = vsel %vm2432, %v3302, 0.0
      %v3646 = vadd.f32 %v3644, %v3645
      %v3647 = vsel %vm2432, %v3303, 0.0
      %v3648 = vadd.f32 %v3646, %v3647
      %v3649 = vsel %vm2432, %v3304, 0.0
      %v3650 = vadd.f32 %v3648, %v3649
      %v3651 = vsel %vm2432, %v3305, 0.0
      %v3652 = vadd.f32 %v3650, %v3651
      %v3653 = vsel %vm2432, %v3306, 0.0
      %v3654 = vadd.f32 %v3652, %v3653
      %v3655 = vsel %vm2432, %v3307, 0.0
      %v3656 = vadd.f32 %v3654, %v3655
      %v3657 = vsel %vm2432, %v3308, 0.0
      %v3658 = vadd.f32 %v3656, %v3657
      %v3659 = vsel %vm2432, %v3309, 0.0
      %v3660 = vadd.f32 %v3658, %v3659
      %v3661 = vsel %vm2432, %v3310, 0.0
      %v3662 = vadd.f32 %v3660, %v3661
      %v3663 = vsel %vm2432, %v3311, 0.0
      %v3664 = vadd.f32 %v3662, %v3663
      %v3665 = vsel %vm2432, %v3312, 0.0
      %v3666 = vadd.f32 %v3664, %v3665
      %v3667 = vsel %vm2432, %v3313, 0.0
      %v3668 = vadd.f32 %v3666, %v3667
      %v3669 = vsel %vm2432, %v3314, 0.0
      %v3670 = vadd.f32 %v3668, %v3669
      %v3671 = vsel %vm2432, %v3315, 0.0
      %v3672 = vadd.f32 %v3670, %v3671
      %v3673 = vsel %vm2432, %v3316, 0.0
      %v3674 = vadd.f32 %v3672, %v3673
      %v3675 = vsel %vm2432, %v3317, 0.0
      %v3676 = vadd.f32 %v3674, %v3675
      %v3677 = vsel %vm2432, %v3318, 0.0
      %v3678 = vadd.f32 %v3676, %v3677
      %v3679 = vsel %vm2432, %v3319, 0.0
      %v3680 = vadd.f32 %v3678, %v3679
      %v3681 = vsel %vm2432, %v3320, 0.0
      %v3682 = vadd.f32 %v3680, %v3681
      %v3683 = vsel %vm2432, %v3321, 0.0
      %v3684 = vadd.f32 %v3682, %v3683
      %v3685 = vsel %vm2432, %v3322, 0.0
      %v3686 = vadd.f32 %v3684, %v3685
      %v3687 = vsel %vm2432, %v3323, 0.0
      %v3688 = vadd.f32 %v3686, %v3687
      %v3689 = vsel %vm2432, %v3324, 0.0
      %v3690 = vadd.f32 %v3688, %v3689
      %v3691 = vsel %vm2432, %v3325, 0.0
      %v3692 = vadd.f32 %v3690, %v3691
      %v3693 = vsel %vm2432, %v3326, 0.0
      %v3694 = vadd.f32 %v3692, %v3693
      %v3695 = vsel %vm2432, %v3327, 0.0
      %v3696 = vadd.f32 %v3694, %v3695
      %v3697 = vsel %vm2432, %v3328, 0.0
      %v3698 = vadd.f32 %v3696, %v3697
      %v3699 = vsel %vm2432, %v3329, 0.0
      %v3700 = vadd.f32 %v3698, %v3699
      %v3701 = vsel %vm2432, %v3330, 0.0
      %v3702 = vadd.f32 %v3700, %v3701
      %v3703 = vsel %vm2432, %v3331, 0.0
      %v3704 = vadd.f32 %v3702, %v3703
      %v3705 = vsel %vm2432, %v3332, 0.0
      %v3706 = vadd.f32 %v3704, %v3705
      %v3707 = vsel %vm2432, %v3333, 0.0
      %v3708 = vadd.f32 %v3706, %v3707
      %v3709 = vsel %vm2432, %v3334, 0.0
      %v3710 = vadd.f32 %v3708, %v3709
      %v3711 = vsel %vm2432, %v3335, 0.0
      %v3712 = vadd.f32 %v3710, %v3711
      %v3713 = vsel %vm2432, %v3336, 0.0
      %v3714 = vadd.f32 %v3712, %v3713
      %v3715 = vsel %vm2432, %v3337, 0.0
      %v3716 = vadd.f32 %v3714, %v3715
      %v3717 = vsel %vm2432, %v3338, 0.0
      %v3718 = vadd.f32 %v3716, %v3717
      %v3719 = vsel %vm2432, %v3339, 0.0
      %v3720 = vadd.f32 %v3718, %v3719
      %v3721 = vsel %vm2432, %v3340, 0.0
      %v3722 = vadd.f32 %v3720, %v3721
      %v3723 = vsel %vm2432, %v3341, 0.0
      %v3724 = vadd.f32 %v3722, %v3723
      %v3725 = vsel %vm2432, %v3342, 0.0
      %v3726 = vadd.f32 %v3724, %v3725
      %v3727 = vsel %vm2432, %v3343, 0.0
      %v3728 = vadd.f32 %v3726, %v3727
      %v3729 = vsel %vm2432, %v3344, 0.0
      %v3730 = vadd.f32 %v3728, %v3729
      %v3731 = vsel %vm2432, %v3345, 0.0
      %v3732 = vadd.f32 %v3730, %v3731
      %v3733 = vsel %vm2432, %v3346, 0.0
      %v3734 = vadd.f32 %v3732, %v3733
      %v3735 = vsel %vm2432, %v3347, 0.0
      %v3736 = vadd.f32 %v3734, %v3735
      %v3737 = vsel %vm2432, %v3348, 0.0
      %v3738 = vadd.f32 %v3736, %v3737
      %v3739 = vsel %vm2432, %v3349, 0.0
      %v3740 = vadd.f32 %v3738, %v3739
      %v3741 = vsel %vm2432, %v3350, 0.0
      %v3742 = vadd.f32 %v3740, %v3741
      %v3743 = vsel %vm2432, %v3351, 0.0
      %v3744 = vadd.f32 %v3742, %v3743
      %v3745 = vsel %vm2432, %v3352, 0.0
      %v3746 = vadd.f32 %v3744, %v3745
      %v3747 = vsel %vm2432, %v3353, 0.0
      %v3748 = vadd.f32 %v3746, %v3747
      %v3749 = vsel %vm2432, %v3354, 0.0
      %v3750 = vadd.f32 %v3748, %v3749
      %v3751 = vsel %vm2432, %v3355, 0.0
      %v3752 = vadd.f32 %v3750, %v3751
      %v3753 = vsel %vm2432, %v3356, 0.0
      %v3754 = vadd.f32 %v3752, %v3753
      %v3755 = vsel %vm2432, %v3357, 0.0
      %v3756 = vadd.f32 %v3754, %v3755
      %v3757 = vsel %vm2432, %v3358, 0.0
      %v3758 = vadd.f32 %v3756, %v3757
      %v3759 = vsel %vm2432, %v3359, 0.0
      %v3760 = vadd.f32 %v3758, %v3759
      %v3761 = vsel %vm2432, %v3360, 0.0
      %v3762 = vadd.f32 %v3760, %v3761
      %v3763 = vsel %vm2432, %v3361, 0.0
      %v3764 = vadd.f32 %v3762, %v3763
      %v3765 = vsel %vm2432, %v3362, 0.0
      %v3766 = vadd.f32 %v3764, %v3765
      %v3767 = vsel %vm2432, %v3363, 0.0
      %v3768 = vadd.f32 %v3766, %v3767
      %v3769 = vsel %vm2432, %v3364, 0.0
      %v3770 = vadd.f32 %v3768, %v3769
      %v3771 = vsel %vm2432, %v3365, 0.0
      %v3772 = vadd.f32 %v3770, %v3771
      %v3773 = vsel %vm2432, %v3366, 0.0
      %v3774 = vadd.f32 %v3772, %v3773
      %v3775 = vsel %vm2432, %v3367, 0.0
      %v3776 = vadd.f32 %v3774, %v3775
      %v3777 = vsel %vm2432, %v3368, 0.0
      %v3778 = vadd.f32 %v3776, %v3777
      %v3779 = vsel %vm2432, %v3369, 0.0
      %v3780 = vadd.f32 %v3778, %v3779
      %v3781 = vsel %vm2432, %v3370, 0.0
      %v3782 = vadd.f32 %v3780, %v3781
      %v3783 = vsel %vm2432, %v3371, 0.0
      %v3784 = vadd.f32 %v3782, %v3783
      %v3785 = vsel %vm2432, %v3372, 0.0
      %v3786 = vadd.f32 %v3784, %v3785
      %v3787 = vsel %vm2432, %v3373, 0.0
      %v3788 = vadd.f32 %v3786, %v3787
      %v3789 = vsel %vm2432, %v3374, 0.0
      %v3790 = vadd.f32 %v3788, %v3789
      %v3791 = vsel %vm2432, %v3375, 0.0
      %v3792 = vadd.f32 %v3790, %v3791
      %v3793 = vsel %vm2432, %v3376, 0.0
      %v3794 = vadd.f32 %v3792, %v3793
      %v3795 = vsel %vm2432, %v3377, 0.0
      %v3796 = vadd.f32 %v3794, %v3795
      %v3797 = vsel %vm2432, %v3378, 0.0
      %v3798 = vadd.f32 %v3796, %v3797
      %v3799 = vsel %vm2432, %v3379, 0.0
      %v3800 = vadd.f32 %v3798, %v3799
      %v3801 = vsel %vm2432, %v3380, 0.0
      %v3802 = vadd.f32 %v3800, %v3801
      %v3803 = vsel %vm2432, %v3381, 0.0
      %v3804 = vadd.f32 %v3802, %v3803
      %v3805 = vsel %vm2432, %v3382, 0.0
      %v3806 = vadd.f32 %v3804, %v3805
      %v3807 = vsel %vm2432, %v3383, 0.0
      %v3808 = vadd.f32 %v3806, %v3807
      %v3809 = vsel %vm2432, %v3384, 0.0
      %v3810 = vadd.f32 %v3808, %v3809
      %v3811 = vsel %vm2432, %v3385, 0.0
      %v3812 = vadd.f32 %v3810, %v3811
      %v3813 = vsel %vm2432, %v3386, 0.0
      %v3814 = vadd.f32 %v3812, %v3813
      %v3815 = vsel %vm2432, %v3387, 0.0
      %v3816 = vadd.f32 %v3814, %v3815
      %v3817 = vsel %vm2432, %v3388, 0.0
      %v3818 = vadd.f32 %v3816, %v3817
      %v3819 = vsel %vm2432, %v3389, 0.0
      %v3820 = vadd.f32 %v3818, %v3819
      %v3821 = vsel %vm2432, %v3390, 0.0
      %v3822 = vadd.f32 %v3820, %v3821
      %v3823 = vsel %vm2432, %v3391, 0.0
      %v3824 = vadd.f32 %v3822, %v3823
      %v3825 = vsel %vm2432, %v3392, 0.0
      %v3826 = vadd.f32 %v3824, %v3825
      %v3827 = vsel %vm2432, %v3393, 0.0
      %v3828 = vadd.f32 %v3826, %v3827
      %v3829 = vsel %vm2432, %v3394, 0.0
      %v3830 = vadd.f32 %v3828, %v3829
      %v3831 = vsel %vm2432, %v3395, 0.0
      %v3832 = vadd.f32 %v3830, %v3831
      %v3833 = vsel %vm2432, %v3396, 0.0
      %v3834 = vadd.f32 %v3832, %v3833
      %v3835 = vsel %vm2432, %v3397, 0.0
      %v3836 = vadd.f32 %v3834, %v3835
      %v3837 = vsel %vm2432, %v3398, 0.0
      %v3838 = vadd.f32 %v3836, %v3837
      %v3839 = vsel %vm2432, %v3399, 0.0
      %v3840 = vadd.f32 %v3838, %v3839
      %v3841 = vsel %vm2432, %v3400, 0.0
      %v3842 = vadd.f32 %v3840, %v3841
      %v3843 = vsel %vm2432, %v3401, 0.0
      %v3844 = vadd.f32 %v3842, %v3843
      %v3845 = vsel %vm2432, %v3402, 0.0
      %v3846 = vadd.f32 %v3844, %v3845
      %v3847 = vsel %vm2432, %v3403, 0.0
      %v3848 = vadd.f32 %v3846, %v3847
      %v3849 = vsel %vm2432, %v3404, 0.0
      %v3850 = vadd.f32 %v3848, %v3849
      %v3851 = vsel %vm2432, %v3405, 0.0
      %v3852 = vadd.f32 %v3850, %v3851
      %v3853 = vsel %vm2432, %v3406, 0.0
      %v3854 = vadd.f32 %v3852, %v3853
      %v3855 = vsel %vm2432, %v3407, 0.0
      %v3856 = vadd.f32 %v3854, %v3855
      %v3857 = vsel %vm2432, %v3408, 0.0
      %v3858 = vadd.f32 %v3856, %v3857
      %v3859 = vsel %vm2432, %v3409, 0.0
      %v3860 = vadd.f32 %v3858, %v3859
      %v3861 = vsel %vm2432, %v3410, 0.0
      %v3862 = vadd.f32 %v3860, %v3861
      %v3863 = vsel %vm2432, %v3411, 0.0
      %v3864 = vadd.f32 %v3862, %v3863
      %v3865 = vsel %vm2432, %v3412, 0.0
      %v3866 = vadd.f32 %v3864, %v3865
      %v3867 = vsel %vm2432, %v3413, 0.0
      %v3868 = vadd.f32 %v3866, %v3867
      %v3869 = vsel %vm2432, %v3414, 0.0
      %v3870 = vadd.f32 %v3868, %v3869
      %v3871 = vsel %vm2432, %v3415, 0.0
      %v3872 = vadd.f32 %v3870, %v3871
      %v3873 = vsel %vm2432, %v3416, 0.0
      %v3874 = vadd.f32 %v3872, %v3873
      %v3875 = vsel %vm2432, %v3417, 0.0
      %v3876 = vadd.f32 %v3874, %v3875
      %v3877 = vsel %vm2432, %v3418, 0.0
      %v3878 = vadd.f32 %v3876, %v3877
      %v3879 = vsel %vm2432, %v3419, 0.0
      %v3880 = vadd.f32 %v3878, %v3879
      %v3881 = vsel %vm2432, %v3420, 0.0
      %v3882 = vadd.f32 %v3880, %v3881
      %v3883 = vsel %vm2432, %v3421, 0.0
      %v3884 = vadd.f32 %v3882, %v3883
      %v3885 = vsel %vm2432, %v3422, 0.0
      %v3886 = vadd.f32 %v3884, %v3885
      %v3887 = vsel %vm2432, %v3423, 0.0
      %v3888 = vadd.f32 %v3886, %v3887
      %v3889 = vsel %vm2432, %v3424, 0.0
      %v3890 = vadd.f32 %v3888, %v3889
      %v3891 = vsel %vm2432, %v3425, 0.0
      %v3892 = vadd.f32 %v3890, %v3891
      %v3893 = vsel %vm2432, %v3426, 0.0
      %v3894 = vadd.f32 %v3892, %v3893
      %v3895 = vsel %vm2432, %v3427, 0.0
      %v3896 = vadd.f32 %v3894, %v3895
      %v3897 = vsel %vm2432, %v3428, 0.0
      %v3898 = vadd.f32 %v3896, %v3897
      %v3899 = vsel %vm2432, %v3429, 0.0
      %v3900 = vadd.f32 %v3898, %v3899
      %v3901 = vsel %vm2432, %v3430, 0.0
      %v3902 = vadd.f32 %v3900, %v3901
      %v3903 = vsel %vm2432, %v3431, 0.0
      %v3904 = vadd.f32 %v3902, %v3903
      %v3905 = vsel %vm2432, %v3432, 0.0
      %v3906 = vadd.f32 %v3904, %v3905
      %v3907 = vsel %vm2432, %v3433, 0.0
      %v3908 = vadd.f32 %v3906, %v3907
      %v3909 = vsel %vm2432, %v3434, 0.0
      %v3910 = vadd.f32 %v3908, %v3909
      %v3911 = vsel %vm2432, %v3435, 0.0
      %v3912 = vadd.f32 %v3910, %v3911
      %v3913 = vsel %vm2432, %v3436, 0.0
      %v3914 = vadd.f32 %v3912, %v3913
      %v3915 = vsel %vm2432, %v3437, 0.0
      %v3916 = vadd.f32 %v3914, %v3915
      %v3917 = vsel %vm2432, %v3438, 0.0
      %v3918 = vadd.f32 %v3916, %v3917
      %v3919 = vsel %vm2432, %v3439, 0.0
      %v3920 = vadd.f32 %v3918, %v3919
      %v3921 = vsel %vm2432, %v3440, 0.0
      %v3922 = vadd.f32 %v3920, %v3921
      %v3923 = vsel %vm2432, %v3441, 0.0
      %v3924 = vadd.f32 %v3922, %v3923
      %v3925 = vsel %vm2432, %v3442, 0.0
      %v3926 = vadd.f32 %v3924, %v3925
      %v3927 = vsel %vm2432, %v3443, 0.0
      %v3928 = vadd.f32 %v3926, %v3927
      %v3929 = vsel %vm2432, %v3444, 0.0
      %v3930 = vadd.f32 %v3928, %v3929
      %v3931 = vsel %vm2432, %v3445, 0.0
      %v3932 = vadd.f32 %v3930, %v3931
      %v3933 = vsel %vm2432, %v3446, 0.0
      %v3934 = vadd.f32 %v3932, %v3933
      %v3935 = vsel %vm2432, %v3447, 0.0
      %v3936 = vadd.f32 %v3934, %v3935
      %v3937 = vsel %vm2432, %v3448, 0.0
      %v3938 = vadd.f32 %v3936, %v3937
      %v3939 = vsel %vm2432, %v3449, 0.0
      %v3940 = vadd.f32 %v3938, %v3939
      %v3941 = vsel %vm2432, %v3450, 0.0
      %v3942 = vadd.f32 %v3940, %v3941
      %v3943 = vsel %vm2432, %v3451, 0.0
      %v3944 = vadd.f32 %v3942, %v3943
      %v3945 = vsel %vm2432, %v3452, 0.0
      %v3946 = vadd.f32 %v3944, %v3945
      %v3947 = vsel %vm2432, %v3453, 0.0
      %v3948 = vadd.f32 %v3946, %v3947
      %v3949 = vsel %vm2432, %v3454, 0.0
      %v3950 = vadd.f32 %v3948, %v3949
      %v3951 = vsel %vm2432, %v3455, 0.0
      %v3952 = vadd.f32 %v3950, %v3951
      %v3953 = vsel %vm2432, %v3456, 0.0
      %v3954 = vadd.f32 %v3952, %v3953
      %v3955 = vsel %vm2432, %v3457, 0.0
      %v3956 = vadd.f32 %v3954, %v3955
      %v3957 = vsel %vm2432, %v3458, 0.0
      %v3958 = vadd.f32 %v3956, %v3957
      %v3959 = vsel %vm2432, %v3459, 0.0
      %v3960 = vadd.f32 %v3958, %v3959
      %v3961 = vsel %vm2432, %v3460, 0.0
      %v3962 = vadd.f32 %v3960, %v3961
      %v3963 = vsel %vm2432, %v3461, 0.0
      %v3964 = vadd.f32 %v3962, %v3963
      %v3965 = vsel %vm2432, %v3462, 0.0
      %v3966 = vadd.f32 %v3964, %v3965
      %v3967 = vsel %vm2432, %v3463, 0.0
      %v3968 = vadd.f32 %v3966, %v3967
      %v3969 = vsel %vm2432, %v3464, 0.0
      %v3970 = vadd.f32 %v3968, %v3969
      %v3971 = vsel %vm2432, %v3465, 0.0
      %v3972 = vadd.f32 %v3970, %v3971
      %v3973 = vsel %vm2432, %v3466, 0.0
      %v3974 = vadd.f32 %v3972, %v3973
      %v3975 = vsel %vm2432, %v3467, 0.0
      %v3976 = vadd.f32 %v3974, %v3975
      %v3977 = vsel %vm2432, %v3468, 0.0
      %v3978 = vadd.f32 %v3976, %v3977
      %v3979 = vsel %vm2432, %v3469, 0.0
      %v3980 = vadd.f32 %v3978, %v3979
      %v3981 = vrot.slane %v3980, 4
      %v3982 = vadd.f32 %v3980, %v3981
      %v3983 = vrot.slane %v3982, 2
      %v3984 = vadd.f32 %v3982, %v3983
      %v3985 = vrot.slane %v3984, 1
      %v3986 = vadd.f32 %v3984, %v3985
      %v3987 = vmul.f32 %v3986, %v2956
      %v3988 = vadd.f32 %v3987, 1e-05
      %v3989 = vrsqrt.pop %v3988
      %v3990 = vmul.f32 %v3989, %v3988
      %v3991 = vmul.f32 %v3990, %v3989
      %v3992 = vmul.f32 0.5, %v3991
      %v3993 = vsub.f32 1.5, %v3992
      %v3994 = vmul.f32 %v3989, %v3993
      %vm3995 = vweird.f32 %v3988
      %vm3996 = vweird.f32 %v3989
      %vm3997 = vmor %vm3995, %vm3996
      %v3998 = vsel %vm3997, %v3989, %v3994
      %v3999 = vmul.f32 %v2958, %v3998
      %v4000 = vmul.f32 %v2959, %v3998
      %v4001 = vmul.f32 %v2960, %v3998
      %v4002 = vmul.f32 %v2961, %v3998
      %v4003 = vmul.f32 %v2962, %v3998
      %v4004 = vmul.f32 %v2963, %v3998
      %v4005 = vmul.f32 %v2964, %v3998
      %v4006 = vmul.f32 %v2965, %v3998
      %v4007 = vmul.f32 %v2966, %v3998
      %v4008 = vmul.f32 %v2967, %v3998
      %v4009 = vmul.f32 %v2968, %v3998
      %v4010 = vmul.f32 %v2969, %v3998
      %v4011 = vmul.f32 %v2970, %v3998
      %v4012 = vmul.f32 %v2971, %v3998
      %v4013 = vmul.f32 %v2972, %v3998
      %v4014 = vmul.f32 %v2973, %v3998
      %v4015 = vmul.f32 %v2974, %v3998
      %v4016 = vmul.f32 %v2975, %v3998
      %v4017 = vmul.f32 %v2976, %v3998
      %v4018 = vmul.f32 %v2977, %v3998
      %v4019 = vmul.f32 %v2978, %v3998
      %v4020 = vmul.f32 %v2979, %v3998
      %v4021 = vmul.f32 %v2980, %v3998
      %v4022 = vmul.f32 %v2981, %v3998
      %v4023 = vmul.f32 %v2982, %v3998
      %v4024 = vmul.f32 %v2983, %v3998
      %v4025 = vmul.f32 %v2984, %v3998
      %v4026 = vmul.f32 %v2985, %v3998
      %v4027 = vmul.f32 %v2986, %v3998
      %v4028 = vmul.f32 %v2987, %v3998
      %v4029 = vmul.f32 %v2988, %v3998
      %v4030 = vmul.f32 %v2989, %v3998
      %v4031 = vmul.f32 %v2990, %v3998
      %v4032 = vmul.f32 %v2991, %v3998
      %v4033 = vmul.f32 %v2992, %v3998
      %v4034 = vmul.f32 %v2993, %v3998
      %v4035 = vmul.f32 %v2994, %v3998
      %v4036 = vmul.f32 %v2995, %v3998
      %v4037 = vmul.f32 %v2996, %v3998
      %v4038 = vmul.f32 %v2997, %v3998
      %v4039 = vmul.f32 %v2998, %v3998
      %v4040 = vmul.f32 %v2999, %v3998
      %v4041 = vmul.f32 %v3000, %v3998
      %v4042 = vmul.f32 %v3001, %v3998
      %v4043 = vmul.f32 %v3002, %v3998
      %v4044 = vmul.f32 %v3003, %v3998
      %v4045 = vmul.f32 %v3004, %v3998
      %v4046 = vmul.f32 %v3005, %v3998
      %v4047 = vmul.f32 %v3006, %v3998
      %v4048 = vmul.f32 %v3007, %v3998
      %v4049 = vmul.f32 %v3008, %v3998
      %v4050 = vmul.f32 %v3009, %v3998
      %v4051 = vmul.f32 %v3010, %v3998
      %v4052 = vmul.f32 %v3011, %v3998
      %v4053 = vmul.f32 %v3012, %v3998
      %v4054 = vmul.f32 %v3013, %v3998
      %v4055 = vmul.f32 %v3014, %v3998
      %v4056 = vmul.f32 %v3015, %v3998
      %v4057 = vmul.f32 %v3016, %v3998
      %v4058 = vmul.f32 %v3017, %v3998
      %v4059 = vmul.f32 %v3018, %v3998
      %v4060 = vmul.f32 %v3019, %v3998
      %v4061 = vmul.f32 %v3020, %v3998
      %v4062 = vmul.f32 %v3021, %v3998
      %v4063 = vmul.f32 %v3022, %v3998
      %v4064 = vmul.f32 %v3023, %v3998
      %v4065 = vmul.f32 %v3024, %v3998
      %v4066 = vmul.f32 %v3025, %v3998
      %v4067 = vmul.f32 %v3026, %v3998
      %v4068 = vmul.f32 %v3027, %v3998
      %v4069 = vmul.f32 %v3028, %v3998
      %v4070 = vmul.f32 %v3029, %v3998
      %v4071 = vmul.f32 %v3030, %v3998
      %v4072 = vmul.f32 %v3031, %v3998
      %v4073 = vmul.f32 %v3032, %v3998
      %v4074 = vmul.f32 %v3033, %v3998
      %v4075 = vmul.f32 %v3034, %v3998
      %v4076 = vmul.f32 %v3035, %v3998
      %v4077 = vmul.f32 %v3036, %v3998
      %v4078 = vmul.f32 %v3037, %v3998
      %v4079 = vmul.f32 %v3038, %v3998
      %v4080 = vmul.f32 %v3039, %v3998
      %v4081 = vmul.f32 %v3040, %v3998
      %v4082 = vmul.f32 %v3041, %v3998
      %v4083 = vmul.f32 %v3042, %v3998
      %v4084 = vmul.f32 %v3043, %v3998
      %v4085 = vmul.f32 %v3044, %v3998
      %v4086 = vmul.f32 %v3045, %v3998
      %v4087 = vmul.f32 %v3046, %v3998
      %v4088 = vmul.f32 %v3047, %v3998
      %v4089 = vmul.f32 %v3048, %v3998
      %v4090 = vmul.f32 %v3049, %v3998
      %v4091 = vmul.f32 %v3050, %v3998
      %v4092 = vmul.f32 %v3051, %v3998
      %v4093 = vmul.f32 %v3052, %v3998
      %v4094 = vmul.f32 %v3053, %v3998
      %v4095 = vmul.f32 %v3054, %v3998
      %v4096 = vmul.f32 %v3055, %v3998
      %v4097 = vmul.f32 %v3056, %v3998
      %v4098 = vmul.f32 %v3057, %v3998
      %v4099 = vmul.f32 %v3058, %v3998
      %v4100 = vmul.f32 %v3059, %v3998
      %v4101 = vmul.f32 %v3060, %v3998
      %v4102 = vmul.f32 %v3061, %v3998
      %v4103 = vmul.f32 %v3062, %v3998
      %v4104 = vmul.f32 %v3063, %v3998
      %v4105 = vmul.f32 %v3064, %v3998
      %v4106 = vmul.f32 %v3065, %v3998
      %v4107 = vmul.f32 %v3066, %v3998
      %v4108 = vmul.f32 %v3067, %v3998
      %v4109 = vmul.f32 %v3068, %v3998
      %v4110 = vmul.f32 %v3069, %v3998
      %v4111 = vmul.f32 %v3070, %v3998
      %v4112 = vmul.f32 %v3071, %v3998
      %v4113 = vmul.f32 %v3072, %v3998
      %v4114 = vmul.f32 %v3073, %v3998
      %v4115 = vmul.f32 %v3074, %v3998
      %v4116 = vmul.f32 %v3075, %v3998
      %v4117 = vmul.f32 %v3076, %v3998
      %v4118 = vmul.f32 %v3077, %v3998
      %v4119 = vmul.f32 %v3078, %v3998
      %v4120 = vmul.f32 %v3079, %v3998
      %v4121 = vmul.f32 %v3080, %v3998
      %v4122 = vmul.f32 %v3081, %v3998
      %v4123 = vmul.f32 %v3082, %v3998
      %v4124 = vmul.f32 %v3083, %v3998
      %v4125 = vmul.f32 %v3084, %v3998
      %v4126 = vmul.f32 %v3085, %v3998
      %v4127 = vmul.f32 %v3086, %v3998
      %v4128 = vmul.f32 %v3087, %v3998
      %v4129 = vmul.f32 %v3088, %v3998
      %v4130 = vmul.f32 %v3089, %v3998
      %v4131 = vmul.f32 %v3090, %v3998
      %v4132 = vmul.f32 %v3091, %v3998
      %v4133 = vmul.f32 %v3092, %v3998
      %v4134 = vmul.f32 %v3093, %v3998
      %v4135 = vmul.f32 %v3094, %v3998
      %v4136 = vmul.f32 %v3095, %v3998
      %v4137 = vmul.f32 %v3096, %v3998
      %v4138 = vmul.f32 %v3097, %v3998
      %v4139 = vmul.f32 %v3098, %v3998
      %v4140 = vmul.f32 %v3099, %v3998
      %v4141 = vmul.f32 %v3100, %v3998
      %v4142 = vmul.f32 %v3101, %v3998
      %v4143 = vmul.f32 %v3102, %v3998
      %v4144 = vmul.f32 %v3103, %v3998
      %v4145 = vmul.f32 %v3104, %v3998
      %v4146 = vmul.f32 %v3105, %v3998
      %v4147 = vmul.f32 %v3106, %v3998
      %v4148 = vmul.f32 %v3107, %v3998
      %v4149 = vmul.f32 %v3108, %v3998
      %v4150 = vmul.f32 %v3109, %v3998
      %v4151 = vmul.f32 %v3110, %v3998
      %v4152 = vmul.f32 %v3111, %v3998
      %v4153 = vmul.f32 %v3112, %v3998
      %v4154 = vmul.f32 %v3113, %v3998
      %v4155 = vmul.f32 %v3114, %v3998
      %v4156 = vmul.f32 %v3115, %v3998
      %v4157 = vmul.f32 %v3116, %v3998
      %v4158 = vmul.f32 %v3117, %v3998
      %v4159 = vmul.f32 %v3118, %v3998
      %v4160 = vmul.f32 %v3119, %v3998
      %v4161 = vmul.f32 %v3120, %v3998
      %v4162 = vmul.f32 %v3121, %v3998
      %v4163 = vmul.f32 %v3122, %v3998
      %v4164 = vmul.f32 %v3123, %v3998
      %v4165 = vmul.f32 %v3124, %v3998
      %v4166 = vmul.f32 %v3125, %v3998
      %v4167 = vmul.f32 %v3126, %v3998
      %v4168 = vmul.f32 %v3127, %v3998
      %v4169 = vmul.f32 %v3128, %v3998
      %v4170 = vmul.f32 %v3129, %v3998
      %v4171 = vmul.f32 %v3130, %v3998
      %v4172 = vmul.f32 %v3131, %v3998
      %v4173 = vmul.f32 %v3132, %v3998
      %v4174 = vmul.f32 %v3133, %v3998
      %v4175 = vmul.f32 %v3134, %v3998
      %v4176 = vmul.f32 %v3135, %v3998
      %v4177 = vmul.f32 %v3136, %v3998
      %v4178 = vmul.f32 %v3137, %v3998
      %v4179 = vmul.f32 %v3138, %v3998
      %v4180 = vmul.f32 %v3139, %v3998
      %v4181 = vmul.f32 %v3140, %v3998
      %v4182 = vmul.f32 %v3141, %v3998
      %v4183 = vmul.f32 %v3142, %v3998
      %v4184 = vmul.f32 %v3143, %v3998
      %v4185 = vmul.f32 %v3144, %v3998
      %v4186 = vmul.f32 %v3145, %v3998
      %v4187 = vmul.f32 %v3146, %v3998
      %v4188 = vmul.f32 %v3147, %v3998
      %v4189 = vmul.f32 %v3148, %v3998
      %v4190 = vmul.f32 %v3149, %v3998
      %v4191 = vmul.f32 %v3150, %v3998
      %v4192 = vmul.f32 %v3151, %v3998
      %v4193 = vmul.f32 %v3152, %v3998
      %v4194 = vmul.f32 %v3153, %v3998
      %v4195 = vmul.f32 %v3154, %v3998
      %v4196 = vmul.f32 %v3155, %v3998
      %v4197 = vmul.f32 %v3156, %v3998
      %v4198 = vmul.f32 %v3157, %v3998
      %v4199 = vmul.f32 %v3158, %v3998
      %v4200 = vmul.f32 %v3159, %v3998
      %v4201 = vmul.f32 %v3160, %v3998
      %v4202 = vmul.f32 %v3161, %v3998
      %v4203 = vmul.f32 %v3162, %v3998
      %v4204 = vmul.f32 %v3163, %v3998
      %v4205 = vmul.f32 %v3164, %v3998
      %v4206 = vmul.f32 %v3165, %v3998
      %v4207 = vmul.f32 %v3166, %v3998
      %v4208 = vmul.f32 %v3167, %v3998
      %v4209 = vmul.f32 %v3168, %v3998
      %v4210 = vmul.f32 %v3169, %v3998
      %v4211 = vmul.f32 %v3170, %v3998
      %v4212 = vmul.f32 %v3171, %v3998
      %v4213 = vmul.f32 %v3172, %v3998
      %v4214 = vmul.f32 %v3173, %v3998
      %v4215 = vmul.f32 %v3174, %v3998
      %v4216 = vmul.f32 %v3175, %v3998
      %v4217 = vmul.f32 %v3176, %v3998
      %v4218 = vmul.f32 %v3177, %v3998
      %v4219 = vmul.f32 %v3178, %v3998
      %v4220 = vmul.f32 %v3179, %v3998
      %v4221 = vmul.f32 %v3180, %v3998
      %v4222 = vmul.f32 %v3181, %v3998
      %v4223 = vmul.f32 %v3182, %v3998
      %v4224 = vmul.f32 %v3183, %v3998
      %v4225 = vmul.f32 %v3184, %v3998
      %v4226 = vmul.f32 %v3185, %v3998
      %v4227 = vmul.f32 %v3186, %v3998
      %v4228 = vmul.f32 %v3187, %v3998
      %v4229 = vmul.f32 %v3188, %v3998
      %v4230 = vmul.f32 %v3189, %v3998
      %v4231 = vmul.f32 %v3190, %v3998
      %v4232 = vmul.f32 %v3191, %v3998
      %v4233 = vmul.f32 %v3192, %v3998
      %v4234 = vmul.f32 %v3193, %v3998
      %v4235 = vmul.f32 %v3194, %v3998
      %v4236 = vmul.f32 %v3195, %v3998
      %v4237 = vmul.f32 %v3196, %v3998
      %v4238 = vmul.f32 %v3197, %v3998
      %v4239 = vmul.f32 %v3198, %v3998
      %v4240 = vmul.f32 %v3199, %v3998
      %v4241 = vmul.f32 %v3200, %v3998
      %v4242 = vmul.f32 %v3201, %v3998
      %v4243 = vmul.f32 %v3202, %v3998
      %v4244 = vmul.f32 %v3203, %v3998
      %v4245 = vmul.f32 %v3204, %v3998
      %v4246 = vmul.f32 %v3205, %v3998
      %v4247 = vmul.f32 %v3206, %v3998
      %v4248 = vmul.f32 %v3207, %v3998
      %v4249 = vmul.f32 %v3208, %v3998
      %v4250 = vmul.f32 %v3209, %v3998
      %v4251 = vmul.f32 %v3210, %v3998
      %v4252 = vmul.f32 %v3211, %v3998
      %v4253 = vmul.f32 %v3212, %v3998
      %v4254 = vmul.f32 %v3213, %v3998
      %v4256 = vperm.slane %v2430, 0
      %v4258 = vmul.f32 %v3999, %v4256
      %v4259 = vmul.f32 %v4000, %v4256
      %v4260 = vmul.f32 %v4001, %v4256
      %v4261 = vmul.f32 %v4002, %v4256
      %v4262 = vmul.f32 %v4003, %v4256
      %v4263 = vmul.f32 %v4004, %v4256
      %v4264 = vmul.f32 %v4005, %v4256
      %v4265 = vmul.f32 %v4006, %v4256
      %v4266 = vmul.f32 %v4007, %v4256
      %v4267 = vmul.f32 %v4008, %v4256
      %v4268 = vmul.f32 %v4009, %v4256
      %v4269 = vmul.f32 %v4010, %v4256
      %v4270 = vmul.f32 %v4011, %v4256
      %v4271 = vmul.f32 %v4012, %v4256
      %v4272 = vmul.f32 %v4013, %v4256
      %v4273 = vmul.f32 %v4014, %v4256
      %v4274 = vmul.f32 %v4015, %v4256
      %v4275 = vmul.f32 %v4016, %v4256
      %v4276 = vmul.f32 %v4017, %v4256
      %v4277 = vmul.f32 %v4018, %v4256
      %v4278 = vmul.f32 %v4019, %v4256
      %v4279 = vmul.f32 %v4020, %v4256
      %v4280 = vmul.f32 %v4021, %v4256
      %v4281 = vmul.f32 %v4022, %v4256
      %v4282 = vmul.f32 %v4023, %v4256
      %v4283 = vmul.f32 %v4024, %v4256
      %v4284 = vmul.f32 %v4025, %v4256
      %v4285 = vmul.f32 %v4026, %v4256
      %v4286 = vmul.f32 %v4027, %v4256
      %v4287 = vmul.f32 %v4028, %v4256
      %v4288 = vmul.f32 %v4029, %v4256
      %v4289 = vmul.f32 %v4030, %v4256
      %v4290 = vmul.f32 %v4031, %v4256
      %v4291 = vmul.f32 %v4032, %v4256
      %v4292 = vmul.f32 %v4033, %v4256
      %v4293 = vmul.f32 %v4034, %v4256
      %v4294 = vmul.f32 %v4035, %v4256
      %v4295 = vmul.f32 %v4036, %v4256
      %v4296 = vmul.f32 %v4037, %v4256
      %v4297 = vmul.f32 %v4038, %v4256
      %v4298 = vmul.f32 %v4039, %v4256
      %v4299 = vmul.f32 %v4040, %v4256
      %v4300 = vmul.f32 %v4041, %v4256
      %v4301 = vmul.f32 %v4042, %v4256
      %v4302 = vmul.f32 %v4043, %v4256
      %v4303 = vmul.f32 %v4044, %v4256
      %v4304 = vmul.f32 %v4045, %v4256
      %v4305 = vmul.f32 %v4046, %v4256
      %v4306 = vmul.f32 %v4047, %v4256
      %v4307 = vmul.f32 %v4048, %v4256
      %v4308 = vmul.f32 %v4049, %v4256
      %v4309 = vmul.f32 %v4050, %v4256
      %v4310 = vmul.f32 %v4051, %v4256
      %v4311 = vmul.f32 %v4052, %v4256
      %v4312 = vmul.f32 %v4053, %v4256
      %v4313 = vmul.f32 %v4054, %v4256
      %v4314 = vmul.f32 %v4055, %v4256
      %v4315 = vmul.f32 %v4056, %v4256
      %v4316 = vmul.f32 %v4057, %v4256
      %v4317 = vmul.f32 %v4058, %v4256
      %v4318 = vmul.f32 %v4059, %v4256
      %v4319 = vmul.f32 %v4060, %v4256
      %v4320 = vmul.f32 %v4061, %v4256
      %v4321 = vmul.f32 %v4062, %v4256
      %v4322 = vmul.f32 %v4063, %v4256
      %v4323 = vmul.f32 %v4064, %v4256
      %v4324 = vmul.f32 %v4065, %v4256
      %v4325 = vmul.f32 %v4066, %v4256
      %v4326 = vmul.f32 %v4067, %v4256
      %v4327 = vmul.f32 %v4068, %v4256
      %v4328 = vmul.f32 %v4069, %v4256
      %v4329 = vmul.f32 %v4070, %v4256
      %v4330 = vmul.f32 %v4071, %v4256
      %v4331 = vmul.f32 %v4072, %v4256
      %v4332 = vmul.f32 %v4073, %v4256
      %v4333 = vmul.f32 %v4074, %v4256
      %v4334 = vmul.f32 %v4075, %v4256
      %v4335 = vmul.f32 %v4076, %v4256
      %v4336 = vmul.f32 %v4077, %v4256
      %v4337 = vmul.f32 %v4078, %v4256
      %v4338 = vmul.f32 %v4079, %v4256
      %v4339 = vmul.f32 %v4080, %v4256
      %v4340 = vmul.f32 %v4081, %v4256
      %v4341 = vmul.f32 %v4082, %v4256
      %v4342 = vmul.f32 %v4083, %v4256
      %v4343 = vmul.f32 %v4084, %v4256
      %v4344 = vmul.f32 %v4085, %v4256
      %v4345 = vmul.f32 %v4086, %v4256
      %v4346 = vmul.f32 %v4087, %v4256
      %v4347 = vmul.f32 %v4088, %v4256
      %v4348 = vmul.f32 %v4089, %v4256
      %v4349 = vmul.f32 %v4090, %v4256
      %v4350 = vmul.f32 %v4091, %v4256
      %v4351 = vmul.f32 %v4092, %v4256
      %v4352 = vmul.f32 %v4093, %v4256
      %v4353 = vmul.f32 %v4094, %v4256
      %v4354 = vmul.f32 %v4095, %v4256
      %v4355 = vmul.f32 %v4096, %v4256
      %v4356 = vmul.f32 %v4097, %v4256
      %v4357 = vmul.f32 %v4098, %v4256
      %v4358 = vmul.f32 %v4099, %v4256
      %v4359 = vmul.f32 %v4100, %v4256
      %v4360 = vmul.f32 %v4101, %v4256
      %v4361 = vmul.f32 %v4102, %v4256
      %v4362 = vmul.f32 %v4103, %v4256
      %v4363 = vmul.f32 %v4104, %v4256
      %v4364 = vmul.f32 %v4105, %v4256
      %v4365 = vmul.f32 %v4106, %v4256
      %v4366 = vmul.f32 %v4107, %v4256
      %v4367 = vmul.f32 %v4108, %v4256
      %v4368 = vmul.f32 %v4109, %v4256
      %v4369 = vmul.f32 %v4110, %v4256
      %v4370 = vmul.f32 %v4111, %v4256
      %v4371 = vmul.f32 %v4112, %v4256
      %v4372 = vmul.f32 %v4113, %v4256
      %v4373 = vmul.f32 %v4114, %v4256
      %v4374 = vmul.f32 %v4115, %v4256
      %v4375 = vmul.f32 %v4116, %v4256
      %v4376 = vmul.f32 %v4117, %v4256
      %v4377 = vmul.f32 %v4118, %v4256
      %v4378 = vmul.f32 %v4119, %v4256
      %v4379 = vmul.f32 %v4120, %v4256
      %v4380 = vmul.f32 %v4121, %v4256
      %v4381 = vmul.f32 %v4122, %v4256
      %v4382 = vmul.f32 %v4123, %v4256
      %v4383 = vmul.f32 %v4124, %v4256
      %v4384 = vmul.f32 %v4125, %v4256
      %v4385 = vmul.f32 %v4126, %v4256
      %v4386 = vmul.f32 %v4127, %v4256
      %v4387 = vmul.f32 %v4128, %v4256
      %v4388 = vmul.f32 %v4129, %v4256
      %v4389 = vmul.f32 %v4130, %v4256
      %v4390 = vmul.f32 %v4131, %v4256
      %v4391 = vmul.f32 %v4132, %v4256
      %v4392 = vmul.f32 %v4133, %v4256
      %v4393 = vmul.f32 %v4134, %v4256
      %v4394 = vmul.f32 %v4135, %v4256
      %v4395 = vmul.f32 %v4136, %v4256
      %v4396 = vmul.f32 %v4137, %v4256
      %v4397 = vmul.f32 %v4138, %v4256
      %v4398 = vmul.f32 %v4139, %v4256
      %v4399 = vmul.f32 %v4140, %v4256
      %v4400 = vmul.f32 %v4141, %v4256
      %v4401 = vmul.f32 %v4142, %v4256
      %v4402 = vmul.f32 %v4143, %v4256
      %v4403 = vmul.f32 %v4144, %v4256
      %v4404 = vmul.f32 %v4145, %v4256
      %v4405 = vmul.f32 %v4146, %v4256
      %v4406 = vmul.f32 %v4147, %v4256
      %v4407 = vmul.f32 %v4148, %v4256
      %v4408 = vmul.f32 %v4149, %v4256
      %v4409 = vmul.f32 %v4150, %v4256
      %v4410 = vmul.f32 %v4151, %v4256
      %v4411 = vmul.f32 %v4152, %v4256
      %v4412 = vmul.f32 %v4153, %v4256
      %v4413 = vmul.f32 %v4154, %v4256
      %v4414 = vmul.f32 %v4155, %v4256
      %v4415 = vmul.f32 %v4156, %v4256
      %v4416 = vmul.f32 %v4157, %v4256
      %v4417 = vmul.f32 %v4158, %v4256
      %v4418 = vmul.f32 %v4159, %v4256
      %v4419 = vmul.f32 %v4160, %v4256
      %v4420 = vmul.f32 %v4161, %v4256
      %v4421 = vmul.f32 %v4162, %v4256
      %v4422 = vmul.f32 %v4163, %v4256
      %v4423 = vmul.f32 %v4164, %v4256
      %v4424 = vmul.f32 %v4165, %v4256
      %v4425 = vmul.f32 %v4166, %v4256
      %v4426 = vmul.f32 %v4167, %v4256
      %v4427 = vmul.f32 %v4168, %v4256
      %v4428 = vmul.f32 %v4169, %v4256
      %v4429 = vmul.f32 %v4170, %v4256
      %v4430 = vmul.f32 %v4171, %v4256
      %v4431 = vmul.f32 %v4172, %v4256
      %v4432 = vmul.f32 %v4173, %v4256
      %v4433 = vmul.f32 %v4174, %v4256
      %v4434 = vmul.f32 %v4175, %v4256
      %v4435 = vmul.f32 %v4176, %v4256
      %v4436 = vmul.f32 %v4177, %v4256
      %v4437 = vmul.f32 %v4178, %v4256
      %v4438 = vmul.f32 %v4179, %v4256
      %v4439 = vmul.f32 %v4180, %v4256
      %v4440 = vmul.f32 %v4181, %v4256
      %v4441 = vmul.f32 %v4182, %v4256
      %v4442 = vmul.f32 %v4183, %v4256
      %v4443 = vmul.f32 %v4184, %v4256
      %v4444 = vmul.f32 %v4185, %v4256
      %v4445 = vmul.f32 %v4186, %v4256
      %v4446 = vmul.f32 %v4187, %v4256
      %v4447 = vmul.f32 %v4188, %v4256
      %v4448 = vmul.f32 %v4189, %v4256
      %v4449 = vmul.f32 %v4190, %v4256
      %v4450 = vmul.f32 %v4191, %v4256
      %v4451 = vmul.f32 %v4192, %v4256
      %v4452 = vmul.f32 %v4193, %v4256
      %v4453 = vmul.f32 %v4194, %v4256
      %v4454 = vmul.f32 %v4195, %v4256
      %v4455 = vmul.f32 %v4196, %v4256
      %v4456 = vmul.f32 %v4197, %v4256
      %v4457 = vmul.f32 %v4198, %v4256
      %v4458 = vmul.f32 %v4199, %v4256
      %v4459 = vmul.f32 %v4200, %v4256
      %v4460 = vmul.f32 %v4201, %v4256
      %v4461 = vmul.f32 %v4202, %v4256
      %v4462 = vmul.f32 %v4203, %v4256
      %v4463 = vmul.f32 %v4204, %v4256
      %v4464 = vmul.f32 %v4205, %v4256
      %v4465 = vmul.f32 %v4206, %v4256
      %v4466 = vmul.f32 %v4207, %v4256
      %v4467 = vmul.f32 %v4208, %v4256
      %v4468 = vmul.f32 %v4209, %v4256
      %v4469 = vmul.f32 %v4210, %v4256
      %v4470 = vmul.f32 %v4211, %v4256
      %v4471 = vmul.f32 %v4212, %v4256
      %v4472 = vmul.f32 %v4213, %v4256
      %v4473 = vmul.f32 %v4214, %v4256
      %v4474 = vmul.f32 %v4215, %v4256
      %v4475 = vmul.f32 %v4216, %v4256
      %v4476 = vmul.f32 %v4217, %v4256
      %v4477 = vmul.f32 %v4218, %v4256
      %v4478 = vmul.f32 %v4219, %v4256
      %v4479 = vmul.f32 %v4220, %v4256
      %v4480 = vmul.f32 %v4221, %v4256
      %v4481 = vmul.f32 %v4222, %v4256
      %v4482 = vmul.f32 %v4223, %v4256
      %v4483 = vmul.f32 %v4224, %v4256
      %v4484 = vmul.f32 %v4225, %v4256
      %v4485 = vmul.f32 %v4226, %v4256
      %v4486 = vmul.f32 %v4227, %v4256
      %v4487 = vmul.f32 %v4228, %v4256
      %v4488 = vmul.f32 %v4229, %v4256
      %v4489 = vmul.f32 %v4230, %v4256
      %v4490 = vmul.f32 %v4231, %v4256
      %v4491 = vmul.f32 %v4232, %v4256
      %v4492 = vmul.f32 %v4233, %v4256
      %v4493 = vmul.f32 %v4234, %v4256
      %v4494 = vmul.f32 %v4235, %v4256
      %v4495 = vmul.f32 %v4236, %v4256
      %v4496 = vmul.f32 %v4237, %v4256
      %v4497 = vmul.f32 %v4238, %v4256
      %v4498 = vmul.f32 %v4239, %v4256
      %v4499 = vmul.f32 %v4240, %v4256
      %v4500 = vmul.f32 %v4241, %v4256
      %v4501 = vmul.f32 %v4242, %v4256
      %v4502 = vmul.f32 %v4243, %v4256
      %v4503 = vmul.f32 %v4244, %v4256
      %v4504 = vmul.f32 %v4245, %v4256
      %v4505 = vmul.f32 %v4246, %v4256
      %v4506 = vmul.f32 %v4247, %v4256
      %v4507 = vmul.f32 %v4248, %v4256
      %v4508 = vmul.f32 %v4249, %v4256
      %v4509 = vmul.f32 %v4250, %v4256
      %v4510 = vmul.f32 %v4251, %v4256
      %v4511 = vmul.f32 %v4252, %v4256
      %v4512 = vmul.f32 %v4253, %v4256
      %v4513 = vmul.f32 %v4254, %v4256
      %v4515 = vperm.slane %v2431, 0
      %v4517 = vadd.f32 %v4258, %v4515
      %v4518 = vadd.f32 %v4259, %v4515
      %v4519 = vadd.f32 %v4260, %v4515
      %v4520 = vadd.f32 %v4261, %v4515
      %v4521 = vadd.f32 %v4262, %v4515
      %v4522 = vadd.f32 %v4263, %v4515
      %v4523 = vadd.f32 %v4264, %v4515
      %v4524 = vadd.f32 %v4265, %v4515
      %v4525 = vadd.f32 %v4266, %v4515
      %v4526 = vadd.f32 %v4267, %v4515
      %v4527 = vadd.f32 %v4268, %v4515
      %v4528 = vadd.f32 %v4269, %v4515
      %v4529 = vadd.f32 %v4270, %v4515
      %v4530 = vadd.f32 %v4271, %v4515
      %v4531 = vadd.f32 %v4272, %v4515
      %v4532 = vadd.f32 %v4273, %v4515
      %v4533 = vadd.f32 %v4274, %v4515
      %v4534 = vadd.f32 %v4275, %v4515
      %v4535 = vadd.f32 %v4276, %v4515
      %v4536 = vadd.f32 %v4277, %v4515
      %v4537 = vadd.f32 %v4278, %v4515
      %v4538 = vadd.f32 %v4279, %v4515
      %v4539 = vadd.f32 %v4280, %v4515
      %v4540 = vadd.f32 %v4281, %v4515
      %v4541 = vadd.f32 %v4282, %v4515
      %v4542 = vadd.f32 %v4283, %v4515
      %v4543 = vadd.f32 %v4284, %v4515
      %v4544 = vadd.f32 %v4285, %v4515
      %v4545 = vadd.f32 %v4286, %v4515
      %v4546 = vadd.f32 %v4287, %v4515
      %v4547 = vadd.f32 %v4288, %v4515
      %v4548 = vadd.f32 %v4289, %v4515
      %v4549 = vadd.f32 %v4290, %v4515
      %v4550 = vadd.f32 %v4291, %v4515
      %v4551 = vadd.f32 %v4292, %v4515
      %v4552 = vadd.f32 %v4293, %v4515
      %v4553 = vadd.f32 %v4294, %v4515
      %v4554 = vadd.f32 %v4295, %v4515
      %v4555 = vadd.f32 %v4296, %v4515
      %v4556 = vadd.f32 %v4297, %v4515
      %v4557 = vadd.f32 %v4298, %v4515
      %v4558 = vadd.f32 %v4299, %v4515
      %v4559 = vadd.f32 %v4300, %v4515
      %v4560 = vadd.f32 %v4301, %v4515
      %v4561 = vadd.f32 %v4302, %v4515
      %v4562 = vadd.f32 %v4303, %v4515
      %v4563 = vadd.f32 %v4304, %v4515
      %v4564 = vadd.f32 %v4305, %v4515
      %v4565 = vadd.f32 %v4306, %v4515
      %v4566 = vadd.f32 %v4307, %v4515
      %v4567 = vadd.f32 %v4308, %v4515
      %v4568 = vadd.f32 %v4309, %v4515
      %v4569 = vadd.f32 %v4310, %v4515
      %v4570 = vadd.f32 %v4311, %v4515
      %v4571 = vadd.f32 %v4312, %v4515
      %v4572 = vadd.f32 %v4313, %v4515
      %v4573 = vadd.f32 %v4314, %v4515
      %v4574 = vadd.f32 %v4315, %v4515
      %v4575 = vadd.f32 %v4316, %v4515
      %v4576 = vadd.f32 %v4317, %v4515
      %v4577 = vadd.f32 %v4318, %v4515
      %v4578 = vadd.f32 %v4319, %v4515
      %v4579 = vadd.f32 %v4320, %v4515
      %v4580 = vadd.f32 %v4321, %v4515
      %v4581 = vadd.f32 %v4322, %v4515
      %v4582 = vadd.f32 %v4323, %v4515
      %v4583 = vadd.f32 %v4324, %v4515
      %v4584 = vadd.f32 %v4325, %v4515
      %v4585 = vadd.f32 %v4326, %v4515
      %v4586 = vadd.f32 %v4327, %v4515
      %v4587 = vadd.f32 %v4328, %v4515
      %v4588 = vadd.f32 %v4329, %v4515
      %v4589 = vadd.f32 %v4330, %v4515
      %v4590 = vadd.f32 %v4331, %v4515
      %v4591 = vadd.f32 %v4332, %v4515
      %v4592 = vadd.f32 %v4333, %v4515
      %v4593 = vadd.f32 %v4334, %v4515
      %v4594 = vadd.f32 %v4335, %v4515
      %v4595 = vadd.f32 %v4336, %v4515
      %v4596 = vadd.f32 %v4337, %v4515
      %v4597 = vadd.f32 %v4338, %v4515
      %v4598 = vadd.f32 %v4339, %v4515
      %v4599 = vadd.f32 %v4340, %v4515
      %v4600 = vadd.f32 %v4341, %v4515
      %v4601 = vadd.f32 %v4342, %v4515
      %v4602 = vadd.f32 %v4343, %v4515
      %v4603 = vadd.f32 %v4344, %v4515
      %v4604 = vadd.f32 %v4345, %v4515
      %v4605 = vadd.f32 %v4346, %v4515
      %v4606 = vadd.f32 %v4347, %v4515
      %v4607 = vadd.f32 %v4348, %v4515
      %v4608 = vadd.f32 %v4349, %v4515
      %v4609 = vadd.f32 %v4350, %v4515
      %v4610 = vadd.f32 %v4351, %v4515
      %v4611 = vadd.f32 %v4352, %v4515
      %v4612 = vadd.f32 %v4353, %v4515
      %v4613 = vadd.f32 %v4354, %v4515
      %v4614 = vadd.f32 %v4355, %v4515
      %v4615 = vadd.f32 %v4356, %v4515
      %v4616 = vadd.f32 %v4357, %v4515
      %v4617 = vadd.f32 %v4358, %v4515
      %v4618 = vadd.f32 %v4359, %v4515
      %v4619 = vadd.f32 %v4360, %v4515
      %v4620 = vadd.f32 %v4361, %v4515
      %v4621 = vadd.f32 %v4362, %v4515
      %v4622 = vadd.f32 %v4363, %v4515
      %v4623 = vadd.f32 %v4364, %v4515
      %v4624 = vadd.f32 %v4365, %v4515
      %v4625 = vadd.f32 %v4366, %v4515
      %v4626 = vadd.f32 %v4367, %v4515
      %v4627 = vadd.f32 %v4368, %v4515
      %v4628 = vadd.f32 %v4369, %v4515
      %v4629 = vadd.f32 %v4370, %v4515
      %v4630 = vadd.f32 %v4371, %v4515
      %v4631 = vadd.f32 %v4372, %v4515
      %v4632 = vadd.f32 %v4373, %v4515
      %v4633 = vadd.f32 %v4374, %v4515
      %v4634 = vadd.f32 %v4375, %v4515
      %v4635 = vadd.f32 %v4376, %v4515
      %v4636 = vadd.f32 %v4377, %v4515
      %v4637 = vadd.f32 %v4378, %v4515
      %v4638 = vadd.f32 %v4379, %v4515
      %v4639 = vadd.f32 %v4380, %v4515
      %v4640 = vadd.f32 %v4381, %v4515
      %v4641 = vadd.f32 %v4382, %v4515
      %v4642 = vadd.f32 %v4383, %v4515
      %v4643 = vadd.f32 %v4384, %v4515
      %v4644 = vadd.f32 %v4385, %v4515
      %v4645 = vadd.f32 %v4386, %v4515
      %v4646 = vadd.f32 %v4387, %v4515
      %v4647 = vadd.f32 %v4388, %v4515
      %v4648 = vadd.f32 %v4389, %v4515
      %v4649 = vadd.f32 %v4390, %v4515
      %v4650 = vadd.f32 %v4391, %v4515
      %v4651 = vadd.f32 %v4392, %v4515
      %v4652 = vadd.f32 %v4393, %v4515
      %v4653 = vadd.f32 %v4394, %v4515
      %v4654 = vadd.f32 %v4395, %v4515
      %v4655 = vadd.f32 %v4396, %v4515
      %v4656 = vadd.f32 %v4397, %v4515
      %v4657 = vadd.f32 %v4398, %v4515
      %v4658 = vadd.f32 %v4399, %v4515
      %v4659 = vadd.f32 %v4400, %v4515
      %v4660 = vadd.f32 %v4401, %v4515
      %v4661 = vadd.f32 %v4402, %v4515
      %v4662 = vadd.f32 %v4403, %v4515
      %v4663 = vadd.f32 %v4404, %v4515
      %v4664 = vadd.f32 %v4405, %v4515
      %v4665 = vadd.f32 %v4406, %v4515
      %v4666 = vadd.f32 %v4407, %v4515
      %v4667 = vadd.f32 %v4408, %v4515
      %v4668 = vadd.f32 %v4409, %v4515
      %v4669 = vadd.f32 %v4410, %v4515
      %v4670 = vadd.f32 %v4411, %v4515
      %v4671 = vadd.f32 %v4412, %v4515
      %v4672 = vadd.f32 %v4413, %v4515
      %v4673 = vadd.f32 %v4414, %v4515
      %v4674 = vadd.f32 %v4415, %v4515
      %v4675 = vadd.f32 %v4416, %v4515
      %v4676 = vadd.f32 %v4417, %v4515
      %v4677 = vadd.f32 %v4418, %v4515
      %v4678 = vadd.f32 %v4419, %v4515
      %v4679 = vadd.f32 %v4420, %v4515
      %v4680 = vadd.f32 %v4421, %v4515
      %v4681 = vadd.f32 %v4422, %v4515
      %v4682 = vadd.f32 %v4423, %v4515
      %v4683 = vadd.f32 %v4424, %v4515
      %v4684 = vadd.f32 %v4425, %v4515
      %v4685 = vadd.f32 %v4426, %v4515
      %v4686 = vadd.f32 %v4427, %v4515
      %v4687 = vadd.f32 %v4428, %v4515
      %v4688 = vadd.f32 %v4429, %v4515
      %v4689 = vadd.f32 %v4430, %v4515
      %v4690 = vadd.f32 %v4431, %v4515
      %v4691 = vadd.f32 %v4432, %v4515
      %v4692 = vadd.f32 %v4433, %v4515
      %v4693 = vadd.f32 %v4434, %v4515
      %v4694 = vadd.f32 %v4435, %v4515
      %v4695 = vadd.f32 %v4436, %v4515
      %v4696 = vadd.f32 %v4437, %v4515
      %v4697 = vadd.f32 %v4438, %v4515
      %v4698 = vadd.f32 %v4439, %v4515
      %v4699 = vadd.f32 %v4440, %v4515
      %v4700 = vadd.f32 %v4441, %v4515
      %v4701 = vadd.f32 %v4442, %v4515
      %v4702 = vadd.f32 %v4443, %v4515
      %v4703 = vadd.f32 %v4444, %v4515
      %v4704 = vadd.f32 %v4445, %v4515
      %v4705 = vadd.f32 %v4446, %v4515
      %v4706 = vadd.f32 %v4447, %v4515
      %v4707 = vadd.f32 %v4448, %v4515
      %v4708 = vadd.f32 %v4449, %v4515
      %v4709 = vadd.f32 %v4450, %v4515
      %v4710 = vadd.f32 %v4451, %v4515
      %v4711 = vadd.f32 %v4452, %v4515
      %v4712 = vadd.f32 %v4453, %v4515
      %v4713 = vadd.f32 %v4454, %v4515
      %v4714 = vadd.f32 %v4455, %v4515
      %v4715 = vadd.f32 %v4456, %v4515
      %v4716 = vadd.f32 %v4457, %v4515
      %v4717 = vadd.f32 %v4458, %v4515
      %v4718 = vadd.f32 %v4459, %v4515
      %v4719 = vadd.f32 %v4460, %v4515
      %v4720 = vadd.f32 %v4461, %v4515
      %v4721 = vadd.f32 %v4462, %v4515
      %v4722 = vadd.f32 %v4463, %v4515
      %v4723 = vadd.f32 %v4464, %v4515
      %v4724 = vadd.f32 %v4465, %v4515
      %v4725 = vadd.f32 %v4466, %v4515
      %v4726 = vadd.f32 %v4467, %v4515
      %v4727 = vadd.f32 %v4468, %v4515
      %v4728 = vadd.f32 %v4469, %v4515
      %v4729 = vadd.f32 %v4470, %v4515
      %v4730 = vadd.f32 %v4471, %v4515
      %v4731 = vadd.f32 %v4472, %v4515
      %v4732 = vadd.f32 %v4473, %v4515
      %v4733 = vadd.f32 %v4474, %v4515
      %v4734 = vadd.f32 %v4475, %v4515
      %v4735 = vadd.f32 %v4476, %v4515
      %v4736 = vadd.f32 %v4477, %v4515
      %v4737 = vadd.f32 %v4478, %v4515
      %v4738 = vadd.f32 %v4479, %v4515
      %v4739 = vadd.f32 %v4480, %v4515
      %v4740 = vadd.f32 %v4481, %v4515
      %v4741 = vadd.f32 %v4482, %v4515
      %v4742 = vadd.f32 %v4483, %v4515
      %v4743 = vadd.f32 %v4484, %v4515
      %v4744 = vadd.f32 %v4485, %v4515
      %v4745 = vadd.f32 %v4486, %v4515
      %v4746 = vadd.f32 %v4487, %v4515
      %v4747 = vadd.f32 %v4488, %v4515
      %v4748 = vadd.f32 %v4489, %v4515
      %v4749 = vadd.f32 %v4490, %v4515
      %v4750 = vadd.f32 %v4491, %v4515
      %v4751 = vadd.f32 %v4492, %v4515
      %v4752 = vadd.f32 %v4493, %v4515
      %v4753 = vadd.f32 %v4494, %v4515
      %v4754 = vadd.f32 %v4495, %v4515
      %v4755 = vadd.f32 %v4496, %v4515
      %v4756 = vadd.f32 %v4497, %v4515
      %v4757 = vadd.f32 %v4498, %v4515
      %v4758 = vadd.f32 %v4499, %v4515
      %v4759 = vadd.f32 %v4500, %v4515
      %v4760 = vadd.f32 %v4501, %v4515
      %v4761 = vadd.f32 %v4502, %v4515
      %v4762 = vadd.f32 %v4503, %v4515
      %v4763 = vadd.f32 %v4504, %v4515
      %v4764 = vadd.f32 %v4505, %v4515
      %v4765 = vadd.f32 %v4506, %v4515
      %v4766 = vadd.f32 %v4507, %v4515
      %v4767 = vadd.f32 %v4508, %v4515
      %v4768 = vadd.f32 %v4509, %v4515
      %v4769 = vadd.f32 %v4510, %v4515
      %v4770 = vadd.f32 %v4511, %v4515
      %v4771 = vadd.f32 %v4512, %v4515
      %v4772 = vadd.f32 %v4513, %v4515
      %v4773 = vmax.f32 %v4517, 0.0
      %v4774 = vmax.f32 %v4518, 0.0
      %v4775 = vmax.f32 %v4519, 0.0
      %v4776 = vmax.f32 %v4520, 0.0
      %v4777 = vmax.f32 %v4521, 0.0
      %v4778 = vmax.f32 %v4522, 0.0
      %v4779 = vmax.f32 %v4523, 0.0
      %v4780 = vmax.f32 %v4524, 0.0
      %v4781 = vmax.f32 %v4525, 0.0
      %v4782 = vmax.f32 %v4526, 0.0
      %v4783 = vmax.f32 %v4527, 0.0
      %v4784 = vmax.f32 %v4528, 0.0
      %v4785 = vmax.f32 %v4529, 0.0
      %v4786 = vmax.f32 %v4530, 0.0
      %v4787 = vmax.f32 %v4531, 0.0
      %v4788 = vmax.f32 %v4532, 0.0
      %v4789 = vmax.f32 %v4533, 0.0
      %v4790 = vmax.f32 %v4534, 0.0
      %v4791 = vmax.f32 %v4535, 0.0
      %v4792 = vmax.f32 %v4536, 0.0
      %v4793 = vmax.f32 %v4537, 0.0
      %v4794 = vmax.f32 %v4538, 0.0
      %v4795 = vmax.f32 %v4539, 0.0
      %v4796 = vmax.f32 %v4540, 0.0
      %v4797 = vmax.f32 %v4541, 0.0
      %v4798 = vmax.f32 %v4542, 0.0
      %v4799 = vmax.f32 %v4543, 0.0
      %v4800 = vmax.f32 %v4544, 0.0
      %v4801 = vmax.f32 %v4545, 0.0
      %v4802 = vmax.f32 %v4546, 0.0
      %v4803 = vmax.f32 %v4547, 0.0
      %v4804 = vmax.f32 %v4548, 0.0
      %v4805 = vmax.f32 %v4549, 0.0
      %v4806 = vmax.f32 %v4550, 0.0
      %v4807 = vmax.f32 %v4551, 0.0
      %v4808 = vmax.f32 %v4552, 0.0
      %v4809 = vmax.f32 %v4553, 0.0
      %v4810 = vmax.f32 %v4554, 0.0
      %v4811 = vmax.f32 %v4555, 0.0
      %v4812 = vmax.f32 %v4556, 0.0
      %v4813 = vmax.f32 %v4557, 0.0
      %v4814 = vmax.f32 %v4558, 0.0
      %v4815 = vmax.f32 %v4559, 0.0
      %v4816 = vmax.f32 %v4560, 0.0
      %v4817 = vmax.f32 %v4561, 0.0
      %v4818 = vmax.f32 %v4562, 0.0
      %v4819 = vmax.f32 %v4563, 0.0
      %v4820 = vmax.f32 %v4564, 0.0
      %v4821 = vmax.f32 %v4565, 0.0
      %v4822 = vmax.f32 %v4566, 0.0
      %v4823 = vmax.f32 %v4567, 0.0
      %v4824 = vmax.f32 %v4568, 0.0
      %v4825 = vmax.f32 %v4569, 0.0
      %v4826 = vmax.f32 %v4570, 0.0
      %v4827 = vmax.f32 %v4571, 0.0
      %v4828 = vmax.f32 %v4572, 0.0
      %v4829 = vmax.f32 %v4573, 0.0
      %v4830 = vmax.f32 %v4574, 0.0
      %v4831 = vmax.f32 %v4575, 0.0
      %v4832 = vmax.f32 %v4576, 0.0
      %v4833 = vmax.f32 %v4577, 0.0
      %v4834 = vmax.f32 %v4578, 0.0
      %v4835 = vmax.f32 %v4579, 0.0
      %v4836 = vmax.f32 %v4580, 0.0
      %v4837 = vmax.f32 %v4581, 0.0
      %v4838 = vmax.f32 %v4582, 0.0
      %v4839 = vmax.f32 %v4583, 0.0
      %v4840 = vmax.f32 %v4584, 0.0
      %v4841 = vmax.f32 %v4585, 0.0
      %v4842 = vmax.f32 %v4586, 0.0
      %v4843 = vmax.f32 %v4587, 0.0
      %v4844 = vmax.f32 %v4588, 0.0
      %v4845 = vmax.f32 %v4589, 0.0
      %v4846 = vmax.f32 %v4590, 0.0
      %v4847 = vmax.f32 %v4591, 0.0
      %v4848 = vmax.f32 %v4592, 0.0
      %v4849 = vmax.f32 %v4593, 0.0
      %v4850 = vmax.f32 %v4594, 0.0
      %v4851 = vmax.f32 %v4595, 0.0
      %v4852 = vmax.f32 %v4596, 0.0
      %v4853 = vmax.f32 %v4597, 0.0
      %v4854 = vmax.f32 %v4598, 0.0
      %v4855 = vmax.f32 %v4599, 0.0
      %v4856 = vmax.f32 %v4600, 0.0
      %v4857 = vmax.f32 %v4601, 0.0
      %v4858 = vmax.f32 %v4602, 0.0
      %v4859 = vmax.f32 %v4603, 0.0
      %v4860 = vmax.f32 %v4604, 0.0
      %v4861 = vmax.f32 %v4605, 0.0
      %v4862 = vmax.f32 %v4606, 0.0
      %v4863 = vmax.f32 %v4607, 0.0
      %v4864 = vmax.f32 %v4608, 0.0
      %v4865 = vmax.f32 %v4609, 0.0
      %v4866 = vmax.f32 %v4610, 0.0
      %v4867 = vmax.f32 %v4611, 0.0
      %v4868 = vmax.f32 %v4612, 0.0
      %v4869 = vmax.f32 %v4613, 0.0
      %v4870 = vmax.f32 %v4614, 0.0
      %v4871 = vmax.f32 %v4615, 0.0
      %v4872 = vmax.f32 %v4616, 0.0
      %v4873 = vmax.f32 %v4617, 0.0
      %v4874 = vmax.f32 %v4618, 0.0
      %v4875 = vmax.f32 %v4619, 0.0
      %v4876 = vmax.f32 %v4620, 0.0
      %v4877 = vmax.f32 %v4621, 0.0
      %v4878 = vmax.f32 %v4622, 0.0
      %v4879 = vmax.f32 %v4623, 0.0
      %v4880 = vmax.f32 %v4624, 0.0
      %v4881 = vmax.f32 %v4625, 0.0
      %v4882 = vmax.f32 %v4626, 0.0
      %v4883 = vmax.f32 %v4627, 0.0
      %v4884 = vmax.f32 %v4628, 0.0
      %v4885 = vmax.f32 %v4629, 0.0
      %v4886 = vmax.f32 %v4630, 0.0
      %v4887 = vmax.f32 %v4631, 0.0
      %v4888 = vmax.f32 %v4632, 0.0
      %v4889 = vmax.f32 %v4633, 0.0
      %v4890 = vmax.f32 %v4634, 0.0
      %v4891 = vmax.f32 %v4635, 0.0
      %v4892 = vmax.f32 %v4636, 0.0
      %v4893 = vmax.f32 %v4637, 0.0
      %v4894 = vmax.f32 %v4638, 0.0
      %v4895 = vmax.f32 %v4639, 0.0
      %v4896 = vmax.f32 %v4640, 0.0
      %v4897 = vmax.f32 %v4641, 0.0
      %v4898 = vmax.f32 %v4642, 0.0
      %v4899 = vmax.f32 %v4643, 0.0
      %v4900 = vmax.f32 %v4644, 0.0
      %v4901 = vmax.f32 %v4645, 0.0
      %v4902 = vmax.f32 %v4646, 0.0
      %v4903 = vmax.f32 %v4647, 0.0
      %v4904 = vmax.f32 %v4648, 0.0
      %v4905 = vmax.f32 %v4649, 0.0
      %v4906 = vmax.f32 %v4650, 0.0
      %v4907 = vmax.f32 %v4651, 0.0
      %v4908 = vmax.f32 %v4652, 0.0
      %v4909 = vmax.f32 %v4653, 0.0
      %v4910 = vmax.f32 %v4654, 0.0
      %v4911 = vmax.f32 %v4655, 0.0
      %v4912 = vmax.f32 %v4656, 0.0
      %v4913 = vmax.f32 %v4657, 0.0
      %v4914 = vmax.f32 %v4658, 0.0
      %v4915 = vmax.f32 %v4659, 0.0
      %v4916 = vmax.f32 %v4660, 0.0
      %v4917 = vmax.f32 %v4661, 0.0
      %v4918 = vmax.f32 %v4662, 0.0
      %v4919 = vmax.f32 %v4663, 0.0
      %v4920 = vmax.f32 %v4664, 0.0
      %v4921 = vmax.f32 %v4665, 0.0
      %v4922 = vmax.f32 %v4666, 0.0
      %v4923 = vmax.f32 %v4667, 0.0
      %v4924 = vmax.f32 %v4668, 0.0
      %v4925 = vmax.f32 %v4669, 0.0
      %v4926 = vmax.f32 %v4670, 0.0
      %v4927 = vmax.f32 %v4671, 0.0
      %v4928 = vmax.f32 %v4672, 0.0
      %v4929 = vmax.f32 %v4673, 0.0
      %v4930 = vmax.f32 %v4674, 0.0
      %v4931 = vmax.f32 %v4675, 0.0
      %v4932 = vmax.f32 %v4676, 0.0
      %v4933 = vmax.f32 %v4677, 0.0
      %v4934 = vmax.f32 %v4678, 0.0
      %v4935 = vmax.f32 %v4679, 0.0
      %v4936 = vmax.f32 %v4680, 0.0
      %v4937 = vmax.f32 %v4681, 0.0
      %v4938 = vmax.f32 %v4682, 0.0
      %v4939 = vmax.f32 %v4683, 0.0
      %v4940 = vmax.f32 %v4684, 0.0
      %v4941 = vmax.f32 %v4685, 0.0
      %v4942 = vmax.f32 %v4686, 0.0
      %v4943 = vmax.f32 %v4687, 0.0
      %v4944 = vmax.f32 %v4688, 0.0
      %v4945 = vmax.f32 %v4689, 0.0
      %v4946 = vmax.f32 %v4690, 0.0
      %v4947 = vmax.f32 %v4691, 0.0
      %v4948 = vmax.f32 %v4692, 0.0
      %v4949 = vmax.f32 %v4693, 0.0
      %v4950 = vmax.f32 %v4694, 0.0
      %v4951 = vmax.f32 %v4695, 0.0
      %v4952 = vmax.f32 %v4696, 0.0
      %v4953 = vmax.f32 %v4697, 0.0
      %v4954 = vmax.f32 %v4698, 0.0
      %v4955 = vmax.f32 %v4699, 0.0
      %v4956 = vmax.f32 %v4700, 0.0
      %v4957 = vmax.f32 %v4701, 0.0
      %v4958 = vmax.f32 %v4702, 0.0
      %v4959 = vmax.f32 %v4703, 0.0
      %v4960 = vmax.f32 %v4704, 0.0
      %v4961 = vmax.f32 %v4705, 0.0
      %v4962 = vmax.f32 %v4706, 0.0
      %v4963 = vmax.f32 %v4707, 0.0
      %v4964 = vmax.f32 %v4708, 0.0
      %v4965 = vmax.f32 %v4709, 0.0
      %v4966 = vmax.f32 %v4710, 0.0
      %v4967 = vmax.f32 %v4711, 0.0
      %v4968 = vmax.f32 %v4712, 0.0
      %v4969 = vmax.f32 %v4713, 0.0
      %v4970 = vmax.f32 %v4714, 0.0
      %v4971 = vmax.f32 %v4715, 0.0
      %v4972 = vmax.f32 %v4716, 0.0
      %v4973 = vmax.f32 %v4717, 0.0
      %v4974 = vmax.f32 %v4718, 0.0
      %v4975 = vmax.f32 %v4719, 0.0
      %v4976 = vmax.f32 %v4720, 0.0
      %v4977 = vmax.f32 %v4721, 0.0
      %v4978 = vmax.f32 %v4722, 0.0
      %v4979 = vmax.f32 %v4723, 0.0
      %v4980 = vmax.f32 %v4724, 0.0
      %v4981 = vmax.f32 %v4725, 0.0
      %v4982 = vmax.f32 %v4726, 0.0
      %v4983 = vmax.f32 %v4727, 0.0
      %v4984 = vmax.f32 %v4728, 0.0
      %v4985 = vmax.f32 %v4729, 0.0
      %v4986 = vmax.f32 %v4730, 0.0
      %v4987 = vmax.f32 %v4731, 0.0
      %v4988 = vmax.f32 %v4732, 0.0
      %v4989 = vmax.f32 %v4733, 0.0
      %v4990 = vmax.f32 %v4734, 0.0
      %v4991 = vmax.f32 %v4735, 0.0
      %v4992 = vmax.f32 %v4736, 0.0
      %v4993 = vmax.f32 %v4737, 0.0
      %v4994 = vmax.f32 %v4738, 0.0
      %v4995 = vmax.f32 %v4739, 0.0
      %v4996 = vmax.f32 %v4740, 0.0
      %v4997 = vmax.f32 %v4741, 0.0
      %v4998 = vmax.f32 %v4742, 0.0
      %v4999 = vmax.f32 %v4743, 0.0
      %v5000 = vmax.f32 %v4744, 0.0
      %v5001 = vmax.f32 %v4745, 0.0
      %v5002 = vmax.f32 %v4746, 0.0
      %v5003 = vmax.f32 %v4747, 0.0
      %v5004 = vmax.f32 %v4748, 0.0
      %v5005 = vmax.f32 %v4749, 0.0
      %v5006 = vmax.f32 %v4750, 0.0
      %v5007 = vmax.f32 %v4751, 0.0
      %v5008 = vmax.f32 %v4752, 0.0
      %v5009 = vmax.f32 %v4753, 0.0
      %v5010 = vmax.f32 %v4754, 0.0
      %v5011 = vmax.f32 %v4755, 0.0
      %v5012 = vmax.f32 %v4756, 0.0
      %v5013 = vmax.f32 %v4757, 0.0
      %v5014 = vmax.f32 %v4758, 0.0
      %v5015 = vmax.f32 %v4759, 0.0
      %v5016 = vmax.f32 %v4760, 0.0
      %v5017 = vmax.f32 %v4761, 0.0
      %v5018 = vmax.f32 %v4762, 0.0
      %v5019 = vmax.f32 %v4763, 0.0
      %v5020 = vmax.f32 %v4764, 0.0
      %v5021 = vmax.f32 %v4765, 0.0
      %v5022 = vmax.f32 %v4766, 0.0
      %v5023 = vmax.f32 %v4767, 0.0
      %v5024 = vmax.f32 %v4768, 0.0
      %v5025 = vmax.f32 %v4769, 0.0
      %v5026 = vmax.f32 %v4770, 0.0
      %v5027 = vmax.f32 %v4771, 0.0
      %v5028 = vmax.f32 %v4772, 0.0
      %v5029 = vsel %vm2432, %v4773, 0.0
      %v5030 = vsel %vm2432, %v4774, 0.0
      %v5031 = vadd.f32 %v5029, %v5030
      %v5032 = vsel %vm2432, %v4775, 0.0
      %v5033 = vadd.f32 %v5031, %v5032
      %v5034 = vsel %vm2432, %v4776, 0.0
      %v5035 = vadd.f32 %v5033, %v5034
      %v5036 = vsel %vm2432, %v4777, 0.0
      %v5037 = vadd.f32 %v5035, %v5036
      %v5038 = vsel %vm2432, %v4778, 0.0
      %v5039 = vadd.f32 %v5037, %v5038
      %v5040 = vsel %vm2432, %v4779, 0.0
      %v5041 = vadd.f32 %v5039, %v5040
      %v5042 = vsel %vm2432, %v4780, 0.0
      %v5043 = vadd.f32 %v5041, %v5042
      %v5044 = vsel %vm2432, %v4781, 0.0
      %v5045 = vadd.f32 %v5043, %v5044
      %v5046 = vsel %vm2432, %v4782, 0.0
      %v5047 = vadd.f32 %v5045, %v5046
      %v5048 = vsel %vm2432, %v4783, 0.0
      %v5049 = vadd.f32 %v5047, %v5048
      %v5050 = vsel %vm2432, %v4784, 0.0
      %v5051 = vadd.f32 %v5049, %v5050
      %v5052 = vsel %vm2432, %v4785, 0.0
      %v5053 = vadd.f32 %v5051, %v5052
      %v5054 = vsel %vm2432, %v4786, 0.0
      %v5055 = vadd.f32 %v5053, %v5054
      %v5056 = vsel %vm2432, %v4787, 0.0
      %v5057 = vadd.f32 %v5055, %v5056
      %v5058 = vsel %vm2432, %v4788, 0.0
      %v5059 = vadd.f32 %v5057, %v5058
      %v5060 = vsel %vm2432, %v4789, 0.0
      %v5061 = vadd.f32 %v5059, %v5060
      %v5062 = vsel %vm2432, %v4790, 0.0
      %v5063 = vadd.f32 %v5061, %v5062
      %v5064 = vsel %vm2432, %v4791, 0.0
      %v5065 = vadd.f32 %v5063, %v5064
      %v5066 = vsel %vm2432, %v4792, 0.0
      %v5067 = vadd.f32 %v5065, %v5066
      %v5068 = vsel %vm2432, %v4793, 0.0
      %v5069 = vadd.f32 %v5067, %v5068
      %v5070 = vsel %vm2432, %v4794, 0.0
      %v5071 = vadd.f32 %v5069, %v5070
      %v5072 = vsel %vm2432, %v4795, 0.0
      %v5073 = vadd.f32 %v5071, %v5072
      %v5074 = vsel %vm2432, %v4796, 0.0
      %v5075 = vadd.f32 %v5073, %v5074
      %v5076 = vsel %vm2432, %v4797, 0.0
      %v5077 = vadd.f32 %v5075, %v5076
      %v5078 = vsel %vm2432, %v4798, 0.0
      %v5079 = vadd.f32 %v5077, %v5078
      %v5080 = vsel %vm2432, %v4799, 0.0
      %v5081 = vadd.f32 %v5079, %v5080
      %v5082 = vsel %vm2432, %v4800, 0.0
      %v5083 = vadd.f32 %v5081, %v5082
      %v5084 = vsel %vm2432, %v4801, 0.0
      %v5085 = vadd.f32 %v5083, %v5084
      %v5086 = vsel %vm2432, %v4802, 0.0
      %v5087 = vadd.f32 %v5085, %v5086
      %v5088 = vsel %vm2432, %v4803, 0.0
      %v5089 = vadd.f32 %v5087, %v5088
      %v5090 = vsel %vm2432, %v4804, 0.0
      %v5091 = vadd.f32 %v5089, %v5090
      %v5092 = vrot.slane %v5091, 4
      %v5093 = vadd.f32 %v5091, %v5092
      %v5094 = vrot.slane %v5093, 2
      %v5095 = vadd.f32 %v5093, %v5094
      %v5096 = vrot.slane %v5095, 1
      %v5097 = vadd.f32 %v5095, %v5096
      %v5098 = vsel %vm2432, %v4805, 0.0
      %v5099 = vsel %vm2432, %v4806, 0.0
      %v5100 = vadd.f32 %v5098, %v5099
      %v5101 = vsel %vm2432, %v4807, 0.0
      %v5102 = vadd.f32 %v5100, %v5101
      %v5103 = vsel %vm2432, %v4808, 0.0
      %v5104 = vadd.f32 %v5102, %v5103
      %v5105 = vsel %vm2432, %v4809, 0.0
      %v5106 = vadd.f32 %v5104, %v5105
      %v5107 = vsel %vm2432, %v4810, 0.0
      %v5108 = vadd.f32 %v5106, %v5107
      %v5109 = vsel %vm2432, %v4811, 0.0
      %v5110 = vadd.f32 %v5108, %v5109
      %v5111 = vsel %vm2432, %v4812, 0.0
      %v5112 = vadd.f32 %v5110, %v5111
      %v5113 = vsel %vm2432, %v4813, 0.0
      %v5114 = vadd.f32 %v5112, %v5113
      %v5115 = vsel %vm2432, %v4814, 0.0
      %v5116 = vadd.f32 %v5114, %v5115
      %v5117 = vsel %vm2432, %v4815, 0.0
      %v5118 = vadd.f32 %v5116, %v5117
      %v5119 = vsel %vm2432, %v4816, 0.0
      %v5120 = vadd.f32 %v5118, %v5119
      %v5121 = vsel %vm2432, %v4817, 0.0
      %v5122 = vadd.f32 %v5120, %v5121
      %v5123 = vsel %vm2432, %v4818, 0.0
      %v5124 = vadd.f32 %v5122, %v5123
      %v5125 = vsel %vm2432, %v4819, 0.0
      %v5126 = vadd.f32 %v5124, %v5125
      %v5127 = vsel %vm2432, %v4820, 0.0
      %v5128 = vadd.f32 %v5126, %v5127
      %v5129 = vsel %vm2432, %v4821, 0.0
      %v5130 = vadd.f32 %v5128, %v5129
      %v5131 = vsel %vm2432, %v4822, 0.0
      %v5132 = vadd.f32 %v5130, %v5131
      %v5133 = vsel %vm2432, %v4823, 0.0
      %v5134 = vadd.f32 %v5132, %v5133
      %v5135 = vsel %vm2432, %v4824, 0.0
      %v5136 = vadd.f32 %v5134, %v5135
      %v5137 = vsel %vm2432, %v4825, 0.0
      %v5138 = vadd.f32 %v5136, %v5137
      %v5139 = vsel %vm2432, %v4826, 0.0
      %v5140 = vadd.f32 %v5138, %v5139
      %v5141 = vsel %vm2432, %v4827, 0.0
      %v5142 = vadd.f32 %v5140, %v5141
      %v5143 = vsel %vm2432, %v4828, 0.0
      %v5144 = vadd.f32 %v5142, %v5143
      %v5145 = vsel %vm2432, %v4829, 0.0
      %v5146 = vadd.f32 %v5144, %v5145
      %v5147 = vsel %vm2432, %v4830, 0.0
      %v5148 = vadd.f32 %v5146, %v5147
      %v5149 = vsel %vm2432, %v4831, 0.0
      %v5150 = vadd.f32 %v5148, %v5149
      %v5151 = vsel %vm2432, %v4832, 0.0
      %v5152 = vadd.f32 %v5150, %v5151
      %v5153 = vsel %vm2432, %v4833, 0.0
      %v5154 = vadd.f32 %v5152, %v5153
      %v5155 = vsel %vm2432, %v4834, 0.0
      %v5156 = vadd.f32 %v5154, %v5155
      %v5157 = vsel %vm2432, %v4835, 0.0
      %v5158 = vadd.f32 %v5156, %v5157
      %v5159 = vsel %vm2432, %v4836, 0.0
      %v5160 = vadd.f32 %v5158, %v5159
      %v5161 = vrot.slane %v5160, 4
      %v5162 = vadd.f32 %v5160, %v5161
      %v5163 = vrot.slane %v5162, 2
      %v5164 = vadd.f32 %v5162, %v5163
      %v5165 = vrot.slane %v5164, 1
      %v5166 = vadd.f32 %v5164, %v5165
      %v5167 = vsel %vm2432, %v4837, 0.0
      %v5168 = vsel %vm2432, %v4838, 0.0
      %v5169 = vadd.f32 %v5167, %v5168
      %v5170 = vsel %vm2432, %v4839, 0.0
      %v5171 = vadd.f32 %v5169, %v5170
      %v5172 = vsel %vm2432, %v4840, 0.0
      %v5173 = vadd.f32 %v5171, %v5172
      %v5174 = vsel %vm2432, %v4841, 0.0
      %v5175 = vadd.f32 %v5173, %v5174
      %v5176 = vsel %vm2432, %v4842, 0.0
      %v5177 = vadd.f32 %v5175, %v5176
      %v5178 = vsel %vm2432, %v4843, 0.0
      %v5179 = vadd.f32 %v5177, %v5178
      %v5180 = vsel %vm2432, %v4844, 0.0
      %v5181 = vadd.f32 %v5179, %v5180
      %v5182 = vsel %vm2432, %v4845, 0.0
      %v5183 = vadd.f32 %v5181, %v5182
      %v5184 = vsel %vm2432, %v4846, 0.0
      %v5185 = vadd.f32 %v5183, %v5184
      %v5186 = vsel %vm2432, %v4847, 0.0
      %v5187 = vadd.f32 %v5185, %v5186
      %v5188 = vsel %vm2432, %v4848, 0.0
      %v5189 = vadd.f32 %v5187, %v5188
      %v5190 = vsel %vm2432, %v4849, 0.0
      %v5191 = vadd.f32 %v5189, %v5190
      %v5192 = vsel %vm2432, %v4850, 0.0
      %v5193 = vadd.f32 %v5191, %v5192
      %v5194 = vsel %vm2432, %v4851, 0.0
      %v5195 = vadd.f32 %v5193, %v5194
      %v5196 = vsel %vm2432, %v4852, 0.0
      %v5197 = vadd.f32 %v5195, %v5196
      %v5198 = vsel %vm2432, %v4853, 0.0
      %v5199 = vadd.f32 %v5197, %v5198
      %v5200 = vsel %vm2432, %v4854, 0.0
      %v5201 = vadd.f32 %v5199, %v5200
      %v5202 = vsel %vm2432, %v4855, 0.0
      %v5203 = vadd.f32 %v5201, %v5202
      %v5204 = vsel %vm2432, %v4856, 0.0
      %v5205 = vadd.f32 %v5203, %v5204
      %v5206 = vsel %vm2432, %v4857, 0.0
      %v5207 = vadd.f32 %v5205, %v5206
      %v5208 = vsel %vm2432, %v4858, 0.0
      %v5209 = vadd.f32 %v5207, %v5208
      %v5210 = vsel %vm2432, %v4859, 0.0
      %v5211 = vadd.f32 %v5209, %v5210
      %v5212 = vsel %vm2432, %v4860, 0.0
      %v5213 = vadd.f32 %v5211, %v5212
      %v5214 = vsel %vm2432, %v4861, 0.0
      %v5215 = vadd.f32 %v5213, %v5214
      %v5216 = vsel %vm2432, %v4862, 0.0
      %v5217 = vadd.f32 %v5215, %v5216
      %v5218 = vsel %vm2432, %v4863, 0.0
      %v5219 = vadd.f32 %v5217, %v5218
      %v5220 = vsel %vm2432, %v4864, 0.0
      %v5221 = vadd.f32 %v5219, %v5220
      %v5222 = vsel %vm2432, %v4865, 0.0
      %v5223 = vadd.f32 %v5221, %v5222
      %v5224 = vsel %vm2432, %v4866, 0.0
      %v5225 = vadd.f32 %v5223, %v5224
      %v5226 = vsel %vm2432, %v4867, 0.0
      %v5227 = vadd.f32 %v5225, %v5226
      %v5228 = vsel %vm2432, %v4868, 0.0
      %v5229 = vadd.f32 %v5227, %v5228
      %v5230 = vrot.slane %v5229, 4
      %v5231 = vadd.f32 %v5229, %v5230
      %v5232 = vrot.slane %v5231, 2
      %v5233 = vadd.f32 %v5231, %v5232
      %v5234 = vrot.slane %v5233, 1
      %v5235 = vadd.f32 %v5233, %v5234
      %v5236 = vsel %vm2432, %v4869, 0.0
      %v5237 = vsel %vm2432, %v4870, 0.0
      %v5238 = vadd.f32 %v5236, %v5237
      %v5239 = vsel %vm2432, %v4871, 0.0
      %v5240 = vadd.f32 %v5238, %v5239
      %v5241 = vsel %vm2432, %v4872, 0.0
      %v5242 = vadd.f32 %v5240, %v5241
      %v5243 = vsel %vm2432, %v4873, 0.0
      %v5244 = vadd.f32 %v5242, %v5243
      %v5245 = vsel %vm2432, %v4874, 0.0
      %v5246 = vadd.f32 %v5244, %v5245
      %v5247 = vsel %vm2432, %v4875, 0.0
      %v5248 = vadd.f32 %v5246, %v5247
      %v5249 = vsel %vm2432, %v4876, 0.0
      %v5250 = vadd.f32 %v5248, %v5249
      %v5251 = vsel %vm2432, %v4877, 0.0
      %v5252 = vadd.f32 %v5250, %v5251
      %v5253 = vsel %vm2432, %v4878, 0.0
      %v5254 = vadd.f32 %v5252, %v5253
      %v5255 = vsel %vm2432, %v4879, 0.0
      %v5256 = vadd.f32 %v5254, %v5255
      %v5257 = vsel %vm2432, %v4880, 0.0
      %v5258 = vadd.f32 %v5256, %v5257
      %v5259 = vsel %vm2432, %v4881, 0.0
      %v5260 = vadd.f32 %v5258, %v5259
      %v5261 = vsel %vm2432, %v4882, 0.0
      %v5262 = vadd.f32 %v5260, %v5261
      %v5263 = vsel %vm2432, %v4883, 0.0
      %v5264 = vadd.f32 %v5262, %v5263
      %v5265 = vsel %vm2432, %v4884, 0.0
      %v5266 = vadd.f32 %v5264, %v5265
      %v5267 = vsel %vm2432, %v4885, 0.0
      %v5268 = vadd.f32 %v5266, %v5267
      %v5269 = vsel %vm2432, %v4886, 0.0
      %v5270 = vadd.f32 %v5268, %v5269
      %v5271 = vsel %vm2432, %v4887, 0.0
      %v5272 = vadd.f32 %v5270, %v5271
      %v5273 = vsel %vm2432, %v4888, 0.0
      %v5274 = vadd.f32 %v5272, %v5273
      %v5275 = vsel %vm2432, %v4889, 0.0
      %v5276 = vadd.f32 %v5274, %v5275
      %v5277 = vsel %vm2432, %v4890, 0.0
      %v5278 = vadd.f32 %v5276, %v5277
      %v5279 = vsel %vm2432, %v4891, 0.0
      %v5280 = vadd.f32 %v5278, %v5279
      %v5281 = vsel %vm2432, %v4892, 0.0
      %v5282 = vadd.f32 %v5280, %v5281
      %v5283 = vsel %vm2432, %v4893, 0.0
      %v5284 = vadd.f32 %v5282, %v5283
      %v5285 = vsel %vm2432, %v4894, 0.0
      %v5286 = vadd.f32 %v5284, %v5285
      %v5287 = vsel %vm2432, %v4895, 0.0
      %v5288 = vadd.f32 %v5286, %v5287
      %v5289 = vsel %vm2432, %v4896, 0.0
      %v5290 = vadd.f32 %v5288, %v5289
      %v5291 = vsel %vm2432, %v4897, 0.0
      %v5292 = vadd.f32 %v5290, %v5291
      %v5293 = vsel %vm2432, %v4898, 0.0
      %v5294 = vadd.f32 %v5292, %v5293
      %v5295 = vsel %vm2432, %v4899, 0.0
      %v5296 = vadd.f32 %v5294, %v5295
      %v5297 = vsel %vm2432, %v4900, 0.0
      %v5298 = vadd.f32 %v5296, %v5297
      %v5299 = vrot.slane %v5298, 4
      %v5300 = vadd.f32 %v5298, %v5299
      %v5301 = vrot.slane %v5300, 2
      %v5302 = vadd.f32 %v5300, %v5301
      %v5303 = vrot.slane %v5302, 1
      %v5304 = vadd.f32 %v5302, %v5303
      %v5305 = vsel %vm2432, %v4901, 0.0
      %v5306 = vsel %vm2432, %v4902, 0.0
      %v5307 = vadd.f32 %v5305, %v5306
      %v5308 = vsel %vm2432, %v4903, 0.0
      %v5309 = vadd.f32 %v5307, %v5308
      %v5310 = vsel %vm2432, %v4904, 0.0
      %v5311 = vadd.f32 %v5309, %v5310
      %v5312 = vsel %vm2432, %v4905, 0.0
      %v5313 = vadd.f32 %v5311, %v5312
      %v5314 = vsel %vm2432, %v4906, 0.0
      %v5315 = vadd.f32 %v5313, %v5314
      %v5316 = vsel %vm2432, %v4907, 0.0
      %v5317 = vadd.f32 %v5315, %v5316
      %v5318 = vsel %vm2432, %v4908, 0.0
      %v5319 = vadd.f32 %v5317, %v5318
      %v5320 = vsel %vm2432, %v4909, 0.0
      %v5321 = vadd.f32 %v5319, %v5320
      %v5322 = vsel %vm2432, %v4910, 0.0
      %v5323 = vadd.f32 %v5321, %v5322
      %v5324 = vsel %vm2432, %v4911, 0.0
      %v5325 = vadd.f32 %v5323, %v5324
      %v5326 = vsel %vm2432, %v4912, 0.0
      %v5327 = vadd.f32 %v5325, %v5326
      %v5328 = vsel %vm2432, %v4913, 0.0
      %v5329 = vadd.f32 %v5327, %v5328
      %v5330 = vsel %vm2432, %v4914, 0.0
      %v5331 = vadd.f32 %v5329, %v5330
      %v5332 = vsel %vm2432, %v4915, 0.0
      %v5333 = vadd.f32 %v5331, %v5332
      %v5334 = vsel %vm2432, %v4916, 0.0
      %v5335 = vadd.f32 %v5333, %v5334
      %v5336 = vsel %vm2432, %v4917, 0.0
      %v5337 = vadd.f32 %v5335, %v5336
      %v5338 = vsel %vm2432, %v4918, 0.0
      %v5339 = vadd.f32 %v5337, %v5338
      %v5340 = vsel %vm2432, %v4919, 0.0
      %v5341 = vadd.f32 %v5339, %v5340
      %v5342 = vsel %vm2432, %v4920, 0.0
      %v5343 = vadd.f32 %v5341, %v5342
      %v5344 = vsel %vm2432, %v4921, 0.0
      %v5345 = vadd.f32 %v5343, %v5344
      %v5346 = vsel %vm2432, %v4922, 0.0
      %v5347 = vadd.f32 %v5345, %v5346
      %v5348 = vsel %vm2432, %v4923, 0.0
      %v5349 = vadd.f32 %v5347, %v5348
      %v5350 = vsel %vm2432, %v4924, 0.0
      %v5351 = vadd.f32 %v5349, %v5350
      %v5352 = vsel %vm2432, %v4925, 0.0
      %v5353 = vadd.f32 %v5351, %v5352
      %v5354 = vsel %vm2432, %v4926, 0.0
      %v5355 = vadd.f32 %v5353, %v5354
      %v5356 = vsel %vm2432, %v4927, 0.0
      %v5357 = vadd.f32 %v5355, %v5356
      %v5358 = vsel %vm2432, %v4928, 0.0
      %v5359 = vadd.f32 %v5357, %v5358
      %v5360 = vsel %vm2432, %v4929, 0.0
      %v5361 = vadd.f32 %v5359, %v5360
      %v5362 = vsel %vm2432, %v4930, 0.0
      %v5363 = vadd.f32 %v5361, %v5362
      %v5364 = vsel %vm2432, %v4931, 0.0
      %v5365 = vadd.f32 %v5363, %v5364
      %v5366 = vsel %vm2432, %v4932, 0.0
      %v5367 = vadd.f32 %v5365, %v5366
      %v5368 = vrot.slane %v5367, 4
      %v5369 = vadd.f32 %v5367, %v5368
      %v5370 = vrot.slane %v5369, 2
      %v5371 = vadd.f32 %v5369, %v5370
      %v5372 = vrot.slane %v5371, 1
      %v5373 = vadd.f32 %v5371, %v5372
      %v5374 = vsel %vm2432, %v4933, 0.0
      %v5375 = vsel %vm2432, %v4934, 0.0
      %v5376 = vadd.f32 %v5374, %v5375
      %v5377 = vsel %vm2432, %v4935, 0.0
      %v5378 = vadd.f32 %v5376, %v5377
      %v5379 = vsel %vm2432, %v4936, 0.0
      %v5380 = vadd.f32 %v5378, %v5379
      %v5381 = vsel %vm2432, %v4937, 0.0
      %v5382 = vadd.f32 %v5380, %v5381
      %v5383 = vsel %vm2432, %v4938, 0.0
      %v5384 = vadd.f32 %v5382, %v5383
      %v5385 = vsel %vm2432, %v4939, 0.0
      %v5386 = vadd.f32 %v5384, %v5385
      %v5387 = vsel %vm2432, %v4940, 0.0
      %v5388 = vadd.f32 %v5386, %v5387
      %v5389 = vsel %vm2432, %v4941, 0.0
      %v5390 = vadd.f32 %v5388, %v5389
      %v5391 = vsel %vm2432, %v4942, 0.0
      %v5392 = vadd.f32 %v5390, %v5391
      %v5393 = vsel %vm2432, %v4943, 0.0
      %v5394 = vadd.f32 %v5392, %v5393
      %v5395 = vsel %vm2432, %v4944, 0.0
      %v5396 = vadd.f32 %v5394, %v5395
      %v5397 = vsel %vm2432, %v4945, 0.0
      %v5398 = vadd.f32 %v5396, %v5397
      %v5399 = vsel %vm2432, %v4946, 0.0
      %v5400 = vadd.f32 %v5398, %v5399
      %v5401 = vsel %vm2432, %v4947, 0.0
      %v5402 = vadd.f32 %v5400, %v5401
      %v5403 = vsel %vm2432, %v4948, 0.0
      %v5404 = vadd.f32 %v5402, %v5403
      %v5405 = vsel %vm2432, %v4949, 0.0
      %v5406 = vadd.f32 %v5404, %v5405
      %v5407 = vsel %vm2432, %v4950, 0.0
      %v5408 = vadd.f32 %v5406, %v5407
      %v5409 = vsel %vm2432, %v4951, 0.0
      %v5410 = vadd.f32 %v5408, %v5409
      %v5411 = vsel %vm2432, %v4952, 0.0
      %v5412 = vadd.f32 %v5410, %v5411
      %v5413 = vsel %vm2432, %v4953, 0.0
      %v5414 = vadd.f32 %v5412, %v5413
      %v5415 = vsel %vm2432, %v4954, 0.0
      %v5416 = vadd.f32 %v5414, %v5415
      %v5417 = vsel %vm2432, %v4955, 0.0
      %v5418 = vadd.f32 %v5416, %v5417
      %v5419 = vsel %vm2432, %v4956, 0.0
      %v5420 = vadd.f32 %v5418, %v5419
      %v5421 = vsel %vm2432, %v4957, 0.0
      %v5422 = vadd.f32 %v5420, %v5421
      %v5423 = vsel %vm2432, %v4958, 0.0
      %v5424 = vadd.f32 %v5422, %v5423
      %v5425 = vsel %vm2432, %v4959, 0.0
      %v5426 = vadd.f32 %v5424, %v5425
      %v5427 = vsel %vm2432, %v4960, 0.0
      %v5428 = vadd.f32 %v5426, %v5427
      %v5429 = vsel %vm2432, %v4961, 0.0
      %v5430 = vadd.f32 %v5428, %v5429
      %v5431 = vsel %vm2432, %v4962, 0.0
      %v5432 = vadd.f32 %v5430, %v5431
      %v5433 = vsel %vm2432, %v4963, 0.0
      %v5434 = vadd.f32 %v5432, %v5433
      %v5435 = vsel %vm2432, %v4964, 0.0
      %v5436 = vadd.f32 %v5434, %v5435
      %v5437 = vrot.slane %v5436, 4
      %v5438 = vadd.f32 %v5436, %v5437
      %v5439 = vrot.slane %v5438, 2
      %v5440 = vadd.f32 %v5438, %v5439
      %v5441 = vrot.slane %v5440, 1
      %v5442 = vadd.f32 %v5440, %v5441
      %v5443 = vsel %vm2432, %v4965, 0.0
      %v5444 = vsel %vm2432, %v4966, 0.0
      %v5445 = vadd.f32 %v5443, %v5444
      %v5446 = vsel %vm2432, %v4967, 0.0
      %v5447 = vadd.f32 %v5445, %v5446
      %v5448 = vsel %vm2432, %v4968, 0.0
      %v5449 = vadd.f32 %v5447, %v5448
      %v5450 = vsel %vm2432, %v4969, 0.0
      %v5451 = vadd.f32 %v5449, %v5450
      %v5452 = vsel %vm2432, %v4970, 0.0
      %v5453 = vadd.f32 %v5451, %v5452
      %v5454 = vsel %vm2432, %v4971, 0.0
      %v5455 = vadd.f32 %v5453, %v5454
      %v5456 = vsel %vm2432, %v4972, 0.0
      %v5457 = vadd.f32 %v5455, %v5456
      %v5458 = vsel %vm2432, %v4973, 0.0
      %v5459 = vadd.f32 %v5457, %v5458
      %v5460 = vsel %vm2432, %v4974, 0.0
      %v5461 = vadd.f32 %v5459, %v5460
      %v5462 = vsel %vm2432, %v4975, 0.0
      %v5463 = vadd.f32 %v5461, %v5462
      %v5464 = vsel %vm2432, %v4976, 0.0
      %v5465 = vadd.f32 %v5463, %v5464
      %v5466 = vsel %vm2432, %v4977, 0.0
      %v5467 = vadd.f32 %v5465, %v5466
      %v5468 = vsel %vm2432, %v4978, 0.0
      %v5469 = vadd.f32 %v5467, %v5468
      %v5470 = vsel %vm2432, %v4979, 0.0
      %v5471 = vadd.f32 %v5469, %v5470
      %v5472 = vsel %vm2432, %v4980, 0.0
      %v5473 = vadd.f32 %v5471, %v5472
      %v5474 = vsel %vm2432, %v4981, 0.0
      %v5475 = vadd.f32 %v5473, %v5474
      %v5476 = vsel %vm2432, %v4982, 0.0
      %v5477 = vadd.f32 %v5475, %v5476
      %v5478 = vsel %vm2432, %v4983, 0.0
      %v5479 = vadd.f32 %v5477, %v5478
      %v5480 = vsel %vm2432, %v4984, 0.0
      %v5481 = vadd.f32 %v5479, %v5480
      %v5482 = vsel %vm2432, %v4985, 0.0
      %v5483 = vadd.f32 %v5481, %v5482
      %v5484 = vsel %vm2432, %v4986, 0.0
      %v5485 = vadd.f32 %v5483, %v5484
      %v5486 = vsel %vm2432, %v4987, 0.0
      %v5487 = vadd.f32 %v5485, %v5486
      %v5488 = vsel %vm2432, %v4988, 0.0
      %v5489 = vadd.f32 %v5487, %v5488
      %v5490 = vsel %vm2432, %v4989, 0.0
      %v5491 = vadd.f32 %v5489, %v5490
      %v5492 = vsel %vm2432, %v4990, 0.0
      %v5493 = vadd.f32 %v5491, %v5492
      %v5494 = vsel %vm2432, %v4991, 0.0
      %v5495 = vadd.f32 %v5493, %v5494
      %v5496 = vsel %vm2432, %v4992, 0.0
      %v5497 = vadd.f32 %v5495, %v5496
      %v5498 = vsel %vm2432, %v4993, 0.0
      %v5499 = vadd.f32 %v5497, %v5498
      %v5500 = vsel %vm2432, %v4994, 0.0
      %v5501 = vadd.f32 %v5499, %v5500
      %v5502 = vsel %vm2432, %v4995, 0.0
      %v5503 = vadd.f32 %v5501, %v5502
      %v5504 = vsel %vm2432, %v4996, 0.0
      %v5505 = vadd.f32 %v5503, %v5504
      %v5506 = vrot.slane %v5505, 4
      %v5507 = vadd.f32 %v5505, %v5506
      %v5508 = vrot.slane %v5507, 2
      %v5509 = vadd.f32 %v5507, %v5508
      %v5510 = vrot.slane %v5509, 1
      %v5511 = vadd.f32 %v5509, %v5510
      %v5512 = vsel %vm2432, %v4997, 0.0
      %v5513 = vsel %vm2432, %v4998, 0.0
      %v5514 = vadd.f32 %v5512, %v5513
      %v5515 = vsel %vm2432, %v4999, 0.0
      %v5516 = vadd.f32 %v5514, %v5515
      %v5517 = vsel %vm2432, %v5000, 0.0
      %v5518 = vadd.f32 %v5516, %v5517
      %v5519 = vsel %vm2432, %v5001, 0.0
      %v5520 = vadd.f32 %v5518, %v5519
      %v5521 = vsel %vm2432, %v5002, 0.0
      %v5522 = vadd.f32 %v5520, %v5521
      %v5523 = vsel %vm2432, %v5003, 0.0
      %v5524 = vadd.f32 %v5522, %v5523
      %v5525 = vsel %vm2432, %v5004, 0.0
      %v5526 = vadd.f32 %v5524, %v5525
      %v5527 = vsel %vm2432, %v5005, 0.0
      %v5528 = vadd.f32 %v5526, %v5527
      %v5529 = vsel %vm2432, %v5006, 0.0
      %v5530 = vadd.f32 %v5528, %v5529
      %v5531 = vsel %vm2432, %v5007, 0.0
      %v5532 = vadd.f32 %v5530, %v5531
      %v5533 = vsel %vm2432, %v5008, 0.0
      %v5534 = vadd.f32 %v5532, %v5533
      %v5535 = vsel %vm2432, %v5009, 0.0
      %v5536 = vadd.f32 %v5534, %v5535
      %v5537 = vsel %vm2432, %v5010, 0.0
      %v5538 = vadd.f32 %v5536, %v5537
      %v5539 = vsel %vm2432, %v5011, 0.0
      %v5540 = vadd.f32 %v5538, %v5539
      %v5541 = vsel %vm2432, %v5012, 0.0
      %v5542 = vadd.f32 %v5540, %v5541
      %v5543 = vsel %vm2432, %v5013, 0.0
      %v5544 = vadd.f32 %v5542, %v5543
      %v5545 = vsel %vm2432, %v5014, 0.0
      %v5546 = vadd.f32 %v5544, %v5545
      %v5547 = vsel %vm2432, %v5015, 0.0
      %v5548 = vadd.f32 %v5546, %v5547
      %v5549 = vsel %vm2432, %v5016, 0.0
      %v5550 = vadd.f32 %v5548, %v5549
      %v5551 = vsel %vm2432, %v5017, 0.0
      %v5552 = vadd.f32 %v5550, %v5551
      %v5553 = vsel %vm2432, %v5018, 0.0
      %v5554 = vadd.f32 %v5552, %v5553
      %v5555 = vsel %vm2432, %v5019, 0.0
      %v5556 = vadd.f32 %v5554, %v5555
      %v5557 = vsel %vm2432, %v5020, 0.0
      %v5558 = vadd.f32 %v5556, %v5557
      %v5559 = vsel %vm2432, %v5021, 0.0
      %v5560 = vadd.f32 %v5558, %v5559
      %v5561 = vsel %vm2432, %v5022, 0.0
      %v5562 = vadd.f32 %v5560, %v5561
      %v5563 = vsel %vm2432, %v5023, 0.0
      %v5564 = vadd.f32 %v5562, %v5563
      %v5565 = vsel %vm2432, %v5024, 0.0
      %v5566 = vadd.f32 %v5564, %v5565
      %v5567 = vsel %vm2432, %v5025, 0.0
      %v5568 = vadd.f32 %v5566, %v5567
      %v5569 = vsel %vm2432, %v5026, 0.0
      %v5570 = vadd.f32 %v5568, %v5569
      %v5571 = vsel %vm2432, %v5027, 0.0
      %v5572 = vadd.f32 %v5570, %v5571
      %v5573 = vsel %vm2432, %v5028, 0.0
      %v5574 = vadd.f32 %v5572, %v5573
      %v5575 = vrot.slane %v5574, 4
      %v5576 = vadd.f32 %v5574, %v5575
      %v5577 = vrot.slane %v5576, 2
      %v5578 = vadd.f32 %v5576, %v5577
      %v5579 = vrot.slane %v5578, 1
      %v5580 = vadd.f32 %v5578, %v5579
      %v5581 = vrcp.pop 256.0
      %v5582 = vmul.f32 256.0, %v5581
      %v5583 = vsub.f32 1.0, %v5582
      %v5584 = vmul.f32 %v5581, %v5583
      %v5585 = vadd.f32 %v5581, %v5584
      %vm5586 = vweird.f32 %v5581
      %v5587 = vsel %vm5586, %v5581, %v5585
      %v5588 = vmul.f32 %v5097, %v5587
      %v5589 = vmul.f32 %v5166, %v5587
      %v5590 = vmul.f32 %v5235, %v5587
      %v5591 = vmul.f32 %v5304, %v5587
      %v5592 = vmul.f32 %v5373, %v5587
      %v5593 = vmul.f32 %v5442, %v5587
      %v5594 = vmul.f32 %v5511, %v5587
      %v5595 = vmul.f32 %v5580, %v5587
      %v5596 = vpack.c.bf16 %v5588, %v5588
      %v5597 = vpack.c.bf16 %v5589, %v5589
      %v5598 = vpack.c.bf16 %v5590, %v5590
      %v5599 = vpack.c.bf16 %v5591, %v5591
      %v5600 = vpack.c.bf16 %v5592, %v5592
      %v5601 = vpack.c.bf16 %v5593, %v5593
      %v5602 = vpack.c.bf16 %v5594, %v5594
      %v5603 = vpack.c.bf16 %v5595, %v5595
      %v5604 = vld [vmem:[%s4] sm:$0xf]
      %v5605 = vld [vmem:[%s4 + $0x4] sm:$0xf]
      %v5606 = vld [vmem:[%s4 + $0x8] sm:$0xf]
      %v5607 = vld [vmem:[%s4 + $0xc] sm:$0xf]
      %v5616 = vunpack.c.l.b16 %v5596
      %v5617 = vunpack.c.l.b16 %v5597
      %v5618 = vunpack.c.l.b16 %v5598
      %v5619 = vunpack.c.l.b16 %v5599
      %v5620 = vunpack.c.l.b16 %v5600
      %v5621 = vunpack.c.l.b16 %v5601
      %v5622 = vunpack.c.l.b16 %v5602
      %v5623 = vunpack.c.l.b16 %v5603
      %vm5624 = vcmask 1041409
      %v5625 = vsel %vm5624, %v5617, %v5616
      %vm5626 = vcmask 1042434
      %v5627 = vsel %vm5626, %v5618, %v5625
      %vm5628 = vcmask 1043459
      %v5629 = vsel %vm5628, %v5619, %v5627
      %vm5630 = vcmask 1044484
      %v5631 = vsel %vm5630, %v5620, %v5629
      %vm5632 = vcmask 1045509
      %v5633 = vsel %vm5632, %v5621, %v5631
      %vm5634 = vcmask 1046534
      %v5635 = vsel %vm5634, %v5622, %v5633
      %vm5636 = vcmask 1047559
      %v5637 = vsel %vm5636, %v5623, %v5635
      %v5638 = vpack.c.b16 %v5637, %v5637
      %v5643 = vunpack.c.l.b16 %v5604
      %v5644 = vunpack.c.l.b16 %v5605
      %v5645 = vunpack.c.l.b16 %v5606
      %v5646 = vunpack.c.l.b16 %v5607
      %v5647 = vpack.c.b16 %v5644, %v5643
      %v5648 = vpack.c.b16 %v5646, %v5645
      %v5652 = vsel %vm2432, %v5638, 0
      %5654 = vmatpush.bf16.msra.mxu0 0
      %5655 = vmatpush.bf16.msra.mxu0 0
      %5656 = vmatpush.bf16.msra.mxu0 0
      %5657 = vmatpush.bf16.msra.mxu0 0
      %5658 = vmatpush.bf16.msra.mxu0 0
      %5659 = vmatpush.bf16.msra.mxu0 0
      %5660 = vmatpush.bf16.msra.mxu0 %v5648
      %5661 = vmatpush.bf16.msra.mxu0 %v5647
      %5662 = vmatmul.bf16.gmra.mxu0 %v5652
      %v5663 = vpop.f32.mrf.mxu0
      %v5664 = vadd.f32 0.0, %v5663
      %v5665 = vpop.f32.mrf.mxu0
      %5666 = vdwg.mxu0
      %v5667 = vld [vmem:[%s5] sm:$0x1]
      %v5668 = vld [vmem:[%s6] sm:$0x1]
      %vm5669 = vcmask 523264
      %v5670 = vsel %vm5669, %v5664, 0.0
      %v5671 = vrot.slane %v5670, 4
      %v5672 = vadd.f32 %v5670, %v5671
      %v5673 = vrot.slane %v5672, 2
      %v5674 = vadd.f32 %v5672, %v5673
      %v5675 = vrot.slane %v5674, 1
      %v5676 = vadd.f32 %v5674, %v5675
      %v5677 = vrcp.pop 8.0
      %v5678 = vmul.f32 8.0, %v5677
      %v5679 = vsub.f32 1.0, %v5678
      %v5680 = vmul.f32 %v5677, %v5679
      %v5681 = vadd.f32 %v5677, %v5680
      %vm5682 = vweird.f32 %v5677
      %v5683 = vsel %vm5682, %v5677, %v5681
      %v5684 = vmul.f32 %v5676, %v5683
      %v5685 = vsub.f32 %v5664, %v5684
      %v5686 = vmul.f32 %v5685, %v5685
      %v5687 = vsel %vm5669, %v5686, 0.0
      %v5688 = vrot.slane %v5687, 4
      %v5689 = vadd.f32 %v5687, %v5688
      %v5690 = vrot.slane %v5689, 2
      %v5691 = vadd.f32 %v5689, %v5690
      %v5692 = vrot.slane %v5691, 1
      %v5693 = vadd.f32 %v5691, %v5692
      %v5694 = vmul.f32 %v5693, %v5683
      %v5695 = vadd.f32 %v5694, 1e-05
      %v5696 = vrsqrt.pop %v5695
      %v5697 = vmul.f32 %v5696, %v5695
      %v5698 = vmul.f32 %v5697, %v5696
      %v5699 = vmul.f32 0.5, %v5698
      %v5700 = vsub.f32 1.5, %v5699
      %v5701 = vmul.f32 %v5696, %v5700
      %vm5702 = vweird.f32 %v5695
      %vm5703 = vweird.f32 %v5696
      %vm5704 = vmor %vm5702, %vm5703
      %v5705 = vsel %vm5704, %v5696, %v5701
      %v5706 = vmul.f32 %v5685, %v5705
      %v5708 = vperm.slane %v5667, 0
      %v5710 = vmul.f32 %v5706, %v5708
      %v5712 = vperm.slane %v5668, 0
      %v5714 = vadd.f32 %v5710, %v5712
      %v5715 = vmax.f32 %v5714, 0.0
      %v5716 = vpack.c.bf16 %v5715, %v5715
      %v5717 = vld [vmem:[%s7] sm:$0xf]
      %v5718 = vld [vmem:[%s7 + $0x4] sm:$0xf]
      %v5719 = vld [vmem:[%s7 + $0x8] sm:$0xf]
      %v5720 = vld [vmem:[%s7 + $0xc] sm:$0xf]
      %v5721 = vld [vmem:[%s7 + $0x10] sm:$0xf]
      %v5722 = vld [vmem:[%s7 + $0x14] sm:$0xf]
      %v5723 = vld [vmem:[%s7 + $0x18] sm:$0xf]
      %v5724 = vld [vmem:[%s7 + $0x1c] sm:$0xf]
      %v5733 = vunpack.c.l.b16 %v5717
      %v5734 = vunpack.c.l.b16 %v5718
      %v5735 = vunpack.c.l.b16 %v5719
      %v5736 = vunpack.c.l.b16 %v5720
      %v5737 = vunpack.c.l.b16 %v5721
      %v5738 = vunpack.c.l.b16 %v5722
      %v5739 = vunpack.c.l.b16 %v5723
      %v5740 = vunpack.c.l.b16 %v5724
      %v5741 = vpack.c.b16 %v5734, %v5733
      %v5742 = vpack.c.b16 %v5736, %v5735
      %v5743 = vpack.c.b16 %v5738, %v5737
      %v5744 = vpack.c.b16 %v5740, %v5739
      %v5750 = vsel %vm5669, %v5716, 0
      %5752 = vmatpush.bf16.msra.mxu0 0
      %5753 = vmatpush.bf16.msra.mxu0 0
      %5754 = vmatpush.bf16.msra.mxu0 0
      %5755 = vmatpush.bf16.msra.mxu0 0
      %5756 = vmatpush.bf16.msra.mxu0 %v5744
      %5757 = vmatpush.bf16.msra.mxu0 %v5743
      %5758 = vmatpush.bf16.msra.mxu0 %v5742
      %5759 = vmatpush.bf16.msra.mxu0 %v5741
      %5760 = vmatmul.bf16.gmra.mxu0 %v5750
      %v5761 = vpop.f32.mrf.mxu0
      %v5762 = vadd.f32 0.0, %v5761
      %v5763 = vpop.f32.mrf.mxu0
      %5764 = vdwg.mxu0
      %v5765 = vsel %vm5669, %v5762, 0.0
      %v5766 = vrot.slane %v5765, 4
      %v5767 = vadd.f32 %v5765, %v5766
      %v5768 = vrot.slane %v5767, 2
      %v5769 = vadd.f32 %v5767, %v5768
      %v5770 = vrot.slane %v5769, 1
      %v5771 = vadd.f32 %v5769, %v5770
      %v5772 = vmul.f32 %v5771, %v5683
      %v5773 = vsub.f32 %v5762, %v5772
      %v5774 = vmul.f32 %v5773, %v5773
      %v5775 = vsel %vm5669, %v5774, 0.0
      %v5776 = vrot.slane %v5775, 4
      %v5777 = vadd.f32 %v5775, %v5776
      %v5778 = vrot.slane %v5777, 2
      %v5779 = vadd.f32 %v5777, %v5778
      %v5780 = vrot.slane %v5779, 1
      %v5781 = vadd.f32 %v5779, %v5780
      %v5782 = vmul.f32 %v5781, %v5683
      %v5783 = vadd.f32 %v5782, 1e-05
      %v5784 = vrsqrt.pop %v5783
      %v5785 = vmul.f32 %v5784, %v5783
      %v5786 = vmul.f32 %v5785, %v5784
      %v5787 = vmul.f32 0.5, %v5786
      %v5788 = vsub.f32 1.5, %v5787
      %v5789 = vmul.f32 %v5784, %v5788
      %vm5790 = vweird.f32 %v5783
      %vm5791 = vweird.f32 %v5784
      %vm5792 = vmor %vm5790, %vm5791
      %v5793 = vsel %vm5792, %v5784, %v5789
      %v5794 = vmul.f32 %v5773, %v5793
      %5795 = vst.msk [vmem:[%s472] sm:$0xff] %vm5669, %v5794
      %v5796 = vpack.c.bf16 %v5794, %v5794
      %v5797 = vld [vmem:[%s8] sm:$0xf]
      %v5798 = vld [vmem:[%s8 + $0x4] sm:$0xf]
      %v5799 = vld [vmem:[%s8 + $0x8] sm:$0xf]
      %v5800 = vld [vmem:[%s8 + $0xc] sm:$0xf]
      %v5801 = vld [vmem:[%s8 + $0x10] sm:$0xf]
      %v5802 = vld [vmem:[%s8 + $0x14] sm:$0xf]
      %v5803 = vld [vmem:[%s8 + $0x18] sm:$0xf]
      %v5804 = vld [vmem:[%s8 + $0x1c] sm:$0xf]
      %v5813 = vunpack.c.l.b16 %v5797
      %v5814 = vunpack.c.l.b16 %v5798
      %v5815 = vunpack.c.l.b16 %v5799
      %v5816 = vunpack.c.l.b16 %v5800
      %v5817 = vunpack.c.l.b16 %v5801
      %v5818 = vunpack.c.l.b16 %v5802
      %v5819 = vunpack.c.l.b16 %v5803
      %v5820 = vunpack.c.l.b16 %v5804
      %v5821 = vpack.c.b16 %v5814, %v5813
      %v5822 = vpack.c.b16 %v5816, %v5815
      %v5823 = vpack.c.b16 %v5818, %v5817
      %v5824 = vpack.c.b16 %v5820, %v5819
      %v5830 = vsel %vm5669, %v5796, 0
      %5832 = vmatpush.bf16.msra.mxu0 0
      %5833 = vmatpush.bf16.msra.mxu0 0
      %5834 = vmatpush.bf16.msra.mxu0 0
      %5835 = vmatpush.bf16.msra.mxu0 0
      %5836 = vmatpush.bf16.msra.mxu0 %v5824
      %5837 = vmatpush.bf16.msra.mxu0 %v5823
      %5838 = vmatpush.bf16.msra.mxu0 %v5822
      %5839 = vmatpush.bf16.msra.mxu0 %v5821
      %5840 = vmatmul.bf16.gmra.mxu0 %v5830
      %v5841 = vpop.f32.mrf.mxu0
      %v5842 = vadd.f32 0.0, %v5841
      %v5843 = vpop.f32.mrf.mxu0
      %5844 = vdwg.mxu0
      %v5845 = vld [vmem:[%s9] sm:$0x1]
      %v5846 = vld [vmem:[%s10] sm:$0x1]
      %v5847 = vsel %vm2432, %v5842, 0.0
      %v5848 = vrot.slane %v5847, 4
      %v5849 = vadd.f32 %v5847, %v5848
      %v5850 = vrot.slane %v5849, 2
      %v5851 = vadd.f32 %v5849, %v5850
      %v5852 = vrot.slane %v5851, 1
      %v5853 = vadd.f32 %v5851, %v5852
      %v5854 = vmul.f32 %v5853, %v5683
      %v5855 = vsub.f32 %v5842, %v5854
      %v5856 = vmul.f32 %v5855, %v5855
      %v5857 = vsel %vm2432, %v5856, 0.0
      %v5858 = vrot.slane %v5857, 4
      %v5859 = vadd.f32 %v5857, %v5858
      %v5860 = vrot.slane %v5859, 2
      %v5861 = vadd.f32 %v5859, %v5860
      %v5862 = vrot.slane %v5861, 1
      %v5863 = vadd.f32 %v5861, %v5862
      %v5864 = vmul.f32 %v5863, %v5683
      %v5865 = vadd.f32 %v5864, 1e-05
      %v5866 = vrsqrt.pop %v5865
      %v5867 = vmul.f32 %v5866, %v5865
      %v5868 = vmul.f32 %v5867, %v5866
      %v5869 = vmul.f32 0.5, %v5868
      %v5870 = vsub.f32 1.5, %v5869
      %v5871 = vmul.f32 %v5866, %v5870
      %vm5872 = vweird.f32 %v5865
      %vm5873 = vweird.f32 %v5866
      %vm5874 = vmor %vm5872, %vm5873
      %v5875 = vsel %vm5874, %v5866, %v5871
      %v5876 = vmul.f32 %v5855, %v5875
      %v5878 = vperm.slane %v5845, 0
      %v5880 = vmul.f32 %v5876, %v5878
      %v5882 = vperm.slane %v5846, 0
      %v5884 = vadd.f32 %v5880, %v5882
      %v5885 = vmax.f32 %v5884, 0.0
      %v5886 = vpack.c.bf16 %v5885, %v5885
      %v5887 = vld [vmem:[%s11] sm:$0xf]
      %v5888 = vld [vmem:[%s11 + $0x4] sm:$0xf]
      %v5889 = vld [vmem:[%s11 + $0x8] sm:$0xf]
      %v5890 = vld [vmem:[%s11 + $0xc] sm:$0xf]
      %v5891 = vld [vmem:[%s12] sm:$0x1]
      %v5893 = vperm.slane %v5891, 0
      %v5899 = vunpack.c.l.b16 %v5887
      %v5900 = vunpack.c.l.b16 %v5888
      %v5901 = vunpack.c.l.b16 %v5889
      %v5902 = vunpack.c.l.b16 %v5890
      %v5903 = vpack.c.b16 %v5900, %v5899
      %v5904 = vpack.c.b16 %v5902, %v5901
      %v5908 = vsel %vm2432, %v5886, 0
      %5910 = vmatpush.bf16.msra.mxu0 0
      %5911 = vmatpush.bf16.msra.mxu0 0
      %5912 = vmatpush.bf16.msra.mxu0 0
      %5913 = vmatpush.bf16.msra.mxu0 0
      %5914 = vmatpush.bf16.msra.mxu0 0
      %5915 = vmatpush.bf16.msra.mxu0 0
      %5916 = vmatpush.bf16.msra.mxu0 %v5904
      %5917 = vmatpush.bf16.msra.mxu0 %v5903
      %5918 = vmatmul.bf16.gmra.mxu0 %v5908
      %v5919 = vpop.f32.mrf.mxu0
      %v5920 = vadd.f32 %v5893, %v5919
      %v5921 = vpop.f32.mrf.mxu0
      %5922 = vdwg.mxu0
      %5923 = vst.msk [vmem:[%s476] sm:$0xff] %vm5669, %v5920
      %p5924 = scmp.lt.s32.totalorder %s26, 1
      %s5925 = scalar_select %p5924, %s26, 1
      %s5926 = smul.addr %s5925, 8
      %s5927 = scalar_lea.vmem %s13, %s5926
      %p5928 = scmp.lt.s32.totalorder %s26, 1
      %s5929 = scalar_select %p5928, %s26, 1
      %s5930 = smul.addr %s5929, 8
      %s5931 = scalar_lea.vmem %s14, %s5930
      // Predicated region
      $region73: #{simsiam_forward.1} parent=71 // pred_check
        %p5932 = pneg %p322
      $region74: #{simsiam_forward.1} parent=71 // pred_check_branch
        %5934 = sbr.rel (%p5932) target = $region76
      $region75: #{simsiam_forward.1} parent=71 // pred_region
        _
      $region76: #{simsiam_forward.1} parent=71 // pred_fallthru
        _
      // Predicated region
      $region77: #{simsiam_forward.1} parent=71 // pred_check
        %p5935 = pneg %p348
      $region78: #{simsiam_forward.1} parent=71 // pred_check_branch
        %5937 = sbr.rel (%p5935) target = $region80
      $region79: #{simsiam_forward.1} parent=71 // pred_region
        _
      $region80: #{simsiam_forward.1} parent=71 // pred_fallthru
        _
    $region72: #{simsiam_forward.1} parent=5 // pred_fallthru
      _
    %p5938 = scmp.le.s32.totalorder 2, %s21
    // Predicated region
    $region81: #{simsiam_forward.1} parent=5 // pred_check
      %p5939 = pneg %p5938
    $region82: #{simsiam_forward.1} parent=5 // pred_check_branch
      %5941 = sbr.rel (%p5939) target = $region84
    $region83: #{simsiam_forward.1} parent=5 // pred_region
      %s5942 = ssub.s32 %s21, 2
      // Predicated region
      $region85: #{simsiam_forward.1} parent=83 // pred_check
        %p5943 = pneg %p328
      $region86: #{simsiam_forward.1} parent=83 // pred_check_branch
        %5945 = sbr.rel (%p5943) target = $region88
      $region87: #{simsiam_forward.1} parent=83 // pred_region
        %p5946 = scmp.lt.s32.totalorder %s27, 1
        %s5947 = scalar_select %p5946, %s27, 1
        %s5948 = smul.addr %s5947, 8
        %s5949 = scalar_lea.vmem %s13, %s5948
      $region88: #{simsiam_forward.1} parent=83 // pred_fallthru
        _
      // Predicated region
      $region89: #{simsiam_forward.1} parent=83 // pred_check
        %p5950 = pneg %p354
      $region90: #{simsiam_forward.1} parent=83 // pred_check_branch
        %5952 = sbr.rel (%p5950) target = $region92
      $region91: #{simsiam_forward.1} parent=83 // pred_region
        %p5953 = scmp.lt.s32.totalorder %s27, 1
        %s5954 = scalar_select %p5953, %s27, 1
        %s5955 = smul.addr %s5954, 8
        %s5956 = scalar_lea.vmem %s14, %s5955
      $region92: #{simsiam_forward.1} parent=83 // pred_fallthru
        _
    $region84: #{simsiam_forward.1} parent=5 // pred_fallthru
      _
  $region6: #{simsiam_forward.1} parent=0 // loop_footer
    %s25 = sadd.s32 1, %s21
  $region7: #{simsiam_forward.1} parent=0 // loop_footer_branch
    %20 = sbr.rel target = $region3
  $region8: #{simsiam_forward.1} parent=0 // loop_exit
    _

</llo_original>
